<compile_context>
chip_gen: v7x
topology: tpu7x:2x2x1
jax: 0.10.0
libtpu: 0.0.40
codegen_flags: <defaults>
</compile_context>

<pallas_src>
import functools

import jax
import jax.numpy as jnp
from jax.experimental import pallas as pl
from jax.experimental.pallas import tpu as pltpu


# ----------------------------------------------------------------------------
# Kernel
# ----------------------------------------------------------------------------
def s2_model_kernel(
    # batch-tiled inputs
    x_ref, eps_ref,
    # encoder main (3 linear layers)
    ew1, eb1, ew2, eb2, ew3, eb3,
    # encoder fc, K-split: [x-part | h-part], fused N = 2*dim
    efw_x, efw_h, efb,
    # decoder main (3 linear layers)
    dw1, db1, dw2, db2, dw3, db3,
    # decoder fc, K-split: [z-part | h-part]
    dfw_z, dfw_h, dfb,
    # batch-tiled outputs
    mu_ref, logvar_ref, y_ref,
    *, dim,
):
    f32 = jnp.float32

    def linear(h, w_ref, b_ref):
        # bf16 MXU operands, f32 accumulation, f32 bias add on the VPU.
        return (
            jnp.dot(h.astype(w_ref.dtype), w_ref[...], preferred_element_type=f32)
            + b_ref[...]
        )

    def linear_relu(h, w_ref, b_ref):
        return jnp.maximum(linear(h, w_ref, b_ref), 0.0)

    x = x_ref[...]

    # ---- encoder.main : 3x (Linear + ReLU) ----
    h = linear_relu(x, ew1, eb1)
    h = linear_relu(h, ew2, eb2)
    h = linear_relu(h, ew3, eb3)

    # ---- encoder.fc on concat([x, h]) -> enc (N = 2*dim), then lane-slice ----
    enc = (
        jnp.dot(x.astype(efw_x.dtype), efw_x[...], preferred_element_type=f32)
        + jnp.dot(h.astype(efw_h.dtype), efw_h[...], preferred_element_type=f32)
        + efb[...]
    )
    mu = enc[:, :dim]
    logvar = enc[:, dim:]

    # ---- reparameterize: z = mu + eps * exp(0.5 * logvar) (all f32, EUP exp) ----
    z = mu + eps_ref[...] * jnp.exp(0.5 * logvar)

    # ---- decoder.main : 3x (Linear + ReLU) ----
    h2 = linear_relu(z, dw1, db1)
    h2 = linear_relu(h2, dw2, db2)
    h2 = linear_relu(h2, dw3, db3)

    # ---- decoder.fc on concat([z, h2]) -> y ----
    y = (
        jnp.dot(z.astype(dfw_z.dtype), dfw_z[...], preferred_element_type=f32)
        + jnp.dot(h2.astype(dfw_h.dtype), dfw_h[...], preferred_element_type=f32)
        + dfb[...]
    )

    mu_ref[...] = mu
    logvar_ref[...] = logvar
    y_ref[...] = y


# ----------------------------------------------------------------------------
# Parameters
# ----------------------------------------------------------------------------
def make_params(dim, second_dim, dtype=jnp.float32):
    """Deterministic synthetic parameters (PyTorch Linear: y = x @ W + b,
    stored directly in (in, out) layout)."""
    key = jax.random.PRNGKey(42)
    ks = jax.random.split(key, 16)

    def w(k, i, o, scale):
        return (jax.random.normal(k, (i, o), dtype) * scale).astype(dtype)

    def b(k, o, scale):
        # (1, o) so it broadcasts cleanly inside the kernel
        return (jax.random.normal(k, (1, o), dtype) * scale).astype(dtype)

    s_in = 1.0 / jnp.sqrt(dim)
    s_hid = 1.0 / jnp.sqrt(second_dim)
    s_cat = 1.0 / jnp.sqrt(dim + second_dim)

    return dict(
        # encoder main
        ew1=w(ks[0], dim, second_dim, s_in), eb1=b(ks[1], second_dim, s_in),
        ew2=w(ks[2], second_dim, second_dim, s_hid), eb2=b(ks[3], second_dim, s_hid),
        ew3=w(ks[4], second_dim, second_dim, s_hid), eb3=b(ks[5], second_dim, s_hid),
        # encoder fc: (dim + second_dim) -> 2*dim
        e_fc_w=w(ks[6], dim + second_dim, 2 * dim, s_cat),
        e_fc_b=b(ks[7], 2 * dim, s_cat),
        # decoder main
        dw1=w(ks[8], dim, second_dim, s_in), db1=b(ks[9], second_dim, s_in),
        dw2=w(ks[10], second_dim, second_dim, s_hid), db2=b(ks[11], second_dim, s_hid),
        dw3=w(ks[12], second_dim, second_dim, s_hid), db3=b(ks[13], second_dim, s_hid),
        # decoder fc: (dim + second_dim) -> dim
        d_fc_w=w(ks[14], dim + second_dim, dim, s_cat),
        d_fc_b=b(ks[15], dim, s_cat),
        # loggamma2 = ones(1), as in the PyTorch module __init__
        loggamma2=jnp.ones((1,), dtype),
    )


PARAM_ORDER = (
    "ew1", "eb1", "ew2", "eb2", "ew3", "eb3",
    "efw_x", "efw_h", "efb",
    "dw1", "db1", "dw2", "db2", "dw3", "db3",
    "dfw_z", "dfw_h", "dfb",
)


def prepare_params(params, dim, weight_dtype=jnp.bfloat16):
    """One-time parameter preparation: split the concat-fc weights into their
    x/z-part and h-part (K-split, mathematically identical to concat) and cast
    matmul weights to the MXU dtype. Biases stay f32."""
    wd = weight_dtype
    e_fc_w = params["e_fc_w"]
    d_fc_w = params["d_fc_w"]
    return dict(
        ew1=params["ew1"].astype(wd), eb1=params["eb1"],
        ew2=params["ew2"].astype(wd), eb2=params["eb2"],
        ew3=params["ew3"].astype(wd), eb3=params["eb3"],
        efw_x=e_fc_w[:dim, :].astype(wd),
        efw_h=e_fc_w[dim:, :].astype(wd),
        efb=params["e_fc_b"],
        dw1=params["dw1"].astype(wd), db1=params["db1"],
        dw2=params["dw2"].astype(wd), db2=params["db2"],
        dw3=params["dw3"].astype(wd), db3=params["db3"],
        dfw_z=d_fc_w[:dim, :].astype(wd),
        dfw_h=d_fc_w[dim:, :].astype(wd),
        dfb=params["d_fc_b"],
        loggamma2=params["loggamma2"],
    )


def _round_up(n, m):
    return ((n + m - 1) // m) * m


# ----------------------------------------------------------------------------
# Forward
# ----------------------------------------------------------------------------
def s2_model_forward(x, eps, prepared, dim, second_dim, *, block_b=None):
    """Full S2Model.forward. Returns (mu, logvar, y, exp(loggamma2))."""
    f32 = jnp.float32
    B = x.shape[0]

    # Batch tile: sublane-aligned; MXU-shaped (256 rows) when the batch is big.
    if block_b is None:
        block_b = 256 if B >= 256 else _round_up(B, 8)
    TB = block_b

    B_pad = _round_up(B, TB)
    if B_pad != B:
        pad = B_pad - B
        x = jnp.pad(x, ((0, pad), (0, 0)))
        eps = jnp.pad(eps, ((0, pad), (0, 0)))

    grid = (pl.cdiv(B_pad, TB),)

    batch_spec = pl.BlockSpec((TB, dim), lambda i: (i, 0))
    weight_inputs = tuple(prepared[k] for k in PARAM_ORDER)
    # Full-shape blocks + constant index_map => weights stay resident in VMEM
    # across grid steps (DMA'd once, amortized over the whole batch).
    weight_specs = [pl.BlockSpec(w.shape, lambda i: (0, 0)) for w in weight_inputs]

    # Explicit VMEM budget: resident weights (+double-buffer slack) plus the
    # f32 activation / batch tiles, clamped to stay inside v7x's 64 MiB.
    weight_bytes = sum(int(w.size) * w.dtype.itemsize for w in weight_inputs)
    act_bytes = 4 * TB * (7 * dim + 4 * second_dim) * 2
    vmem_limit = int(min(max(2 * weight_bytes + act_bytes + (8 << 20), 32 << 20),
                         60 << 20))

    mu, logvar, y = pl.pallas_call(
        functools.partial(s2_model_kernel, dim=dim),
        out_shape=(
            jax.ShapeDtypeStruct((B_pad, dim), f32),  # mu
            jax.ShapeDtypeStruct((B_pad, dim), f32),  # logvar
            jax.ShapeDtypeStruct((B_pad, dim), f32),  # y
        ),
        grid=grid,
        in_specs=[batch_spec, batch_spec] + weight_specs,
        out_specs=(batch_spec, batch_spec, batch_spec),
        compiler_params=pltpu.CompilerParams(
            dimension_semantics=("parallel",),   # shards batch across TCs on v7x
            vmem_limit_bytes=vmem_limit,
        ),
    )(x, eps, *weight_inputs)

    if B_pad != B:
        mu, logvar, y = mu[:B], logvar[:B], y[:B]

    gamma2 = jnp.exp(prepared["loggamma2"])  # scalar glue, outside the kernel
    return mu, logvar, y, gamma2


# ----------------------------------------------------------------------------
# Plain-JAX reference (mirrors the PyTorch graph: concat + single fc),
# using the same bf16 MXU operands / f32 accumulation as the kernel.
# ----------------------------------------------------------------------------
def reference_forward(x, eps, params, dim, second_dim, weight_dtype=jnp.bfloat16):
    f32 = jnp.float32
    wd = weight_dtype

    def lin(h, w, b):
        return jnp.dot(h.astype(wd), w.astype(wd), preferred_element_type=f32) + b

    def main3(h, w1, b1, w2, b2, w3, b3):
        h = jnp.maximum(lin(h, w1, b1), 0.0)
        h = jnp.maximum(lin(h, w2, b2), 0.0)
        h = jnp.maximum(lin(h, w3, b3), 0.0)
        return h

    h = main3(x, params["ew1"], params["eb1"], params["ew2"], params["eb2"],
              params["ew3"], params["eb3"])
    cat = jnp.concatenate([x, h], axis=-1)
    enc = lin(cat, params["e_fc_w"], params["e_fc_b"])
    mu, logvar = enc[:, :dim], enc[:, dim:]
    z = mu + eps * jnp.exp(0.5 * logvar)
    h2 = main3(z, params["dw1"], params["db1"], params["dw2"], params["db2"],
               params["dw3"], params["db3"])
    cat2 = jnp.concatenate([z, h2], axis=-1)
    y = lin(cat2, params["d_fc_w"], params["d_fc_b"])
    return mu, logvar, y, jnp.exp(params["loggamma2"])


if __name__ == "__main__":
    # Small shapes consistent with the module (original dim=256, second_dim=1024),
    # kept lane-aligned (multiples of 128) and with a 2-step batch grid.
    B, DIM, SECOND_DIM, TB = 16, 128, 256, 8

    key = jax.random.PRNGKey(0)
    kx, keps = jax.random.split(key)
    x = jax.random.normal(kx, (B, DIM), jnp.float32)
    # eps ~ N(0, I): PyTorch's randn_like, sampled outside the kernel.
    eps = jax.random.normal(keps, (B, DIM), jnp.float32)

    params = make_params(DIM, SECOND_DIM)
    prepared = prepare_params(params, DIM, weight_dtype=jnp.bfloat16)

    mu, logvar, y, gamma2 = s2_model_forward(
        x, eps, prepared, DIM, SECOND_DIM, block_b=TB)
    jax.block_until_ready((mu, logvar, y, gamma2))

    # Verify against a plain-JAX reference of the same graph (bf16 MXU operands).
    mu_r, logvar_r, y_r, gamma2_r = reference_forward(x, eps, params, DIM, SECOND_DIM)
    assert jnp.allclose(mu, mu_r, atol=2e-2, rtol=2e-2)
    assert jnp.allclose(logvar, logvar_r, atol=2e-2, rtol=2e-2)
    assert jnp.allclose(y, y_r, atol=2e-2, rtol=2e-2)
    assert jnp.allclose(gamma2, gamma2_r)

    assert mu.shape == (B, DIM) and logvar.shape == (B, DIM) and y.shape == (B, DIM)
    print("KERNEL_OK")
</pallas_src>

<mosaic_0001>
module attributes {stable_mosaic.version = 11 : i64} {
  func.func @s2_model_kernel(%arg0: i32, %arg1: memref<8x128xf32, #tpu.memory_space<vmem>>, %arg2: memref<8x128xf32, #tpu.memory_space<vmem>>, %arg3: memref<128x256xbf16, #tpu.memory_space<vmem>>, %arg4: memref<1x256xf32, #tpu.memory_space<vmem>>, %arg5: memref<256x256xbf16, #tpu.memory_space<vmem>>, %arg6: memref<1x256xf32, #tpu.memory_space<vmem>>, %arg7: memref<256x256xbf16, #tpu.memory_space<vmem>>, %arg8: memref<1x256xf32, #tpu.memory_space<vmem>>, %arg9: memref<128x256xbf16, #tpu.memory_space<vmem>>, %arg10: memref<256x256xbf16, #tpu.memory_space<vmem>>, %arg11: memref<1x256xf32, #tpu.memory_space<vmem>>, %arg12: memref<128x256xbf16, #tpu.memory_space<vmem>>, %arg13: memref<1x256xf32, #tpu.memory_space<vmem>>, %arg14: memref<256x256xbf16, #tpu.memory_space<vmem>>, %arg15: memref<1x256xf32, #tpu.memory_space<vmem>>, %arg16: memref<256x256xbf16, #tpu.memory_space<vmem>>, %arg17: memref<1x256xf32, #tpu.memory_space<vmem>>, %arg18: memref<128x128xbf16, #tpu.memory_space<vmem>>, %arg19: memref<256x128xbf16, #tpu.memory_space<vmem>>, %arg20: memref<1x128xf32, #tpu.memory_space<vmem>>, %arg21: memref<8x128xf32, #tpu.memory_space<vmem>>, %arg22: memref<8x128xf32, #tpu.memory_space<vmem>>, %arg23: memref<8x128xf32, #tpu.memory_space<vmem>>) attributes {dimension_semantics = [#tpu.dimension_semantics<parallel>], iteration_bounds = array<i64: 2>, scalar_prefetch = 0 : i64, scratch_operands = 0 : i64, tpu.core_type = #tpu.core_type<tc>, window_params = [{transform_indices = @transform_0, window_bounds = array<i64: 8, 128>}, {transform_indices = @transform_1, window_bounds = array<i64: 8, 128>}, {pipeline_mode = #tpu.pipeline_mode<synchronous>, transform_indices = @transform_2, window_bounds = array<i64: 128, 256>}, {pipeline_mode = #tpu.pipeline_mode<synchronous>, transform_indices = @transform_3, window_bounds = array<i64: 1, 256>}, {pipeline_mode = #tpu.pipeline_mode<synchronous>, transform_indices = @transform_4, window_bounds = array<i64: 256, 256>}, {pipeline_mode = #tpu.pipeline_mode<synchronous>, transform_indices = @transform_5, window_bounds = array<i64: 1, 256>}, {pipeline_mode = #tpu.pipeline_mode<synchronous>, transform_indices = @transform_6, window_bounds = array<i64: 256, 256>}, {pipeline_mode = #tpu.pipeline_mode<synchronous>, transform_indices = @transform_7, window_bounds = array<i64: 1, 256>}, {pipeline_mode = #tpu.pipeline_mode<synchronous>, transform_indices = @transform_8, window_bounds = array<i64: 128, 256>}, {pipeline_mode = #tpu.pipeline_mode<synchronous>, transform_indices = @transform_9, window_bounds = array<i64: 256, 256>}, {pipeline_mode = #tpu.pipeline_mode<synchronous>, transform_indices = @transform_10, window_bounds = array<i64: 1, 256>}, {pipeline_mode = #tpu.pipeline_mode<synchronous>, transform_indices = @transform_11, window_bounds = array<i64: 128, 256>}, {pipeline_mode = #tpu.pipeline_mode<synchronous>, transform_indices = @transform_12, window_bounds = array<i64: 1, 256>}, {pipeline_mode = #tpu.pipeline_mode<synchronous>, transform_indices = @transform_13, window_bounds = array<i64: 256, 256>}, {pipeline_mode = #tpu.pipeline_mode<synchronous>, transform_indices = @transform_14, window_bounds = array<i64: 1, 256>}, {pipeline_mode = #tpu.pipeline_mode<synchronous>, transform_indices = @transform_15, window_bounds = array<i64: 256, 256>}, {pipeline_mode = #tpu.pipeline_mode<synchronous>, transform_indices = @transform_16, window_bounds = array<i64: 1, 256>}, {pipeline_mode = #tpu.pipeline_mode<synchronous>, transform_indices = @transform_17, window_bounds = array<i64: 128, 128>}, {pipeline_mode = #tpu.pipeline_mode<synchronous>, transform_indices = @transform_18, window_bounds = array<i64: 256, 128>}, {pipeline_mode = #tpu.pipeline_mode<synchronous>, transform_indices = @transform_19, window_bounds = array<i64: 1, 128>}, {transform_indices = @transform_20, window_bounds = array<i64: 8, 128>}, {transform_indices = @transform_21, window_bounds = array<i64: 8, 128>}, {transform_indices = @transform_22, window_bounds = array<i64: 8, 128>}]} {
    %c0 = arith.constant 0 : index
    %c0_0 = arith.constant 0 : index
    %0 = vector.load %arg1[%c0, %c0_0] : memref<8x128xf32, #tpu.memory_space<vmem>>, vector<8x128xf32>
    %1 = arith.truncf %0 : vector<8x128xf32> to vector<8x128xbf16>
    %c0_1 = arith.constant 0 : index
    %c0_2 = arith.constant 0 : index
    %2 = vector.load %arg3[%c0_1, %c0_2] : memref<128x256xbf16, #tpu.memory_space<vmem>>, vector<128x256xbf16>
    %cst = arith.constant dense<0.000000e+00> : vector<8x256xf32>
    %3 = tpu.matmul %1, %2, %cst {dimension_numbers = #tpu.dot_dimension_numbers<[1], [0], [0], [1], [0, 0, 1, 1], [], []>} : vector<8x128xbf16>, vector<128x256xbf16>, vector<8x256xf32> -> vector<8x256xf32>
    %c0_3 = arith.constant 0 : index
    %c0_4 = arith.constant 0 : index
    %4 = vector.load %arg4[%c0_3, %c0_4] : memref<1x256xf32, #tpu.memory_space<vmem>>, vector<1x256xf32>
    %5 = vector.broadcast %4 : vector<1x256xf32> to vector<8x256xf32>
    %6 = arith.addf %3, %5 : vector<8x256xf32>
    %cst_5 = arith.constant 0.000000e+00 : f32
    %7 = vector.broadcast %cst_5 : f32 to vector<8x256xf32>
    %8 = arith.maximumf %6, %7 : vector<8x256xf32>
    %9 = arith.truncf %8 : vector<8x256xf32> to vector<8x256xbf16>
    %c0_6 = arith.constant 0 : index
    %c0_7 = arith.constant 0 : index
    %10 = vector.load %arg5[%c0_6, %c0_7] : memref<256x256xbf16, #tpu.memory_space<vmem>>, vector<256x256xbf16>
    %cst_8 = arith.constant dense<0.000000e+00> : vector<8x256xf32>
    %11 = tpu.matmul %9, %10, %cst_8 {dimension_numbers = #tpu.dot_dimension_numbers<[1], [0], [0], [1], [0, 0, 1, 1], [], []>} : vector<8x256xbf16>, vector<256x256xbf16>, vector<8x256xf32> -> vector<8x256xf32>
    %c0_9 = arith.constant 0 : index
    %c0_10 = arith.constant 0 : index
    %12 = vector.load %arg6[%c0_9, %c0_10] : memref<1x256xf32, #tpu.memory_space<vmem>>, vector<1x256xf32>
    %13 = vector.broadcast %12 : vector<1x256xf32> to vector<8x256xf32>
    %14 = arith.addf %11, %13 : vector<8x256xf32>
    %cst_11 = arith.constant 0.000000e+00 : f32
    %15 = vector.broadcast %cst_11 : f32 to vector<8x256xf32>
    %16 = arith.maximumf %14, %15 : vector<8x256xf32>
    %17 = arith.truncf %16 : vector<8x256xf32> to vector<8x256xbf16>
    %c0_12 = arith.constant 0 : index
    %c0_13 = arith.constant 0 : index
    %18 = vector.load %arg7[%c0_12, %c0_13] : memref<256x256xbf16, #tpu.memory_space<vmem>>, vector<256x256xbf16>
    %cst_14 = arith.constant dense<0.000000e+00> : vector<8x256xf32>
    %19 = tpu.matmul %17, %18, %cst_14 {dimension_numbers = #tpu.dot_dimension_numbers<[1], [0], [0], [1], [0, 0, 1, 1], [], []>} : vector<8x256xbf16>, vector<256x256xbf16>, vector<8x256xf32> -> vector<8x256xf32>
    %c0_15 = arith.constant 0 : index
    %c0_16 = arith.constant 0 : index
    %20 = vector.load %arg8[%c0_15, %c0_16] : memref<1x256xf32, #tpu.memory_space<vmem>>, vector<1x256xf32>
    %21 = vector.broadcast %20 : vector<1x256xf32> to vector<8x256xf32>
    %22 = arith.addf %19, %21 : vector<8x256xf32>
    %cst_17 = arith.constant 0.000000e+00 : f32
    %23 = vector.broadcast %cst_17 : f32 to vector<8x256xf32>
    %24 = arith.maximumf %22, %23 : vector<8x256xf32>
    %25 = arith.truncf %0 : vector<8x128xf32> to vector<8x128xbf16>
    %c0_18 = arith.constant 0 : index
    %c0_19 = arith.constant 0 : index
    %26 = vector.load %arg9[%c0_18, %c0_19] : memref<128x256xbf16, #tpu.memory_space<vmem>>, vector<128x256xbf16>
    %cst_20 = arith.constant dense<0.000000e+00> : vector<8x256xf32>
    %27 = tpu.matmul %25, %26, %cst_20 {dimension_numbers = #tpu.dot_dimension_numbers<[1], [0], [0], [1], [0, 0, 1, 1], [], []>} : vector<8x128xbf16>, vector<128x256xbf16>, vector<8x256xf32> -> vector<8x256xf32>
    %28 = arith.truncf %24 : vector<8x256xf32> to vector<8x256xbf16>
    %c0_21 = arith.constant 0 : index
    %c0_22 = arith.constant 0 : index
    %29 = vector.load %arg10[%c0_21, %c0_22] : memref<256x256xbf16, #tpu.memory_space<vmem>>, vector<256x256xbf16>
    %cst_23 = arith.constant dense<0.000000e+00> : vector<8x256xf32>
    %30 = tpu.matmul %28, %29, %cst_23 {dimension_numbers = #tpu.dot_dimension_numbers<[1], [0], [0], [1], [0, 0, 1, 1], [], []>} : vector<8x256xbf16>, vector<256x256xbf16>, vector<8x256xf32> -> vector<8x256xf32>
    %31 = arith.addf %27, %30 : vector<8x256xf32>
    %c0_24 = arith.constant 0 : index
    %c0_25 = arith.constant 0 : index
    %32 = vector.load %arg11[%c0_24, %c0_25] : memref<1x256xf32, #tpu.memory_space<vmem>>, vector<1x256xf32>
    %33 = vector.broadcast %32 : vector<1x256xf32> to vector<8x256xf32>
    %34 = arith.addf %31, %33 : vector<8x256xf32>
    %35 = vector.extract_strided_slice %34 {offsets = [0, 0], sizes = [8, 128], strides = [1, 1]} : vector<8x256xf32> to vector<8x128xf32>
    %36 = vector.extract_strided_slice %34 {offsets = [0, 128], sizes = [8, 128], strides = [1, 1]} : vector<8x256xf32> to vector<8x128xf32>
    %c0_26 = arith.constant 0 : index
    %c0_27 = arith.constant 0 : index
    %37 = vector.load %arg2[%c0_26, %c0_27] : memref<8x128xf32, #tpu.memory_space<vmem>>, vector<8x128xf32>
    %cst_28 = arith.constant 5.000000e-01 : f32
    %38 = vector.broadcast %cst_28 : f32 to vector<8x128xf32>
    %39 = arith.mulf %38, %36 : vector<8x128xf32>
    %40 = math.exp %39 : vector<8x128xf32>
    %41 = arith.mulf %37, %40 : vector<8x128xf32>
    %42 = arith.addf %35, %41 : vector<8x128xf32>
    %43 = arith.truncf %42 : vector<8x128xf32> to vector<8x128xbf16>
    %c0_29 = arith.constant 0 : index
    %c0_30 = arith.constant 0 : index
    %44 = vector.load %arg12[%c0_29, %c0_30] : memref<128x256xbf16, #tpu.memory_space<vmem>>, vector<128x256xbf16>
    %cst_31 = arith.constant dense<0.000000e+00> : vector<8x256xf32>
    %45 = tpu.matmul %43, %44, %cst_31 {dimension_numbers = #tpu.dot_dimension_numbers<[1], [0], [0], [1], [0, 0, 1, 1], [], []>} : vector<8x128xbf16>, vector<128x256xbf16>, vector<8x256xf32> -> vector<8x256xf32>
    %c0_32 = arith.constant 0 : index
    %c0_33 = arith.constant 0 : index
    %46 = vector.load %arg13[%c0_32, %c0_33] : memref<1x256xf32, #tpu.memory_space<vmem>>, vector<1x256xf32>
    %47 = vector.broadcast %46 : vector<1x256xf32> to vector<8x256xf32>
    %48 = arith.addf %45, %47 : vector<8x256xf32>
    %cst_34 = arith.constant 0.000000e+00 : f32
    %49 = vector.broadcast %cst_34 : f32 to vector<8x256xf32>
    %50 = arith.maximumf %48, %49 : vector<8x256xf32>
    %51 = arith.truncf %50 : vector<8x256xf32> to vector<8x256xbf16>
    %c0_35 = arith.constant 0 : index
    %c0_36 = arith.constant 0 : index
    %52 = vector.load %arg14[%c0_35, %c0_36] : memref<256x256xbf16, #tpu.memory_space<vmem>>, vector<256x256xbf16>
    %cst_37 = arith.constant dense<0.000000e+00> : vector<8x256xf32>
    %53 = tpu.matmul %51, %52, %cst_37 {dimension_numbers = #tpu.dot_dimension_numbers<[1], [0], [0], [1], [0, 0, 1, 1], [], []>} : vector<8x256xbf16>, vector<256x256xbf16>, vector<8x256xf32> -> vector<8x256xf32>
    %c0_38 = arith.constant 0 : index
    %c0_39 = arith.constant 0 : index
    %54 = vector.load %arg15[%c0_38, %c0_39] : memref<1x256xf32, #tpu.memory_space<vmem>>, vector<1x256xf32>
    %55 = vector.broadcast %54 : vector<1x256xf32> to vector<8x256xf32>
    %56 = arith.addf %53, %55 : vector<8x256xf32>
    %cst_40 = arith.constant 0.000000e+00 : f32
    %57 = vector.broadcast %cst_40 : f32 to vector<8x256xf32>
    %58 = arith.maximumf %56, %57 : vector<8x256xf32>
    %59 = arith.truncf %58 : vector<8x256xf32> to vector<8x256xbf16>
    %c0_41 = arith.constant 0 : index
    %c0_42 = arith.constant 0 : index
    %60 = vector.load %arg16[%c0_41, %c0_42] : memref<256x256xbf16, #tpu.memory_space<vmem>>, vector<256x256xbf16>
    %cst_43 = arith.constant dense<0.000000e+00> : vector<8x256xf32>
    %61 = tpu.matmul %59, %60, %cst_43 {dimension_numbers = #tpu.dot_dimension_numbers<[1], [0], [0], [1], [0, 0, 1, 1], [], []>} : vector<8x256xbf16>, vector<256x256xbf16>, vector<8x256xf32> -> vector<8x256xf32>
    %c0_44 = arith.constant 0 : index
    %c0_45 = arith.constant 0 : index
    %62 = vector.load %arg17[%c0_44, %c0_45] : memref<1x256xf32, #tpu.memory_space<vmem>>, vector<1x256xf32>
    %63 = vector.broadcast %62 : vector<1x256xf32> to vector<8x256xf32>
    %64 = arith.addf %61, %63 : vector<8x256xf32>
    %cst_46 = arith.constant 0.000000e+00 : f32
    %65 = vector.broadcast %cst_46 : f32 to vector<8x256xf32>
    %66 = arith.maximumf %64, %65 : vector<8x256xf32>
    %67 = arith.truncf %42 : vector<8x128xf32> to vector<8x128xbf16>
    %c0_47 = arith.constant 0 : index
    %c0_48 = arith.constant 0 : index
    %68 = vector.load %arg18[%c0_47, %c0_48] : memref<128x128xbf16, #tpu.memory_space<vmem>>, vector<128x128xbf16>
    %cst_49 = arith.constant dense<0.000000e+00> : vector<8x128xf32>
    %69 = tpu.matmul %67, %68, %cst_49 {dimension_numbers = #tpu.dot_dimension_numbers<[1], [0], [0], [1], [0, 0, 1, 1], [], []>} : vector<8x128xbf16>, vector<128x128xbf16>, vector<8x128xf32> -> vector<8x128xf32>
    %70 = arith.truncf %66 : vector<8x256xf32> to vector<8x256xbf16>
    %c0_50 = arith.constant 0 : index
    %c0_51 = arith.constant 0 : index
    %71 = vector.load %arg19[%c0_50, %c0_51] : memref<256x128xbf16, #tpu.memory_space<vmem>>, vector<256x128xbf16>
    %cst_52 = arith.constant dense<0.000000e+00> : vector<8x128xf32>
    %72 = tpu.matmul %70, %71, %cst_52 {dimension_numbers = #tpu.dot_dimension_numbers<[1], [0], [0], [1], [0, 0, 1, 1], [], []>} : vector<8x256xbf16>, vector<256x128xbf16>, vector<8x128xf32> -> vector<8x128xf32>
    %73 = arith.addf %69, %72 : vector<8x128xf32>
    %c0_53 = arith.constant 0 : index
    %c0_54 = arith.constant 0 : index
    %74 = vector.load %arg20[%c0_53, %c0_54] : memref<1x128xf32, #tpu.memory_space<vmem>>, vector<1x128xf32>
    %75 = vector.broadcast %74 : vector<1x128xf32> to vector<8x128xf32>
    %76 = arith.addf %73, %75 : vector<8x128xf32>
    %c0_55 = arith.constant 0 : index
    %c0_56 = arith.constant 0 : index
    %77 = vector.load %arg21[%c0_55, %c0_56] : memref<8x128xf32, #tpu.memory_space<vmem>>, vector<8x128xf32>
    tpu.vector_store %arg21[%c0_55, %c0_56], %35 {strides = array<i32>} : memref<8x128xf32, #tpu.memory_space<vmem>>, vector<8x128xf32>,
    %c0_57 = arith.constant 0 : index
    %c0_58 = arith.constant 0 : index
    %78 = vector.load %arg22[%c0_57, %c0_58] : memref<8x128xf32, #tpu.memory_space<vmem>>, vector<8x128xf32>
    tpu.vector_store %arg22[%c0_57, %c0_58], %36 {strides = array<i32>} : memref<8x128xf32, #tpu.memory_space<vmem>>, vector<8x128xf32>,
    %c0_59 = arith.constant 0 : index
    %c0_60 = arith.constant 0 : index
    %79 = vector.load %arg23[%c0_59, %c0_60] : memref<8x128xf32, #tpu.memory_space<vmem>>, vector<8x128xf32>
    tpu.vector_store %arg23[%c0_59, %c0_60], %76 {strides = array<i32>} : memref<8x128xf32, #tpu.memory_space<vmem>>, vector<8x128xf32>,
    return
  }
  func.func @transform_0(%arg0: i32) -> (i32, i32) {
    %c0_i32 = arith.constant 0 : i32
    %c0_i32_0 = arith.constant 0 : i32
    return %arg0, %c0_i32 : i32, i32
  }
  func.func @transform_1(%arg0: i32) -> (i32, i32) {
    %c0_i32 = arith.constant 0 : i32
    %c0_i32_0 = arith.constant 0 : i32
    return %arg0, %c0_i32 : i32, i32
  }
  func.func @transform_2(%arg0: i32) -> (i32, i32) {
    %c0_i32 = arith.constant 0 : i32
    %c0_i32_0 = arith.constant 0 : i32
    %c0_i32_1 = arith.constant 0 : i32
    return %c0_i32, %c0_i32_0 : i32, i32
  }
  func.func @transform_3(%arg0: i32) -> (i32, i32) {
    %c0_i32 = arith.constant 0 : i32
    %c0_i32_0 = arith.constant 0 : i32
    %c0_i32_1 = arith.constant 0 : i32
    return %c0_i32, %c0_i32_0 : i32, i32
  }
  func.func @transform_4(%arg0: i32) -> (i32, i32) {
    %c0_i32 = arith.constant 0 : i32
    %c0_i32_0 = arith.constant 0 : i32
    %c0_i32_1 = arith.constant 0 : i32
    return %c0_i32, %c0_i32_0 : i32, i32
  }
  func.func @transform_5(%arg0: i32) -> (i32, i32) {
    %c0_i32 = arith.constant 0 : i32
    %c0_i32_0 = arith.constant 0 : i32
    %c0_i32_1 = arith.constant 0 : i32
    return %c0_i32, %c0_i32_0 : i32, i32
  }
  func.func @transform_6(%arg0: i32) -> (i32, i32) {
    %c0_i32 = arith.constant 0 : i32
    %c0_i32_0 = arith.constant 0 : i32
    %c0_i32_1 = arith.constant 0 : i32
    return %c0_i32, %c0_i32_0 : i32, i32
  }
  func.func @transform_7(%arg0: i32) -> (i32, i32) {
    %c0_i32 = arith.constant 0 : i32
    %c0_i32_0 = arith.constant 0 : i32
    %c0_i32_1 = arith.constant 0 : i32
    return %c0_i32, %c0_i32_0 : i32, i32
  }
  func.func @transform_8(%arg0: i32) -> (i32, i32) {
    %c0_i32 = arith.constant 0 : i32
    %c0_i32_0 = arith.constant 0 : i32
    %c0_i32_1 = arith.constant 0 : i32
    return %c0_i32, %c0_i32_0 : i32, i32
  }
  func.func @transform_9(%arg0: i32) -> (i32, i32) {
    %c0_i32 = arith.constant 0 : i32
    %c0_i32_0 = arith.constant 0 : i32
    %c0_i32_1 = arith.constant 0 : i32
    return %c0_i32, %c0_i32_0 : i32, i32
  }
  func.func @transform_10(%arg0: i32) -> (i32, i32) {
    %c0_i32 = arith.constant 0 : i32
    %c0_i32_0 = arith.constant 0 : i32
    %c0_i32_1 = arith.constant 0 : i32
    return %c0_i32, %c0_i32_0 : i32, i32
  }
  func.func @transform_11(%arg0: i32) -> (i32, i32) {
    %c0_i32 = arith.constant 0 : i32
    %c0_i32_0 = arith.constant 0 : i32
    %c0_i32_1 = arith.constant 0 : i32
    return %c0_i32, %c0_i32_0 : i32, i32
  }
  func.func @transform_12(%arg0: i32) -> (i32, i32) {
    %c0_i32 = arith.constant 0 : i32
    %c0_i32_0 = arith.constant 0 : i32
    %c0_i32_1 = arith.constant 0 : i32
    return %c0_i32, %c0_i32_0 : i32, i32
  }
  func.func @transform_13(%arg0: i32) -> (i32, i32) {
    %c0_i32 = arith.constant 0 : i32
    %c0_i32_0 = arith.constant 0 : i32
    %c0_i32_1 = arith.constant 0 : i32
    return %c0_i32, %c0_i32_0 : i32, i32
  }
  func.func @transform_14(%arg0: i32) -> (i32, i32) {
    %c0_i32 = arith.constant 0 : i32
    %c0_i32_0 = arith.constant 0 : i32
    %c0_i32_1 = arith.constant 0 : i32
    return %c0_i32, %c0_i32_0 : i32, i32
  }
  func.func @transform_15(%arg0: i32) -> (i32, i32) {
    %c0_i32 = arith.constant 0 : i32
    %c0_i32_0 = arith.constant 0 : i32
    %c0_i32_1 = arith.constant 0 : i32
    return %c0_i32, %c0_i32_0 : i32, i32
  }
  func.func @transform_16(%arg0: i32) -> (i32, i32) {
    %c0_i32 = arith.constant 0 : i32
    %c0_i32_0 = arith.constant 0 : i32
    %c0_i32_1 = arith.constant 0 : i32
    return %c0_i32, %c0_i32_0 : i32, i32
  }
  func.func @transform_17(%arg0: i32) -> (i32, i32) {
    %c0_i32 = arith.constant 0 : i32
    %c0_i32_0 = arith.constant 0 : i32
    %c0_i32_1 = arith.constant 0 : i32
    return %c0_i32, %c0_i32_0 : i32, i32
  }
  func.func @transform_18(%arg0: i32) -> (i32, i32) {
    %c0_i32 = arith.constant 0 : i32
    %c0_i32_0 = arith.constant 0 : i32
    %c0_i32_1 = arith.constant 0 : i32
    return %c0_i32, %c0_i32_0 : i32, i32
  }
  func.func @transform_19(%arg0: i32) -> (i32, i32) {
    %c0_i32 = arith.constant 0 : i32
    %c0_i32_0 = arith.constant 0 : i32
    %c0_i32_1 = arith.constant 0 : i32
    return %c0_i32, %c0_i32_0 : i32, i32
  }
  func.func @transform_20(%arg0: i32) -> (i32, i32) {
    %c0_i32 = arith.constant 0 : i32
    %c0_i32_0 = arith.constant 0 : i32
    return %arg0, %c0_i32 : i32, i32
  }
  func.func @transform_21(%arg0: i32) -> (i32, i32) {
    %c0_i32 = arith.constant 0 : i32
    %c0_i32_0 = arith.constant 0 : i32
    return %arg0, %c0_i32 : i32, i32
  }
  func.func @transform_22(%arg0: i32) -> (i32, i32) {
    %c0_i32 = arith.constant 0 : i32
    %c0_i32_0 = arith.constant 0 : i32
    return %arg0, %c0_i32 : i32, i32
  }
}

</mosaic_0001>

<llo_original>
// kernel: tpu_custom_call.1
$region0: #{tpu_custom_call.1}
  #allocation0 [shape = 'u32[]', space=smem, size = 0x4, offset = 0x4, fixed_abs, tag = 'smem constant byte address 0x4 - core index']
  #allocation1 [shape = 'u32[144,128]{1,0:T(1,128)}', space=vmem, size = 0x12000, scoped, tag = 'internal scratch']
  %s0 = inlined_call_operand.hbm [shape: f32[16,128], index: 0, kind: input, shape index: {}]
  %s1 = inlined_call_operand.hbm [shape: f32[16,128], index: 1, kind: input, shape index: {}]
  %s2 = inlined_call_operand.hbm [shape: bf16[128,256], index: 2, kind: input, shape index: {}]
  %s3 = inlined_call_operand.hbm [shape: f32[1,256], index: 3, kind: input, shape index: {}]
  %s4 = inlined_call_operand.hbm [shape: bf16[256,256], index: 4, kind: input, shape index: {}]
  %s5 = inlined_call_operand.hbm [shape: f32[1,256], index: 5, kind: input, shape index: {}]
  %s6 = inlined_call_operand.hbm [shape: bf16[256,256], index: 6, kind: input, shape index: {}]
  %s7 = inlined_call_operand.hbm [shape: f32[1,256], index: 7, kind: input, shape index: {}]
  %s8 = inlined_call_operand.hbm [shape: bf16[128,256], index: 8, kind: input, shape index: {}]
  %s9 = inlined_call_operand.hbm [shape: bf16[256,256], index: 9, kind: input, shape index: {}]
  %s10 = inlined_call_operand.hbm [shape: f32[1,256], index: 10, kind: input, shape index: {}]
  %s11 = inlined_call_operand.hbm [shape: bf16[128,256], index: 11, kind: input, shape index: {}]
  %s12 = inlined_call_operand.hbm [shape: f32[1,256], index: 12, kind: input, shape index: {}]
  %s13 = inlined_call_operand.hbm [shape: bf16[256,256], index: 13, kind: input, shape index: {}]
  %s14 = inlined_call_operand.hbm [shape: f32[1,256], index: 14, kind: input, shape index: {}]
  %s15 = inlined_call_operand.hbm [shape: bf16[256,256], index: 15, kind: input, shape index: {}]
  %s16 = inlined_call_operand.hbm [shape: f32[1,256], index: 16, kind: input, shape index: {}]
  %s17 = inlined_call_operand.vmem [shape: bf16[128,128], index: 17, kind: input, shape index: {}]
  %s18 = inlined_call_operand.hbm [shape: bf16[256,128], index: 18, kind: input, shape index: {}]
  %s19 = inlined_call_operand.vmem [shape: f32[1,128], index: 19, kind: input, shape index: {}]
  %s20 = inlined_call_operand.hbm [shape: f32[16,128], index: 20, kind: output, shape index: {0}]
  %s21 = inlined_call_operand.hbm [shape: f32[16,128], index: 21, kind: output, shape index: {1}]
  %s22 = inlined_call_operand.hbm [shape: f32[16,128], index: 22, kind: output, shape index: {2}]
  %23 = xla_tuple %s20, %s21, %s22
  %s24 = sld [smem:[#allocation0]]
  $region201: #{tpu_custom_call.1} parent=0
    _
  %s26 = ssub.s32 1, %s24
  %s27 = scalar_select 0, %s26, %s24
  $region1: #{tpu_custom_call.1} parent=0
    #allocation2 [shape = 'u8[8192]{0}', space=vmem, size = 0x2000, scoped, tag = 'input window, operand 0']
    #allocation3 [shape = 's32[2]{0}', space=sflag, size = 0x8, scoped, tag = 'scoped memory for tpu_custom_call.1']
    #allocation4 [shape = 's32[2]{0}', space=sflag, size = 0x8, scoped, tag = 'scoped memory for tpu_custom_call.1']
    #allocation5 [shape = 'u8[8192]{0}', space=vmem, size = 0x2000, scoped, tag = 'input window, operand 1']
    #allocation6 [shape = 's32[2]{0}', space=sflag, size = 0x8, scoped, tag = 'scoped memory for tpu_custom_call.1']
    #allocation7 [shape = 'u8[65536]{0}', space=vmem, size = 0x10000, scoped, tag = 'input window, operand 2, single buffered']
    #allocation8 [shape = 'u8[1024]{0}', space=vmem, size = 0x400, scoped, tag = 'input window, operand 3, single buffered']
    #allocation9 [shape = 's32[1]{0}', space=sflag, size = 0x4, scoped, tag = 'scoped memory for tpu_custom_call.1']
    #allocation10 [shape = 'u8[131072]{0}', space=vmem, size = 0x20000, scoped, tag = 'input window, operand 4, single buffered']
    #allocation11 [shape = 'u8[1024]{0}', space=vmem, size = 0x400, scoped, tag = 'input window, operand 5, single buffered']
    #allocation12 [shape = 's32[1]{0}', space=sflag, size = 0x4, scoped, tag = 'scoped memory for tpu_custom_call.1']
    #allocation13 [shape = 'u8[131072]{0}', space=vmem, size = 0x20000, scoped, tag = 'input window, operand 6, single buffered']
    #allocation14 [shape = 'u8[1024]{0}', space=vmem, size = 0x400, scoped, tag = 'input window, operand 7, single buffered']
    #allocation15 [shape = 's32[1]{0}', space=sflag, size = 0x4, scoped, tag = 'scoped memory for tpu_custom_call.1']
    #allocation16 [shape = 'u8[65536]{0}', space=vmem, size = 0x10000, scoped, tag = 'input window, operand 8, single buffered']
    #allocation17 [shape = 'u8[131072]{0}', space=vmem, size = 0x20000, scoped, tag = 'input window, operand 9, single buffered']
    #allocation18 [shape = 's32[1]{0}', space=sflag, size = 0x4, scoped, tag = 'scoped memory for tpu_custom_call.1']
    #allocation19 [shape = 'u8[1024]{0}', space=vmem, size = 0x400, scoped, tag = 'input window, operand 10, single buffered']
    #allocation20 [shape = 'u8[65536]{0}', space=vmem, size = 0x10000, scoped, tag = 'input window, operand 11, single buffered']
    #allocation21 [shape = 's32[1]{0}', space=sflag, size = 0x4, scoped, tag = 'scoped memory for tpu_custom_call.1']
    #allocation22 [shape = 'u8[1024]{0}', space=vmem, size = 0x400, scoped, tag = 'input window, operand 12, single buffered']
    #allocation23 [shape = 'u8[131072]{0}', space=vmem, size = 0x20000, scoped, tag = 'input window, operand 13, single buffered']
    #allocation24 [shape = 's32[1]{0}', space=sflag, size = 0x4, scoped, tag = 'scoped memory for tpu_custom_call.1']
    #allocation25 [shape = 'u8[1024]{0}', space=vmem, size = 0x400, scoped, tag = 'input window, operand 14, single buffered']
    #allocation26 [shape = 'u8[131072]{0}', space=vmem, size = 0x20000, scoped, tag = 'input window, operand 15, single buffered']
    #allocation27 [shape = 's32[1]{0}', space=sflag, size = 0x4, scoped, tag = 'scoped memory for tpu_custom_call.1']
    #allocation28 [shape = 'u8[1024]{0}', space=vmem, size = 0x400, scoped, tag = 'input window, operand 16, single buffered']
    #allocation29 [shape = 'u8[65536]{0}', space=vmem, size = 0x10000, scoped, tag = 'input window, operand 18, single buffered']
    #allocation30 [shape = 's32[1]{0}', space=sflag, size = 0x4, scoped, tag = 'scoped memory for tpu_custom_call.1']
    #allocation31 [shape = 'u8[8192]{0}', space=vmem, size = 0x2000, scoped, tag = 'output window, operand 0']
    #allocation32 [shape = 'u8[8192]{0}', space=vmem, size = 0x2000, scoped, tag = 'output window, operand 1']
    #allocation33 [shape = 's32[2]{0}', space=sflag, size = 0x8, scoped, tag = 'scoped memory for tpu_custom_call.1']
    #allocation34 [shape = 'u8[8192]{0}', space=vmem, size = 0x2000, scoped, tag = 'output window, operand 2']
    %28 = vsyncpa [#allocation3], 0
    %s29 = scalar_lea.sflag [#allocation3], 1
    %30 = vsyncpa %s29, 0
    %31 = vsyncpa [#allocation6], 0
    %s32 = scalar_lea.sflag [#allocation6], 1
    %33 = vsyncpa %s32, 0
    %34 = vsyncpa [#allocation9], 0
    %35 = vsyncpa [#allocation12], 0
    %36 = vsyncpa [#allocation15], 0
    %37 = vsyncpa [#allocation18], 0
    %38 = vsyncpa [#allocation21], 0
    %39 = vsyncpa [#allocation24], 0
    %40 = vsyncpa [#allocation27], 0
    %41 = vsyncpa [#allocation30], 0
    %42 = vsyncpa [#allocation4], 0
    %s43 = scalar_lea.sflag [#allocation4], 1
    %44 = vsyncpa %s43, 0
    %45 = vsyncpa [#allocation33], 0
    %s46 = scalar_lea.sflag [#allocation33], 1
    %47 = vsyncpa %s46, 0
    loop: start=0, step=1, limit=4
    $region2: #{tpu_custom_call.1} parent=1 // loop_pre_header
      _
    $region3: #{tpu_custom_call.1} parent=1 // loop_header
      %s49 = sphi 0, %s53
      %p50 = scmp.ge.s32.totalorder %s49, 4
      %s59 = sphi 0, %s61
      %s62 = sphi 0, %s59
      %s63 = sphi 0, %s62
      %s79 = sphi 0, %s63
      %s85 = sphi 0, %s87
      %s88 = sphi 0, %s85
      %s89 = sphi 0, %s88
      %s105 = sphi 0, %s89
      %s109 = sphi 0, %s109
      %s111 = sphi 0, %s109
      %s112 = sphi 0, %s111
      %s126 = sphi 0, %s112
      %s130 = sphi 0, %s130
      %s132 = sphi 0, %s130
      %s133 = sphi 0, %s132
      %s147 = sphi 0, %s133
      %s151 = sphi 0, %s151
      %s153 = sphi 0, %s151
      %s154 = sphi 0, %s153
      %s168 = sphi 0, %s154
      %s172 = sphi 0, %s172
      %s174 = sphi 0, %s172
      %s175 = sphi 0, %s174
      %s189 = sphi 0, %s175
      %s193 = sphi 0, %s193
      %s195 = sphi 0, %s193
      %s196 = sphi 0, %s195
      %s210 = sphi 0, %s196
      %s214 = sphi 0, %s214
      %s216 = sphi 0, %s214
      %s217 = sphi 0, %s216
      %s231 = sphi 0, %s217
      %s235 = sphi 0, %s235
      %s237 = sphi 0, %s235
      %s238 = sphi 0, %s237
      %s252 = sphi 0, %s238
      %s256 = sphi 0, %s256
      %s258 = sphi 0, %s256
      %s259 = sphi 0, %s258
      %s273 = sphi 0, %s259
      %s277 = sphi 0, %s277
      %s279 = sphi 0, %s277
      %s280 = sphi 0, %s279
      %s294 = sphi 0, %s280
      %s298 = sphi 0, %s298
      %s300 = sphi 0, %s298
      %s301 = sphi 0, %s300
      %s315 = sphi 0, %s301
      %s319 = sphi 0, %s319
      %s321 = sphi 0, %s319
      %s322 = sphi 0, %s321
      %s336 = sphi 0, %s322
      %s340 = sphi 0, %s340
      %s342 = sphi 0, %s340
      %s343 = sphi 0, %s342
      %s357 = sphi 0, %s343
      %s361 = sphi 0, %s361
      %s363 = sphi 0, %s361
      %s364 = sphi 0, %s363
      %s378 = sphi 0, %s364
      %s382 = sphi 0, %s382
      %s384 = sphi 0, %s382
      %s385 = sphi 0, %s384
      %s399 = sphi 0, %s385
      %s403 = sphi 0, %s403
      %s405 = sphi 0, %s403
      %s406 = sphi 0, %s405
      %s420 = sphi 0, %s406
      %s424 = sphi 0, %s424
      %s426 = sphi 0, %s424
      %s427 = sphi 0, %s426
      %s441 = sphi 0, %s427
      %s445 = sphi 0, %s445
      %s447 = sphi 0, %s445
      %s448 = sphi 0, %s447
      %s462 = sphi 0, %s448
      %s466 = sphi 0, %s466
      %s468 = sphi 0, %s466
      %s469 = sphi 0, %s468
      %s483 = sphi 0, %s469
      %s489 = sphi 0, %s491
      %s492 = sphi 0, %s489
      %s493 = sphi 0, %s492
      %s509 = sphi 0, %s493
      %s515 = sphi 0, %s517
      %s518 = sphi 0, %s515
      %s519 = sphi 0, %s518
      %s535 = sphi 0, %s519
      %s541 = sphi 0, %s543
      %s544 = sphi 0, %s541
      %s545 = sphi 0, %s544
      %s561 = sphi 0, %s545
    $region4: #{tpu_custom_call.1} parent=1 // loop_header_branch
      %52 = sbr.rel (%p50) target = $region8
    $region5: #{tpu_custom_call.1} parent=1 // loop_body
      %s54 = ssub.s32 %s49, 1
      %s55 = ssub.s32 %s49, 2
      %s56 = sadd.s32 %s49, 1
      %s57 = ssub.s32 %s49, %s56
      %p58 = scmp.eq.s32.totalorder %s57, 0
      %s60 = sadd.s32 %s59, 1
      %s61 = scalar_select %p58, %s59, %s60
      %p64 = pneg %p58
      %p65 = scmp.eq.s32.totalorder %s49, 1
      %p66 = por %p64, %p65
      %p67 = scmp.ne.s32.totalorder %s59, %s62
      %p68 = scmp.eq.s32.totalorder %s49, 0
      %p69 = por %p67, %p68
      %p70 = scmp.ne.s32.totalorder %s59, %s62
      %p71 = scmp.eq.s32.totalorder %s54, 1
      %p72 = por %p70, %p71
      %p73 = scmp.ne.s32.totalorder %s62, %s63
      %p74 = scmp.eq.s32.totalorder %s54, 0
      %p75 = por %p73, %p74
      %p76 = scmp.ne.s32.totalorder %s62, %s63
      %p77 = scmp.eq.s32.totalorder %s55, 1
      %p78 = por %p76, %p77
      %p80 = scmp.ne.s32.totalorder %s63, %s79
      %p81 = scmp.eq.s32.totalorder %s55, 0
      %p82 = por %p80, %p81
      %s83 = ssub.s32 %s49, %s56
      %p84 = scmp.eq.s32.totalorder %s83, 0
      %s86 = sadd.s32 %s85, 1
      %s87 = scalar_select %p84, %s85, %s86
      %p90 = pneg %p84
      %p91 = scmp.eq.s32.totalorder %s49, 1
      %p92 = por %p90, %p91
      %p93 = scmp.ne.s32.totalorder %s85, %s88
      %p94 = scmp.eq.s32.totalorder %s49, 0
      %p95 = por %p93, %p94
      %p96 = scmp.ne.s32.totalorder %s85, %s88
      %p97 = scmp.eq.s32.totalorder %s54, 1
      %p98 = por %p96, %p97
      %p99 = scmp.ne.s32.totalorder %s88, %s89
      %p100 = scmp.eq.s32.totalorder %s54, 0
      %p101 = por %p99, %p100
      %p102 = scmp.ne.s32.totalorder %s88, %s89
      %p103 = scmp.eq.s32.totalorder %s55, 1
      %p104 = por %p102, %p103
      %p106 = scmp.ne.s32.totalorder %s89, %s105
      %p107 = scmp.eq.s32.totalorder %s55, 0
      %p108 = por %p106, %p107
      %s110 = sadd.s32 %s109, 1
      %p113 = scmp.eq.s32.totalorder %s49, 1
      %p114 = scmp.ne.s32.totalorder %s109, %s111
      %p115 = scmp.eq.s32.totalorder %s49, 0
      %p116 = por %p114, %p115
      %p117 = scmp.ne.s32.totalorder %s109, %s111
      %p118 = scmp.eq.s32.totalorder %s54, 1
      %p119 = por %p117, %p118
      %p120 = scmp.ne.s32.totalorder %s111, %s112
      %p121 = scmp.eq.s32.totalorder %s54, 0
      %p122 = por %p120, %p121
      %p123 = scmp.ne.s32.totalorder %s111, %s112
      %p124 = scmp.eq.s32.totalorder %s55, 1
      %p125 = por %p123, %p124
      %p127 = scmp.ne.s32.totalorder %s112, %s126
      %p128 = scmp.eq.s32.totalorder %s55, 0
      %p129 = por %p127, %p128
      %s131 = sadd.s32 %s130, 1
      %p134 = scmp.eq.s32.totalorder %s49, 1
      %p135 = scmp.ne.s32.totalorder %s130, %s132
      %p136 = scmp.eq.s32.totalorder %s49, 0
      %p137 = por %p135, %p136
      %p138 = scmp.ne.s32.totalorder %s130, %s132
      %p139 = scmp.eq.s32.totalorder %s54, 1
      %p140 = por %p138, %p139
      %p141 = scmp.ne.s32.totalorder %s132, %s133
      %p142 = scmp.eq.s32.totalorder %s54, 0
      %p143 = por %p141, %p142
      %p144 = scmp.ne.s32.totalorder %s132, %s133
      %p145 = scmp.eq.s32.totalorder %s55, 1
      %p146 = por %p144, %p145
      %p148 = scmp.ne.s32.totalorder %s133, %s147
      %p149 = scmp.eq.s32.totalorder %s55, 0
      %p150 = por %p148, %p149
      %s152 = sadd.s32 %s151, 1
      %p155 = scmp.eq.s32.totalorder %s49, 1
      %p156 = scmp.ne.s32.totalorder %s151, %s153
      %p157 = scmp.eq.s32.totalorder %s49, 0
      %p158 = por %p156, %p157
      %p159 = scmp.ne.s32.totalorder %s151, %s153
      %p160 = scmp.eq.s32.totalorder %s54, 1
      %p161 = por %p159, %p160
      %p162 = scmp.ne.s32.totalorder %s153, %s154
      %p163 = scmp.eq.s32.totalorder %s54, 0
      %p164 = por %p162, %p163
      %p165 = scmp.ne.s32.totalorder %s153, %s154
      %p166 = scmp.eq.s32.totalorder %s55, 1
      %p167 = por %p165, %p166
      %p169 = scmp.ne.s32.totalorder %s154, %s168
      %p170 = scmp.eq.s32.totalorder %s55, 0
      %p171 = por %p169, %p170
      %s173 = sadd.s32 %s172, 1
      %p176 = scmp.eq.s32.totalorder %s49, 1
      %p177 = scmp.ne.s32.totalorder %s172, %s174
      %p178 = scmp.eq.s32.totalorder %s49, 0
      %p179 = por %p177, %p178
      %p180 = scmp.ne.s32.totalorder %s172, %s174
      %p181 = scmp.eq.s32.totalorder %s54, 1
      %p182 = por %p180, %p181
      %p183 = scmp.ne.s32.totalorder %s174, %s175
      %p184 = scmp.eq.s32.totalorder %s54, 0
      %p185 = por %p183, %p184
      %p186 = scmp.ne.s32.totalorder %s174, %s175
      %p187 = scmp.eq.s32.totalorder %s55, 1
      %p188 = por %p186, %p187
      %p190 = scmp.ne.s32.totalorder %s175, %s189
      %p191 = scmp.eq.s32.totalorder %s55, 0
      %p192 = por %p190, %p191
      %s194 = sadd.s32 %s193, 1
      %p197 = scmp.eq.s32.totalorder %s49, 1
      %p198 = scmp.ne.s32.totalorder %s193, %s195
      %p199 = scmp.eq.s32.totalorder %s49, 0
      %p200 = por %p198, %p199
      %p201 = scmp.ne.s32.totalorder %s193, %s195
      %p202 = scmp.eq.s32.totalorder %s54, 1
      %p203 = por %p201, %p202
      %p204 = scmp.ne.s32.totalorder %s195, %s196
      %p205 = scmp.eq.s32.totalorder %s54, 0
      %p206 = por %p204, %p205
      %p207 = scmp.ne.s32.totalorder %s195, %s196
      %p208 = scmp.eq.s32.totalorder %s55, 1
      %p209 = por %p207, %p208
      %p211 = scmp.ne.s32.totalorder %s196, %s210
      %p212 = scmp.eq.s32.totalorder %s55, 0
      %p213 = por %p211, %p212
      %s215 = sadd.s32 %s214, 1
      %p218 = scmp.eq.s32.totalorder %s49, 1
      %p219 = scmp.ne.s32.totalorder %s214, %s216
      %p220 = scmp.eq.s32.totalorder %s49, 0
      %p221 = por %p219, %p220
      %p222 = scmp.ne.s32.totalorder %s214, %s216
      %p223 = scmp.eq.s32.totalorder %s54, 1
      %p224 = por %p222, %p223
      %p225 = scmp.ne.s32.totalorder %s216, %s217
      %p226 = scmp.eq.s32.totalorder %s54, 0
      %p227 = por %p225, %p226
      %p228 = scmp.ne.s32.totalorder %s216, %s217
      %p229 = scmp.eq.s32.totalorder %s55, 1
      %p230 = por %p228, %p229
      %p232 = scmp.ne.s32.totalorder %s217, %s231
      %p233 = scmp.eq.s32.totalorder %s55, 0
      %p234 = por %p232, %p233
      %s236 = sadd.s32 %s235, 1
      %p239 = scmp.eq.s32.totalorder %s49, 1
      %p240 = scmp.ne.s32.totalorder %s235, %s237
      %p241 = scmp.eq.s32.totalorder %s49, 0
      %p242 = por %p240, %p241
      %p243 = scmp.ne.s32.totalorder %s235, %s237
      %p244 = scmp.eq.s32.totalorder %s54, 1
      %p245 = por %p243, %p244
      %p246 = scmp.ne.s32.totalorder %s237, %s238
      %p247 = scmp.eq.s32.totalorder %s54, 0
      %p248 = por %p246, %p247
      %p249 = scmp.ne.s32.totalorder %s237, %s238
      %p250 = scmp.eq.s32.totalorder %s55, 1
      %p251 = por %p249, %p250
      %p253 = scmp.ne.s32.totalorder %s238, %s252
      %p254 = scmp.eq.s32.totalorder %s55, 0
      %p255 = por %p253, %p254
      %s257 = sadd.s32 %s256, 1
      %p260 = scmp.eq.s32.totalorder %s49, 1
      %p261 = scmp.ne.s32.totalorder %s256, %s258
      %p262 = scmp.eq.s32.totalorder %s49, 0
      %p263 = por %p261, %p262
      %p264 = scmp.ne.s32.totalorder %s256, %s258
      %p265 = scmp.eq.s32.totalorder %s54, 1
      %p266 = por %p264, %p265
      %p267 = scmp.ne.s32.totalorder %s258, %s259
      %p268 = scmp.eq.s32.totalorder %s54, 0
      %p269 = por %p267, %p268
      %p270 = scmp.ne.s32.totalorder %s258, %s259
      %p271 = scmp.eq.s32.totalorder %s55, 1
      %p272 = por %p270, %p271
      %p274 = scmp.ne.s32.totalorder %s259, %s273
      %p275 = scmp.eq.s32.totalorder %s55, 0
      %p276 = por %p274, %p275
      %s278 = sadd.s32 %s277, 1
      %p281 = scmp.eq.s32.totalorder %s49, 1
      %p282 = scmp.ne.s32.totalorder %s277, %s279
      %p283 = scmp.eq.s32.totalorder %s49, 0
      %p284 = por %p282, %p283
      %p285 = scmp.ne.s32.totalorder %s277, %s279
      %p286 = scmp.eq.s32.totalorder %s54, 1
      %p287 = por %p285, %p286
      %p288 = scmp.ne.s32.totalorder %s279, %s280
      %p289 = scmp.eq.s32.totalorder %s54, 0
      %p290 = por %p288, %p289
      %p291 = scmp.ne.s32.totalorder %s279, %s280
      %p292 = scmp.eq.s32.totalorder %s55, 1
      %p293 = por %p291, %p292
      %p295 = scmp.ne.s32.totalorder %s280, %s294
      %p296 = scmp.eq.s32.totalorder %s55, 0
      %p297 = por %p295, %p296
      %s299 = sadd.s32 %s298, 1
      %p302 = scmp.eq.s32.totalorder %s49, 1
      %p303 = scmp.ne.s32.totalorder %s298, %s300
      %p304 = scmp.eq.s32.totalorder %s49, 0
      %p305 = por %p303, %p304
      %p306 = scmp.ne.s32.totalorder %s298, %s300
      %p307 = scmp.eq.s32.totalorder %s54, 1
      %p308 = por %p306, %p307
      %p309 = scmp.ne.s32.totalorder %s300, %s301
      %p310 = scmp.eq.s32.totalorder %s54, 0
      %p311 = por %p309, %p310
      %p312 = scmp.ne.s32.totalorder %s300, %s301
      %p313 = scmp.eq.s32.totalorder %s55, 1
      %p314 = por %p312, %p313
      %p316 = scmp.ne.s32.totalorder %s301, %s315
      %p317 = scmp.eq.s32.totalorder %s55, 0
      %p318 = por %p316, %p317
      %s320 = sadd.s32 %s319, 1
      %p323 = scmp.eq.s32.totalorder %s49, 1
      %p324 = scmp.ne.s32.totalorder %s319, %s321
      %p325 = scmp.eq.s32.totalorder %s49, 0
      %p326 = por %p324, %p325
      %p327 = scmp.ne.s32.totalorder %s319, %s321
      %p328 = scmp.eq.s32.totalorder %s54, 1
      %p329 = por %p327, %p328
      %p330 = scmp.ne.s32.totalorder %s321, %s322
      %p331 = scmp.eq.s32.totalorder %s54, 0
      %p332 = por %p330, %p331
      %p333 = scmp.ne.s32.totalorder %s321, %s322
      %p334 = scmp.eq.s32.totalorder %s55, 1
      %p335 = por %p333, %p334
      %p337 = scmp.ne.s32.totalorder %s322, %s336
      %p338 = scmp.eq.s32.totalorder %s55, 0
      %p339 = por %p337, %p338
      %s341 = sadd.s32 %s340, 1
      %p344 = scmp.eq.s32.totalorder %s49, 1
      %p345 = scmp.ne.s32.totalorder %s340, %s342
      %p346 = scmp.eq.s32.totalorder %s49, 0
      %p347 = por %p345, %p346
      %p348 = scmp.ne.s32.totalorder %s340, %s342
      %p349 = scmp.eq.s32.totalorder %s54, 1
      %p350 = por %p348, %p349
      %p351 = scmp.ne.s32.totalorder %s342, %s343
      %p352 = scmp.eq.s32.totalorder %s54, 0
      %p353 = por %p351, %p352
      %p354 = scmp.ne.s32.totalorder %s342, %s343
      %p355 = scmp.eq.s32.totalorder %s55, 1
      %p356 = por %p354, %p355
      %p358 = scmp.ne.s32.totalorder %s343, %s357
      %p359 = scmp.eq.s32.totalorder %s55, 0
      %p360 = por %p358, %p359
      %s362 = sadd.s32 %s361, 1
      %p365 = scmp.eq.s32.totalorder %s49, 1
      %p366 = scmp.ne.s32.totalorder %s361, %s363
      %p367 = scmp.eq.s32.totalorder %s49, 0
      %p368 = por %p366, %p367
      %p369 = scmp.ne.s32.totalorder %s361, %s363
      %p370 = scmp.eq.s32.totalorder %s54, 1
      %p371 = por %p369, %p370
      %p372 = scmp.ne.s32.totalorder %s363, %s364
      %p373 = scmp.eq.s32.totalorder %s54, 0
      %p374 = por %p372, %p373
      %p375 = scmp.ne.s32.totalorder %s363, %s364
      %p376 = scmp.eq.s32.totalorder %s55, 1
      %p377 = por %p375, %p376
      %p379 = scmp.ne.s32.totalorder %s364, %s378
      %p380 = scmp.eq.s32.totalorder %s55, 0
      %p381 = por %p379, %p380
      %s383 = sadd.s32 %s382, 1
      %p386 = scmp.eq.s32.totalorder %s49, 1
      %p387 = scmp.ne.s32.totalorder %s382, %s384
      %p388 = scmp.eq.s32.totalorder %s49, 0
      %p389 = por %p387, %p388
      %p390 = scmp.ne.s32.totalorder %s382, %s384
      %p391 = scmp.eq.s32.totalorder %s54, 1
      %p392 = por %p390, %p391
      %p393 = scmp.ne.s32.totalorder %s384, %s385
      %p394 = scmp.eq.s32.totalorder %s54, 0
      %p395 = por %p393, %p394
      %p396 = scmp.ne.s32.totalorder %s384, %s385
      %p397 = scmp.eq.s32.totalorder %s55, 1
      %p398 = por %p396, %p397
      %p400 = scmp.ne.s32.totalorder %s385, %s399
      %p401 = scmp.eq.s32.totalorder %s55, 0
      %p402 = por %p400, %p401
      %s404 = sadd.s32 %s403, 1
      %p407 = scmp.eq.s32.totalorder %s49, 1
      %p408 = scmp.ne.s32.totalorder %s403, %s405
      %p409 = scmp.eq.s32.totalorder %s49, 0
      %p410 = por %p408, %p409
      %p411 = scmp.ne.s32.totalorder %s403, %s405
      %p412 = scmp.eq.s32.totalorder %s54, 1
      %p413 = por %p411, %p412
      %p414 = scmp.ne.s32.totalorder %s405, %s406
      %p415 = scmp.eq.s32.totalorder %s54, 0
      %p416 = por %p414, %p415
      %p417 = scmp.ne.s32.totalorder %s405, %s406
      %p418 = scmp.eq.s32.totalorder %s55, 1
      %p419 = por %p417, %p418
      %p421 = scmp.ne.s32.totalorder %s406, %s420
      %p422 = scmp.eq.s32.totalorder %s55, 0
      %p423 = por %p421, %p422
      %s425 = sadd.s32 %s424, 1
      %p428 = scmp.eq.s32.totalorder %s49, 1
      %p429 = scmp.ne.s32.totalorder %s424, %s426
      %p430 = scmp.eq.s32.totalorder %s49, 0
      %p431 = por %p429, %p430
      %p432 = scmp.ne.s32.totalorder %s424, %s426
      %p433 = scmp.eq.s32.totalorder %s54, 1
      %p434 = por %p432, %p433
      %p435 = scmp.ne.s32.totalorder %s426, %s427
      %p436 = scmp.eq.s32.totalorder %s54, 0
      %p437 = por %p435, %p436
      %p438 = scmp.ne.s32.totalorder %s426, %s427
      %p439 = scmp.eq.s32.totalorder %s55, 1
      %p440 = por %p438, %p439
      %p442 = scmp.ne.s32.totalorder %s427, %s441
      %p443 = scmp.eq.s32.totalorder %s55, 0
      %p444 = por %p442, %p443
      %s446 = sadd.s32 %s445, 1
      %p449 = scmp.eq.s32.totalorder %s49, 1
      %p450 = scmp.ne.s32.totalorder %s445, %s447
      %p451 = scmp.eq.s32.totalorder %s49, 0
      %p452 = por %p450, %p451
      %p453 = scmp.ne.s32.totalorder %s445, %s447
      %p454 = scmp.eq.s32.totalorder %s54, 1
      %p455 = por %p453, %p454
      %p456 = scmp.ne.s32.totalorder %s447, %s448
      %p457 = scmp.eq.s32.totalorder %s54, 0
      %p458 = por %p456, %p457
      %p459 = scmp.ne.s32.totalorder %s447, %s448
      %p460 = scmp.eq.s32.totalorder %s55, 1
      %p461 = por %p459, %p460
      %p463 = scmp.ne.s32.totalorder %s448, %s462
      %p464 = scmp.eq.s32.totalorder %s55, 0
      %p465 = por %p463, %p464
      %s467 = sadd.s32 %s466, 1
      %p470 = scmp.eq.s32.totalorder %s49, 1
      %p471 = scmp.ne.s32.totalorder %s466, %s468
      %p472 = scmp.eq.s32.totalorder %s49, 0
      %p473 = por %p471, %p472
      %p474 = scmp.ne.s32.totalorder %s466, %s468
      %p475 = scmp.eq.s32.totalorder %s54, 1
      %p476 = por %p474, %p475
      %p477 = scmp.ne.s32.totalorder %s468, %s469
      %p478 = scmp.eq.s32.totalorder %s54, 0
      %p479 = por %p477, %p478
      %p480 = scmp.ne.s32.totalorder %s468, %s469
      %p481 = scmp.eq.s32.totalorder %s55, 1
      %p482 = por %p480, %p481
      %p484 = scmp.ne.s32.totalorder %s469, %s483
      %p485 = scmp.eq.s32.totalorder %s55, 0
      %p486 = por %p484, %p485
      %s487 = ssub.s32 %s49, %s56
      %p488 = scmp.eq.s32.totalorder %s487, 0
      %s490 = sadd.s32 %s489, 1
      %s491 = scalar_select %p488, %s489, %s490
      %p494 = pneg %p488
      %p495 = scmp.eq.s32.totalorder %s49, 1
      %p496 = por %p494, %p495
      %p497 = scmp.ne.s32.totalorder %s489, %s492
      %p498 = scmp.eq.s32.totalorder %s49, 0
      %p499 = por %p497, %p498
      %p500 = scmp.ne.s32.totalorder %s489, %s492
      %p501 = scmp.eq.s32.totalorder %s54, 1
      %p502 = por %p500, %p501
      %p503 = scmp.ne.s32.totalorder %s492, %s493
      %p504 = scmp.eq.s32.totalorder %s54, 0
      %p505 = por %p503, %p504
      %p506 = scmp.ne.s32.totalorder %s492, %s493
      %p507 = scmp.eq.s32.totalorder %s55, 1
      %p508 = por %p506, %p507
      %p510 = scmp.ne.s32.totalorder %s493, %s509
      %p511 = scmp.eq.s32.totalorder %s55, 0
      %p512 = por %p510, %p511
      %s513 = ssub.s32 %s49, %s56
      %p514 = scmp.eq.s32.totalorder %s513, 0
      %s516 = sadd.s32 %s515, 1
      %s517 = scalar_select %p514, %s515, %s516
      %p520 = pneg %p514
      %p521 = scmp.eq.s32.totalorder %s49, 1
      %p522 = por %p520, %p521
      %p523 = scmp.ne.s32.totalorder %s515, %s518
      %p524 = scmp.eq.s32.totalorder %s49, 0
      %p525 = por %p523, %p524
      %p526 = scmp.ne.s32.totalorder %s515, %s518
      %p527 = scmp.eq.s32.totalorder %s54, 1
      %p528 = por %p526, %p527
      %p529 = scmp.ne.s32.totalorder %s518, %s519
      %p530 = scmp.eq.s32.totalorder %s54, 0
      %p531 = por %p529, %p530
      %p532 = scmp.ne.s32.totalorder %s518, %s519
      %p533 = scmp.eq.s32.totalorder %s55, 1
      %p534 = por %p532, %p533
      %p536 = scmp.ne.s32.totalorder %s519, %s535
      %p537 = scmp.eq.s32.totalorder %s55, 0
      %p538 = por %p536, %p537
      %s539 = ssub.s32 %s49, %s56
      %p540 = scmp.eq.s32.totalorder %s539, 0
      %s542 = sadd.s32 %s541, 1
      %s543 = scalar_select %p540, %s541, %s542
      %p546 = pneg %p540
      %p547 = scmp.eq.s32.totalorder %s49, 1
      %p548 = por %p546, %p547
      %p549 = scmp.ne.s32.totalorder %s541, %s544
      %p550 = scmp.eq.s32.totalorder %s49, 0
      %p551 = por %p549, %p550
      %p552 = scmp.ne.s32.totalorder %s541, %s544
      %p553 = scmp.eq.s32.totalorder %s54, 1
      %p554 = por %p552, %p553
      %p555 = scmp.ne.s32.totalorder %s544, %s545
      %p556 = scmp.eq.s32.totalorder %s54, 0
      %p557 = por %p555, %p556
      %p558 = scmp.ne.s32.totalorder %s544, %s545
      %p559 = scmp.eq.s32.totalorder %s55, 1
      %p560 = por %p558, %p559
      %p562 = scmp.ne.s32.totalorder %s545, %s561
      %p563 = scmp.eq.s32.totalorder %s55, 0
      %p564 = por %p562, %p563
      %p565 = scmp.le.s32.totalorder 1, %s49
      %p566 = scmp.lt.s32.totalorder %s49, 3
      %p567 = pnand %p565, %p566
      %p568 = pneg %p567
      // Predicated region
      $region9: #{tpu_custom_call.1} parent=5 // pred_check
        _
      $region10: #{tpu_custom_call.1} parent=5 // pred_check_branch
        %570 = sbr.rel (%p567) target = $region12
      $region11: #{tpu_custom_call.1} parent=5 // pred_region
        %s571 = ssub.s32 %s49, 1
        // Predicated region
        $region13: #{tpu_custom_call.1} parent=11 // pred_check
          %p572 = pneg %p122
        $region14: #{tpu_custom_call.1} parent=11 // pred_check_branch
          %574 = sbr.rel (%p572) target = $region16
        $region15: #{tpu_custom_call.1} parent=11 // pred_region
          %s576 = ssub.s32 2048, 2048
          %577 = vsyncadd [#allocation6], %s576
          %s578 = sshll.u32 [#allocation7], 4
          %s579 = int_to_ptr.vmem [resolvable:$true] %s578
          %584 = dma.hbm_to_vmem [thread:$0]  %s2, 2048, %s579, [#allocation6], 128, 128, 8
        $region16: #{tpu_custom_call.1} parent=11 // pred_fallthru
          _
        // Predicated region
        $region17: #{tpu_custom_call.1} parent=11 // pred_check
          %p585 = pneg %p143
        $region18: #{tpu_custom_call.1} parent=11 // pred_check_branch
          %587 = sbr.rel (%p585) target = $region20
        $region19: #{tpu_custom_call.1} parent=11 // pred_region
          %s589 = ssub.s32 32, 32
          %590 = vsyncadd [#allocation9], %s589
          %s592 = sshll.u32 [#allocation8], 4
          %s593 = int_to_ptr.vmem [resolvable:$true] %s592
          %595 = dma.hbm_to_vmem [thread:$0]  %s3, 32, %s593, [#allocation9]
        $region20: #{tpu_custom_call.1} parent=11 // pred_fallthru
          _
        // Predicated region
        $region21: #{tpu_custom_call.1} parent=11 // pred_check
          %p596 = pneg %p164
        $region22: #{tpu_custom_call.1} parent=11 // pred_check_branch
          %598 = sbr.rel (%p596) target = $region24
        $region23: #{tpu_custom_call.1} parent=11 // pred_region
          %s600 = ssub.s32 4096, 4096
          %601 = vsyncadd [#allocation9], %s600
          %s602 = sshll.u32 [#allocation10], 4
          %s603 = int_to_ptr.vmem [resolvable:$true] %s602
          %608 = dma.hbm_to_vmem [thread:$0]  %s4, 4096, %s603, [#allocation9], 128, 128, 8
        $region24: #{tpu_custom_call.1} parent=11 // pred_fallthru
          _
        // Predicated region
        $region25: #{tpu_custom_call.1} parent=11 // pred_check
          %p609 = pneg %p185
        $region26: #{tpu_custom_call.1} parent=11 // pred_check_branch
          %611 = sbr.rel (%p609) target = $region28
        $region27: #{tpu_custom_call.1} parent=11 // pred_region
          %s613 = ssub.s32 32, 32
          %614 = vsyncadd [#allocation12], %s613
          %s616 = sshll.u32 [#allocation11], 4
          %s617 = int_to_ptr.vmem [resolvable:$true] %s616
          %619 = dma.hbm_to_vmem [thread:$0]  %s5, 32, %s617, [#allocation12]
        $region28: #{tpu_custom_call.1} parent=11 // pred_fallthru
          _
        // Predicated region
        $region29: #{tpu_custom_call.1} parent=11 // pred_check
          %p620 = pneg %p206
        $region30: #{tpu_custom_call.1} parent=11 // pred_check_branch
          %622 = sbr.rel (%p620) target = $region32
        $region31: #{tpu_custom_call.1} parent=11 // pred_region
          %s624 = ssub.s32 4096, 4096
          %625 = vsyncadd [#allocation12], %s624
          %s626 = sshll.u32 [#allocation13], 4
          %s627 = int_to_ptr.vmem [resolvable:$true] %s626
          %632 = dma.hbm_to_vmem [thread:$0]  %s6, 4096, %s627, [#allocation12], 128, 128, 8
        $region32: #{tpu_custom_call.1} parent=11 // pred_fallthru
          _
        // Predicated region
        $region33: #{tpu_custom_call.1} parent=11 // pred_check
          %p633 = pneg %p227
        $region34: #{tpu_custom_call.1} parent=11 // pred_check_branch
          %635 = sbr.rel (%p633) target = $region36
        $region35: #{tpu_custom_call.1} parent=11 // pred_region
          %s637 = ssub.s32 32, 32
          %638 = vsyncadd [#allocation15], %s637
          %s640 = sshll.u32 [#allocation14], 4
          %s641 = int_to_ptr.vmem [resolvable:$true] %s640
          %643 = dma.hbm_to_vmem [thread:$0]  %s7, 32, %s641, [#allocation15]
        $region36: #{tpu_custom_call.1} parent=11 // pred_fallthru
          _
        // Predicated region
        $region37: #{tpu_custom_call.1} parent=11 // pred_check
          %p644 = pneg %p248
        $region38: #{tpu_custom_call.1} parent=11 // pred_check_branch
          %646 = sbr.rel (%p644) target = $region40
        $region39: #{tpu_custom_call.1} parent=11 // pred_region
          %s648 = ssub.s32 2048, 2048
          %649 = vsyncadd [#allocation15], %s648
          %s650 = sshll.u32 [#allocation16], 4
          %s651 = int_to_ptr.vmem [resolvable:$true] %s650
          %656 = dma.hbm_to_vmem [thread:$0]  %s8, 2048, %s651, [#allocation15], 128, 128, 8
        $region40: #{tpu_custom_call.1} parent=11 // pred_fallthru
          _
        // Predicated region
        $region41: #{tpu_custom_call.1} parent=11 // pred_check
          %p657 = pneg %p269
        $region42: #{tpu_custom_call.1} parent=11 // pred_check_branch
          %659 = sbr.rel (%p657) target = $region44
        $region43: #{tpu_custom_call.1} parent=11 // pred_region
          %s661 = ssub.s32 4096, 4096
          %662 = vsyncadd [#allocation18], %s661
          %s663 = sshll.u32 [#allocation17], 4
          %s664 = int_to_ptr.vmem [resolvable:$true] %s663
          %669 = dma.hbm_to_vmem [thread:$0]  %s9, 4096, %s664, [#allocation18], 128, 128, 8
        $region44: #{tpu_custom_call.1} parent=11 // pred_fallthru
          _
        // Predicated region
        $region45: #{tpu_custom_call.1} parent=11 // pred_check
          %p670 = pneg %p290
        $region46: #{tpu_custom_call.1} parent=11 // pred_check_branch
          %672 = sbr.rel (%p670) target = $region48
        $region47: #{tpu_custom_call.1} parent=11 // pred_region
          %s674 = ssub.s32 32, 32
          %675 = vsyncadd [#allocation18], %s674
          %s677 = sshll.u32 [#allocation19], 4
          %s678 = int_to_ptr.vmem [resolvable:$true] %s677
          %680 = dma.hbm_to_vmem [thread:$0]  %s10, 32, %s678, [#allocation18]
        $region48: #{tpu_custom_call.1} parent=11 // pred_fallthru
          _
        // Predicated region
        $region49: #{tpu_custom_call.1} parent=11 // pred_check
          %p681 = pneg %p311
        $region50: #{tpu_custom_call.1} parent=11 // pred_check_branch
          %683 = sbr.rel (%p681) target = $region52
        $region51: #{tpu_custom_call.1} parent=11 // pred_region
          %s685 = ssub.s32 2048, 2048
          %686 = vsyncadd [#allocation21], %s685
          %s687 = sshll.u32 [#allocation20], 4
          %s688 = int_to_ptr.vmem [resolvable:$true] %s687
          %693 = dma.hbm_to_vmem [thread:$0]  %s11, 2048, %s688, [#allocation21], 128, 128, 8
        $region52: #{tpu_custom_call.1} parent=11 // pred_fallthru
          _
        // Predicated region
        $region53: #{tpu_custom_call.1} parent=11 // pred_check
          %p694 = pneg %p332
        $region54: #{tpu_custom_call.1} parent=11 // pred_check_branch
          %696 = sbr.rel (%p694) target = $region56
        $region55: #{tpu_custom_call.1} parent=11 // pred_region
          %s698 = ssub.s32 32, 32
          %699 = vsyncadd [#allocation21], %s698
          %s701 = sshll.u32 [#allocation22], 4
          %s702 = int_to_ptr.vmem [resolvable:$true] %s701
          %704 = dma.hbm_to_vmem [thread:$0]  %s12, 32, %s702, [#allocation21]
        $region56: #{tpu_custom_call.1} parent=11 // pred_fallthru
          _
        // Predicated region
        $region57: #{tpu_custom_call.1} parent=11 // pred_check
          %p705 = pneg %p353
        $region58: #{tpu_custom_call.1} parent=11 // pred_check_branch
          %707 = sbr.rel (%p705) target = $region60
        $region59: #{tpu_custom_call.1} parent=11 // pred_region
          %s709 = ssub.s32 4096, 4096
          %710 = vsyncadd [#allocation24], %s709
          %s711 = sshll.u32 [#allocation23], 4
          %s712 = int_to_ptr.vmem [resolvable:$true] %s711
          %717 = dma.hbm_to_vmem [thread:$0]  %s13, 4096, %s712, [#allocation24], 128, 128, 8
        $region60: #{tpu_custom_call.1} parent=11 // pred_fallthru
          _
        // Predicated region
        $region61: #{tpu_custom_call.1} parent=11 // pred_check
          %p718 = pneg %p374
        $region62: #{tpu_custom_call.1} parent=11 // pred_check_branch
          %720 = sbr.rel (%p718) target = $region64
        $region63: #{tpu_custom_call.1} parent=11 // pred_region
          %s722 = ssub.s32 32, 32
          %723 = vsyncadd [#allocation24], %s722
          %s725 = sshll.u32 [#allocation25], 4
          %s726 = int_to_ptr.vmem [resolvable:$true] %s725
          %728 = dma.hbm_to_vmem [thread:$0]  %s14, 32, %s726, [#allocation24]
        $region64: #{tpu_custom_call.1} parent=11 // pred_fallthru
          _
        // Predicated region
        $region65: #{tpu_custom_call.1} parent=11 // pred_check
          %p729 = pneg %p395
        $region66: #{tpu_custom_call.1} parent=11 // pred_check_branch
          %731 = sbr.rel (%p729) target = $region68
        $region67: #{tpu_custom_call.1} parent=11 // pred_region
          %s733 = ssub.s32 4096, 4096
          %734 = vsyncadd [#allocation27], %s733
          %s735 = sshll.u32 [#allocation26], 4
          %s736 = int_to_ptr.vmem [resolvable:$true] %s735
          %741 = dma.hbm_to_vmem [thread:$0]  %s15, 4096, %s736, [#allocation27], 128, 128, 8
        $region68: #{tpu_custom_call.1} parent=11 // pred_fallthru
          _
        // Predicated region
        $region69: #{tpu_custom_call.1} parent=11 // pred_check
          %p742 = pneg %p416
        $region70: #{tpu_custom_call.1} parent=11 // pred_check_branch
          %744 = sbr.rel (%p742) target = $region72
        $region71: #{tpu_custom_call.1} parent=11 // pred_region
          %s746 = ssub.s32 32, 32
          %747 = vsyncadd [#allocation27], %s746
          %s749 = sshll.u32 [#allocation28], 4
          %s750 = int_to_ptr.vmem [resolvable:$true] %s749
          %752 = dma.hbm_to_vmem [thread:$0]  %s16, 32, %s750, [#allocation27]
        $region72: #{tpu_custom_call.1} parent=11 // pred_fallthru
          _
        // Predicated region
        $region73: #{tpu_custom_call.1} parent=11 // pred_check
          %p753 = pneg %p437
        $region74: #{tpu_custom_call.1} parent=11 // pred_check_branch
          %755 = sbr.rel (%p753) target = $region76
        $region75: #{tpu_custom_call.1} parent=11 // pred_region
          _
        $region76: #{tpu_custom_call.1} parent=11 // pred_fallthru
          _
        // Predicated region
        $region77: #{tpu_custom_call.1} parent=11 // pred_check
          %p756 = pneg %p458
        $region78: #{tpu_custom_call.1} parent=11 // pred_check_branch
          %758 = sbr.rel (%p756) target = $region80
        $region79: #{tpu_custom_call.1} parent=11 // pred_region
          %s760 = ssub.s32 2048, 2048
          %761 = vsyncadd [#allocation30], %s760
          %s762 = sshll.u32 [#allocation29], 4
          %s763 = int_to_ptr.vmem [resolvable:$true] %s762
          %768 = dma.hbm_to_vmem [thread:$0]  %s18, 2048, %s763, [#allocation30], 64, 64, 4
        $region80: #{tpu_custom_call.1} parent=11 // pred_fallthru
          _
        // Predicated region
        $region81: #{tpu_custom_call.1} parent=11 // pred_check
          %p769 = pneg %p479
        $region82: #{tpu_custom_call.1} parent=11 // pred_check_branch
          %771 = sbr.rel (%p769) target = $region84
        $region83: #{tpu_custom_call.1} parent=11 // pred_region
          _
        $region84: #{tpu_custom_call.1} parent=11 // pred_fallthru
          _
      $region12: #{tpu_custom_call.1} parent=5 // pred_fallthru
        _
      %p772 = scmp.lt.s32.totalorder %s49, 2
      // Predicated region
      $region85: #{tpu_custom_call.1} parent=5 // pred_check
        %p773 = pneg %p772
      $region86: #{tpu_custom_call.1} parent=5 // pred_check_branch
        %775 = sbr.rel (%p773) target = $region88
      $region87: #{tpu_custom_call.1} parent=5 // pred_region
        // Predicated region
        $region89: #{tpu_custom_call.1} parent=87 // pred_check
          %p776 = pneg %p69
        $region90: #{tpu_custom_call.1} parent=87 // pred_check_branch
          %778 = sbr.rel (%p776) target = $region92
        $region91: #{tpu_custom_call.1} parent=87 // pred_region
          %s779 = sand.u32 %s59, 1
          %s780 = scalar_lea.sflag [#allocation3], %s779
          %s781 = sand.u32 %s59, 1
          %s782 = smul.addr %s781, 8
          %s783 = scalar_lea.vmem [#allocation2], %s782
          %s785 = ssub.s32 128, 128
          %786 = vsyncadd %s780, %s785
          %s787 = smul.addr %s49, 128
          %s788 = scalar_lea.hbm %s0, %s787
          %s790 = sshll.u32 %s783, 4
          %s791 = int_to_ptr.vmem [resolvable:$true] %s790
          %793 = dma.hbm_to_vmem [thread:$0]  %s788, 128, %s791, %s780
        $region92: #{tpu_custom_call.1} parent=87 // pred_fallthru
          _
        // Predicated region
        $region93: #{tpu_custom_call.1} parent=87 // pred_check
          %p794 = pneg %p95
        $region94: #{tpu_custom_call.1} parent=87 // pred_check_branch
          %796 = sbr.rel (%p794) target = $region96
        $region95: #{tpu_custom_call.1} parent=87 // pred_region
          %s797 = sand.u32 %s49, 1
          %s798 = scalar_lea.sflag [#allocation6], %s797
          %s799 = sand.u32 %s85, 1
          %s800 = smul.addr %s799, 8
          %s801 = scalar_lea.vmem [#allocation5], %s800
          %s803 = ssub.s32 128, 128
          %804 = vsyncadd %s798, %s803
          %s805 = smul.addr %s49, 128
          %s806 = scalar_lea.hbm %s1, %s805
          %s808 = sshll.u32 %s801, 4
          %s809 = int_to_ptr.vmem [resolvable:$true] %s808
          %811 = dma.hbm_to_vmem [thread:$0]  %s806, 128, %s809, %s798
        $region96: #{tpu_custom_call.1} parent=87 // pred_fallthru
          _
      $region88: #{tpu_custom_call.1} parent=5 // pred_fallthru
        _
      %p812 = scmp.le.s32.totalorder 1, %s49
      %p813 = scmp.lt.s32.totalorder %s49, 3
      %p814 = pnand %p812, %p813
      %p815 = pneg %p814
      // Predicated region
      $region97: #{tpu_custom_call.1} parent=5 // pred_check
        _
      $region98: #{tpu_custom_call.1} parent=5 // pred_check_branch
        %817 = sbr.rel (%p814) target = $region100
      $region99: #{tpu_custom_call.1} parent=5 // pred_region
        %s818 = ssub.s32 %s49, 1
        %s819 = sand.u32 %s62, 1
        %s820 = scalar_lea.sflag [#allocation3], %s819
        %s821 = sand.u32 %s62, 1
        %s822 = smul.addr %s821, 8
        %s823 = scalar_lea.vmem [#allocation2], %s822
        // Predicated region
        $region101: #{tpu_custom_call.1} parent=99 // pred_check
          %p824 = pneg %p75
        $region102: #{tpu_custom_call.1} parent=99 // pred_check_branch
          %826 = sbr.rel (%p824) target = $region104
        $region103: #{tpu_custom_call.1} parent=99 // pred_region
          %827 = dma.done %s820, 128
        $region104: #{tpu_custom_call.1} parent=99 // pred_fallthru
          _
        %s828 = sand.u32 %s54, 1
        %s829 = scalar_lea.sflag [#allocation6], %s828
        %s830 = sand.u32 %s88, 1
        %s831 = smul.addr %s830, 8
        %s832 = scalar_lea.vmem [#allocation5], %s831
        // Predicated region
        $region105: #{tpu_custom_call.1} parent=99 // pred_check
          %p833 = pneg %p101
        $region106: #{tpu_custom_call.1} parent=99 // pred_check_branch
          %835 = sbr.rel (%p833) target = $region108
        $region107: #{tpu_custom_call.1} parent=99 // pred_region
          %836 = dma.done %s829, 128
        $region108: #{tpu_custom_call.1} parent=99 // pred_fallthru
          _
        // Predicated region
        $region109: #{tpu_custom_call.1} parent=99 // pred_check
          %p837 = pneg %p122
        $region110: #{tpu_custom_call.1} parent=99 // pred_check_branch
          %839 = sbr.rel (%p837) target = $region112
        $region111: #{tpu_custom_call.1} parent=99 // pred_region
          %840 = dma.done [#allocation6], 2048
        $region112: #{tpu_custom_call.1} parent=99 // pred_fallthru
          _
        // Predicated region
        $region113: #{tpu_custom_call.1} parent=99 // pred_check
          %p841 = pneg %p143
        $region114: #{tpu_custom_call.1} parent=99 // pred_check_branch
          %843 = sbr.rel (%p841) target = $region116
        $region115: #{tpu_custom_call.1} parent=99 // pred_region
          %844 = dma.done [#allocation9], 32
        $region116: #{tpu_custom_call.1} parent=99 // pred_fallthru
          _
        // Predicated region
        $region117: #{tpu_custom_call.1} parent=99 // pred_check
          %p845 = pneg %p164
        $region118: #{tpu_custom_call.1} parent=99 // pred_check_branch
          %847 = sbr.rel (%p845) target = $region120
        $region119: #{tpu_custom_call.1} parent=99 // pred_region
          %848 = dma.done [#allocation9], 4096
        $region120: #{tpu_custom_call.1} parent=99 // pred_fallthru
          _
        // Predicated region
        $region121: #{tpu_custom_call.1} parent=99 // pred_check
          %p849 = pneg %p185
        $region122: #{tpu_custom_call.1} parent=99 // pred_check_branch
          %851 = sbr.rel (%p849) target = $region124
        $region123: #{tpu_custom_call.1} parent=99 // pred_region
          %852 = dma.done [#allocation12], 32
        $region124: #{tpu_custom_call.1} parent=99 // pred_fallthru
          _
        // Predicated region
        $region125: #{tpu_custom_call.1} parent=99 // pred_check
          %p853 = pneg %p206
        $region126: #{tpu_custom_call.1} parent=99 // pred_check_branch
          %855 = sbr.rel (%p853) target = $region128
        $region127: #{tpu_custom_call.1} parent=99 // pred_region
          %856 = dma.done [#allocation12], 4096
        $region128: #{tpu_custom_call.1} parent=99 // pred_fallthru
          _
        // Predicated region
        $region129: #{tpu_custom_call.1} parent=99 // pred_check
          %p857 = pneg %p227
        $region130: #{tpu_custom_call.1} parent=99 // pred_check_branch
          %859 = sbr.rel (%p857) target = $region132
        $region131: #{tpu_custom_call.1} parent=99 // pred_region
          %860 = dma.done [#allocation15], 32
        $region132: #{tpu_custom_call.1} parent=99 // pred_fallthru
          _
        // Predicated region
        $region133: #{tpu_custom_call.1} parent=99 // pred_check
          %p861 = pneg %p248
        $region134: #{tpu_custom_call.1} parent=99 // pred_check_branch
          %863 = sbr.rel (%p861) target = $region136
        $region135: #{tpu_custom_call.1} parent=99 // pred_region
          %864 = dma.done [#allocation15], 2048
        $region136: #{tpu_custom_call.1} parent=99 // pred_fallthru
          _
        // Predicated region
        $region137: #{tpu_custom_call.1} parent=99 // pred_check
          %p865 = pneg %p269
        $region138: #{tpu_custom_call.1} parent=99 // pred_check_branch
          %867 = sbr.rel (%p865) target = $region140
        $region139: #{tpu_custom_call.1} parent=99 // pred_region
          %868 = dma.done [#allocation18], 4096
        $region140: #{tpu_custom_call.1} parent=99 // pred_fallthru
          _
        // Predicated region
        $region141: #{tpu_custom_call.1} parent=99 // pred_check
          %p869 = pneg %p290
        $region142: #{tpu_custom_call.1} parent=99 // pred_check_branch
          %871 = sbr.rel (%p869) target = $region144
        $region143: #{tpu_custom_call.1} parent=99 // pred_region
          %872 = dma.done [#allocation18], 32
        $region144: #{tpu_custom_call.1} parent=99 // pred_fallthru
          _
        // Predicated region
        $region145: #{tpu_custom_call.1} parent=99 // pred_check
          %p873 = pneg %p311
        $region146: #{tpu_custom_call.1} parent=99 // pred_check_branch
          %875 = sbr.rel (%p873) target = $region148
        $region147: #{tpu_custom_call.1} parent=99 // pred_region
          %876 = dma.done [#allocation21], 2048
        $region148: #{tpu_custom_call.1} parent=99 // pred_fallthru
          _
        // Predicated region
        $region149: #{tpu_custom_call.1} parent=99 // pred_check
          %p877 = pneg %p332
        $region150: #{tpu_custom_call.1} parent=99 // pred_check_branch
          %879 = sbr.rel (%p877) target = $region152
        $region151: #{tpu_custom_call.1} parent=99 // pred_region
          %880 = dma.done [#allocation21], 32
        $region152: #{tpu_custom_call.1} parent=99 // pred_fallthru
          _
        // Predicated region
        $region153: #{tpu_custom_call.1} parent=99 // pred_check
          %p881 = pneg %p353
        $region154: #{tpu_custom_call.1} parent=99 // pred_check_branch
          %883 = sbr.rel (%p881) target = $region156
        $region155: #{tpu_custom_call.1} parent=99 // pred_region
          %884 = dma.done [#allocation24], 4096
        $region156: #{tpu_custom_call.1} parent=99 // pred_fallthru
          _
        // Predicated region
        $region157: #{tpu_custom_call.1} parent=99 // pred_check
          %p885 = pneg %p374
        $region158: #{tpu_custom_call.1} parent=99 // pred_check_branch
          %887 = sbr.rel (%p885) target = $region160
        $region159: #{tpu_custom_call.1} parent=99 // pred_region
          %888 = dma.done [#allocation24], 32
        $region160: #{tpu_custom_call.1} parent=99 // pred_fallthru
          _
        // Predicated region
        $region161: #{tpu_custom_call.1} parent=99 // pred_check
          %p889 = pneg %p395
        $region162: #{tpu_custom_call.1} parent=99 // pred_check_branch
          %891 = sbr.rel (%p889) target = $region164
        $region163: #{tpu_custom_call.1} parent=99 // pred_region
          %892 = dma.done [#allocation27], 4096
        $region164: #{tpu_custom_call.1} parent=99 // pred_fallthru
          _
        // Predicated region
        $region165: #{tpu_custom_call.1} parent=99 // pred_check
          %p893 = pneg %p416
        $region166: #{tpu_custom_call.1} parent=99 // pred_check_branch
          %895 = sbr.rel (%p893) target = $region168
        $region167: #{tpu_custom_call.1} parent=99 // pred_region
          %896 = dma.done [#allocation27], 32
        $region168: #{tpu_custom_call.1} parent=99 // pred_fallthru
          _
        // Predicated region
        $region169: #{tpu_custom_call.1} parent=99 // pred_check
          %p897 = pneg %p458
        $region170: #{tpu_custom_call.1} parent=99 // pred_check_branch
          %899 = sbr.rel (%p897) target = $region172
        $region171: #{tpu_custom_call.1} parent=99 // pred_region
          %900 = dma.done [#allocation30], 2048
        $region172: #{tpu_custom_call.1} parent=99 // pred_fallthru
          _
        %s901 = sand.u32 %s62, 1
        %s902 = scalar_lea.sflag [#allocation3], %s901
        %s903 = sand.u32 %s62, 1
        %s904 = smul.addr %s903, 8
        %s905 = scalar_lea.vmem [#allocation2], %s904
        %p906 = pneg %p75
        %p907 = pneg %p72
        %s908 = sand.u32 %s54, 1
        %s909 = scalar_lea.sflag [#allocation6], %s908
        %s910 = sand.u32 %s88, 1
        %s911 = smul.addr %s910, 8
        %s912 = scalar_lea.vmem [#allocation5], %s911
        %p913 = pneg %p101
        %p914 = pneg %p98
        %p915 = pneg %p122
        %p916 = pneg %p119
        %p917 = pneg %p143
        %p918 = pneg %p140
        %p919 = pneg %p164
        %p920 = pneg %p161
        %p921 = pneg %p185
        %p922 = pneg %p182
        %p923 = pneg %p206
        %p924 = pneg %p203
        %p925 = pneg %p227
        %p926 = pneg %p224
        %p927 = pneg %p248
        %p928 = pneg %p245
        %p929 = pneg %p269
        %p930 = pneg %p266
        %p931 = pneg %p290
        %p932 = pneg %p287
        %p933 = pneg %p311
        %p934 = pneg %p308
        %p935 = pneg %p332
        %p936 = pneg %p329
        %p937 = pneg %p353
        %p938 = pneg %p350
        %p939 = pneg %p374
        %p940 = pneg %p371
        %p941 = pneg %p395
        %p942 = pneg %p392
        %p943 = pneg %p416
        %p944 = pneg %p413
        %p945 = pneg %p437
        %p946 = pneg %p434
        %p947 = pneg %p458
        %p948 = pneg %p455
        %p949 = pneg %p479
        %p950 = pneg %p476
        %p951 = pneg %p505
        %p952 = pneg %p502
        %s953 = sand.u32 %s492, 1
        %s954 = scalar_lea.sflag [#allocation4], %s953
        %s955 = sand.u32 %s492, 1
        %s956 = smul.addr %s955, 8
        %s957 = scalar_lea.vmem [#allocation31], %s956
        %p958 = pneg %p531
        %p959 = pneg %p528
        %s960 = sand.u32 %s54, 1
        %s961 = scalar_lea.sflag [#allocation33], %s960
        %s962 = sand.u32 %s518, 1
        %s963 = smul.addr %s962, 8
        %s964 = scalar_lea.vmem [#allocation32], %s963
        %p965 = pneg %p557
        %p966 = pneg %p554
        %s967 = sand.u32 %s54, 1
        %s968 = scalar_lea.sflag [#allocation33], %s967
        %s969 = sand.u32 %s544, 1
        %s970 = smul.addr %s969, 8
        %s971 = scalar_lea.vmem [#allocation34], %s970
        %v973 = vld [vmem:[%s823] sm:$0xff]
        %v974 = vpack.c.bf16 %v973, %v973
        %v975 = vld [vmem:[#allocation7] sm:$0xff]
        %v976 = vld [vmem:[#allocation7 + $0x8] sm:$0xff]
        %v977 = vld [vmem:[#allocation7 + $0x10] sm:$0xff]
        %v978 = vld [vmem:[#allocation7 + $0x18] sm:$0xff]
        %v979 = vld [vmem:[#allocation7 + $0x20] sm:$0xff]
        %v980 = vld [vmem:[#allocation7 + $0x28] sm:$0xff]
        %v981 = vld [vmem:[#allocation7 + $0x30] sm:$0xff]
        %v982 = vld [vmem:[#allocation7 + $0x38] sm:$0xff]
        %v983 = vld [vmem:[#allocation7 + $0x40] sm:$0xff]
        %v984 = vld [vmem:[#allocation7 + $0x48] sm:$0xff]
        %v985 = vld [vmem:[#allocation7 + $0x50] sm:$0xff]
        %v986 = vld [vmem:[#allocation7 + $0x58] sm:$0xff]
        %v987 = vld [vmem:[#allocation7 + $0x60] sm:$0xff]
        %v988 = vld [vmem:[#allocation7 + $0x68] sm:$0xff]
        %v989 = vld [vmem:[#allocation7 + $0x70] sm:$0xff]
        %v990 = vld [vmem:[#allocation7 + $0x78] sm:$0xff]
        %v991 = vld [vmem:[#allocation8] sm:$0x3]
        %v993 = vlaneseq
        %v994 = vshrl.u32 %v993, 7
        %v995 = vsub.s32 0, %v994
        %v996 = vrot.slane %v991, %v995
        %v997 = vlaneseq
        %v998 = vshrl.u32 %v997, 7
        %v999 = vsub.s32 1, %v998
        %v1000 = vrot.slane %v991, %v999
        %v1019 = vunpack.c.l.b16 %v975
        %v1020 = vunpack.c.h.b16 %v975
        %v1021 = vunpack.c.l.b16 %v976
        %v1022 = vunpack.c.h.b16 %v976
        %v1023 = vunpack.c.l.b16 %v977
        %v1024 = vunpack.c.h.b16 %v977
        %v1025 = vunpack.c.l.b16 %v978
        %v1026 = vunpack.c.h.b16 %v978
        %v1027 = vunpack.c.l.b16 %v979
        %v1028 = vunpack.c.h.b16 %v979
        %v1029 = vunpack.c.l.b16 %v980
        %v1030 = vunpack.c.h.b16 %v980
        %v1031 = vunpack.c.l.b16 %v981
        %v1032 = vunpack.c.h.b16 %v981
        %v1033 = vunpack.c.l.b16 %v982
        %v1034 = vunpack.c.h.b16 %v982
        %v1035 = vunpack.c.l.b16 %v983
        %v1036 = vunpack.c.h.b16 %v983
        %v1037 = vunpack.c.l.b16 %v984
        %v1038 = vunpack.c.h.b16 %v984
        %v1039 = vunpack.c.l.b16 %v985
        %v1040 = vunpack.c.h.b16 %v985
        %v1041 = vunpack.c.l.b16 %v986
        %v1042 = vunpack.c.h.b16 %v986
        %v1043 = vunpack.c.l.b16 %v987
        %v1044 = vunpack.c.h.b16 %v987
        %v1045 = vunpack.c.l.b16 %v988
        %v1046 = vunpack.c.h.b16 %v988
        %v1047 = vunpack.c.l.b16 %v989
        %v1048 = vunpack.c.h.b16 %v989
        %v1049 = vunpack.c.l.b16 %v990
        %v1050 = vunpack.c.h.b16 %v990
        %v1051 = vpack.c.b16 %v1021, %v1019
        %v1052 = vpack.c.b16 %v1022, %v1020
        %v1053 = vpack.c.b16 %v1025, %v1023
        %v1054 = vpack.c.b16 %v1026, %v1024
        %v1055 = vpack.c.b16 %v1029, %v1027
        %v1056 = vpack.c.b16 %v1030, %v1028
        %v1057 = vpack.c.b16 %v1033, %v1031
        %v1058 = vpack.c.b16 %v1034, %v1032
        %v1059 = vpack.c.b16 %v1037, %v1035
        %v1060 = vpack.c.b16 %v1038, %v1036
        %v1061 = vpack.c.b16 %v1041, %v1039
        %v1062 = vpack.c.b16 %v1042, %v1040
        %v1063 = vpack.c.b16 %v1045, %v1043
        %v1064 = vpack.c.b16 %v1046, %v1044
        %v1065 = vpack.c.b16 %v1049, %v1047
        %v1066 = vpack.c.b16 %v1050, %v1048
        %1083 = vmatprep.subr.bf16.mxu0 %v1052
        %1084 = vmatpush1.bf16.msra.mxu0 %v1051
        %1085 = vmatprep.subr.bf16.mxu0 %v1054
        %1086 = vmatpush1.bf16.msra.mxu0 %v1053
        %1087 = vmatprep.subr.bf16.mxu0 %v1056
        %1088 = vmatpush1.bf16.msra.mxu0 %v1055
        %1089 = vmatprep.subr.bf16.mxu0 %v1058
        %1090 = vmatpush1.bf16.msra.mxu0 %v1057
        %1091 = vmatprep.subr.bf16.mxu0 %v1060
        %1092 = vmatpush1.bf16.msra.mxu0 %v1059
        %1093 = vmatprep.subr.bf16.mxu0 %v1062
        %1094 = vmatpush1.bf16.msra.mxu0 %v1061
        %1095 = vmatprep.subr.bf16.mxu0 %v1064
        %1096 = vmatpush1.bf16.msra.mxu0 %v1063
        %1097 = vmatprep.subr.bf16.mxu0 %v1066
        %1098 = vmatpush1.bf16.msra.mxu0 %v1065
        %1099 = vmatprep.subr.bf16.mxu0 0
        %1100 = vmatpush1.bf16.msra.mxu0 0
        %1101 = vmatprep.subr.bf16.mxu0 0
        %1102 = vmatpush1.bf16.msra.mxu0 0
        %1103 = vmatprep.subr.bf16.mxu0 0
        %1104 = vmatpush1.bf16.msra.mxu0 0
        %1105 = vmatprep.subr.bf16.mxu0 0
        %1106 = vmatpush1.bf16.msra.mxu0 0
        %1107 = vmatprep.subr.bf16.mxu0 0
        %1108 = vmatpush1.bf16.msra.mxu0 0
        %1109 = vmatprep.subr.bf16.mxu0 0
        %1110 = vmatpush1.bf16.msra.mxu0 0
        %1111 = vmatprep.subr.bf16.mxu0 0
        %1112 = vmatpush1.bf16.msra.mxu0 0
        %1113 = vmatprep.subr.bf16.mxu0 0
        %1114 = vmatpush1.bf16.msra.mxu0 0
        %1115 = vmatprep.mubr.bf16.mxu0 0
        %1116 = vmatmul.mubr.bf16.gmra.mrb[0].mxu0 %v974
        %v1117 = vpop.f32.mrb[0].mxu0
        %v1118 = vadd.f32 %v996, %v1117
        %v1119 = vpop.f32.mrb[0].mxu0
        %v1120 = vadd.f32 %v1000, %v1119
        %v1121 = vpop.f32.mrb[0].mxu0
        %v1122 = vpop.f32.mrb[0].mxu0
        %1123 = vdwg.mxu0
        %v1124 = vmax.f32 %v1118, 0.0
        %v1125 = vmax.f32 %v1120, 0.0
        %v1126 = vpack.c.bf16 %v1124, %v1124
        %v1127 = vpack.c.bf16 %v1125, %v1125
        %v1128 = vld [vmem:[#allocation10] sm:$0xff]
        %v1129 = vld [vmem:[#allocation10 + $0x8] sm:$0xff]
        %v1130 = vld [vmem:[#allocation10 + $0x10] sm:$0xff]
        %v1131 = vld [vmem:[#allocation10 + $0x18] sm:$0xff]
        %v1132 = vld [vmem:[#allocation10 + $0x20] sm:$0xff]
        %v1133 = vld [vmem:[#allocation10 + $0x28] sm:$0xff]
        %v1134 = vld [vmem:[#allocation10 + $0x30] sm:$0xff]
        %v1135 = vld [vmem:[#allocation10 + $0x38] sm:$0xff]
        %v1136 = vld [vmem:[#allocation10 + $0x40] sm:$0xff]
        %v1137 = vld [vmem:[#allocation10 + $0x48] sm:$0xff]
        %v1138 = vld [vmem:[#allocation10 + $0x50] sm:$0xff]
        %v1139 = vld [vmem:[#allocation10 + $0x58] sm:$0xff]
        %v1140 = vld [vmem:[#allocation10 + $0x60] sm:$0xff]
        %v1141 = vld [vmem:[#allocation10 + $0x68] sm:$0xff]
        %v1142 = vld [vmem:[#allocation10 + $0x70] sm:$0xff]
        %v1143 = vld [vmem:[#allocation10 + $0x78] sm:$0xff]
        %v1144 = vld [vmem:[#allocation10 + $0x80] sm:$0xff]
        %v1145 = vld [vmem:[#allocation10 + $0x88] sm:$0xff]
        %v1146 = vld [vmem:[#allocation10 + $0x90] sm:$0xff]
        %v1147 = vld [vmem:[#allocation10 + $0x98] sm:$0xff]
        %v1148 = vld [vmem:[#allocation10 + $0xa0] sm:$0xff]
        %v1149 = vld [vmem:[#allocation10 + $0xa8] sm:$0xff]
        %v1150 = vld [vmem:[#allocation10 + $0xb0] sm:$0xff]
        %v1151 = vld [vmem:[#allocation10 + $0xb8] sm:$0xff]
        %v1152 = vld [vmem:[#allocation10 + $0xc0] sm:$0xff]
        %v1153 = vld [vmem:[#allocation10 + $0xc8] sm:$0xff]
        %v1154 = vld [vmem:[#allocation10 + $0xd0] sm:$0xff]
        %v1155 = vld [vmem:[#allocation10 + $0xd8] sm:$0xff]
        %v1156 = vld [vmem:[#allocation10 + $0xe0] sm:$0xff]
        %v1157 = vld [vmem:[#allocation10 + $0xe8] sm:$0xff]
        %v1158 = vld [vmem:[#allocation10 + $0xf0] sm:$0xff]
        %v1159 = vld [vmem:[#allocation10 + $0xf8] sm:$0xff]
        %v1160 = vld [vmem:[#allocation11] sm:$0x3]
        %v1162 = vlaneseq
        %v1163 = vshrl.u32 %v1162, 7
        %v1164 = vsub.s32 0, %v1163
        %v1165 = vrot.slane %v1160, %v1164
        %v1166 = vlaneseq
        %v1167 = vshrl.u32 %v1166, 7
        %v1168 = vsub.s32 1, %v1167
        %v1169 = vrot.slane %v1160, %v1168
        %v1204 = vunpack.c.l.b16 %v1128
        %v1205 = vunpack.c.h.b16 %v1128
        %v1206 = vunpack.c.l.b16 %v1129
        %v1207 = vunpack.c.h.b16 %v1129
        %v1208 = vunpack.c.l.b16 %v1130
        %v1209 = vunpack.c.h.b16 %v1130
        %v1210 = vunpack.c.l.b16 %v1131
        %v1211 = vunpack.c.h.b16 %v1131
        %v1212 = vunpack.c.l.b16 %v1132
        %v1213 = vunpack.c.h.b16 %v1132
        %v1214 = vunpack.c.l.b16 %v1133
        %v1215 = vunpack.c.h.b16 %v1133
        %v1216 = vunpack.c.l.b16 %v1134
        %v1217 = vunpack.c.h.b16 %v1134
        %v1218 = vunpack.c.l.b16 %v1135
        %v1219 = vunpack.c.h.b16 %v1135
        %v1220 = vunpack.c.l.b16 %v1136
        %v1221 = vunpack.c.h.b16 %v1136
        %v1222 = vunpack.c.l.b16 %v1137
        %v1223 = vunpack.c.h.b16 %v1137
        %v1224 = vunpack.c.l.b16 %v1138
        %v1225 = vunpack.c.h.b16 %v1138
        %v1226 = vunpack.c.l.b16 %v1139
        %v1227 = vunpack.c.h.b16 %v1139
        %v1228 = vunpack.c.l.b16 %v1140
        %v1229 = vunpack.c.h.b16 %v1140
        %v1230 = vunpack.c.l.b16 %v1141
        %v1231 = vunpack.c.h.b16 %v1141
        %v1232 = vunpack.c.l.b16 %v1142
        %v1233 = vunpack.c.h.b16 %v1142
        %v1234 = vunpack.c.l.b16 %v1143
        %v1235 = vunpack.c.h.b16 %v1143
        %v1236 = vunpack.c.l.b16 %v1144
        %v1237 = vunpack.c.h.b16 %v1144
        %v1238 = vunpack.c.l.b16 %v1145
        %v1239 = vunpack.c.h.b16 %v1145
        %v1240 = vunpack.c.l.b16 %v1146
        %v1241 = vunpack.c.h.b16 %v1146
        %v1242 = vunpack.c.l.b16 %v1147
        %v1243 = vunpack.c.h.b16 %v1147
        %v1244 = vunpack.c.l.b16 %v1148
        %v1245 = vunpack.c.h.b16 %v1148
        %v1246 = vunpack.c.l.b16 %v1149
        %v1247 = vunpack.c.h.b16 %v1149
        %v1248 = vunpack.c.l.b16 %v1150
        %v1249 = vunpack.c.h.b16 %v1150
        %v1250 = vunpack.c.l.b16 %v1151
        %v1251 = vunpack.c.h.b16 %v1151
        %v1252 = vunpack.c.l.b16 %v1152
        %v1253 = vunpack.c.h.b16 %v1152
        %v1254 = vunpack.c.l.b16 %v1153
        %v1255 = vunpack.c.h.b16 %v1153
        %v1256 = vunpack.c.l.b16 %v1154
        %v1257 = vunpack.c.h.b16 %v1154
        %v1258 = vunpack.c.l.b16 %v1155
        %v1259 = vunpack.c.h.b16 %v1155
        %v1260 = vunpack.c.l.b16 %v1156
        %v1261 = vunpack.c.h.b16 %v1156
        %v1262 = vunpack.c.l.b16 %v1157
        %v1263 = vunpack.c.h.b16 %v1157
        %v1264 = vunpack.c.l.b16 %v1158
        %v1265 = vunpack.c.h.b16 %v1158
        %v1266 = vunpack.c.l.b16 %v1159
        %v1267 = vunpack.c.h.b16 %v1159
        %v1268 = vpack.c.b16 %v1206, %v1204
        %v1269 = vpack.c.b16 %v1207, %v1205
        %v1270 = vpack.c.b16 %v1210, %v1208
        %v1271 = vpack.c.b16 %v1211, %v1209
        %v1272 = vpack.c.b16 %v1214, %v1212
        %v1273 = vpack.c.b16 %v1215, %v1213
        %v1274 = vpack.c.b16 %v1218, %v1216
        %v1275 = vpack.c.b16 %v1219, %v1217
        %v1276 = vpack.c.b16 %v1222, %v1220
        %v1277 = vpack.c.b16 %v1223, %v1221
        %v1278 = vpack.c.b16 %v1226, %v1224
        %v1279 = vpack.c.b16 %v1227, %v1225
        %v1280 = vpack.c.b16 %v1230, %v1228
        %v1281 = vpack.c.b16 %v1231, %v1229
        %v1282 = vpack.c.b16 %v1234, %v1232
        %v1283 = vpack.c.b16 %v1235, %v1233
        %v1284 = vpack.c.b16 %v1238, %v1236
        %v1285 = vpack.c.b16 %v1239, %v1237
        %v1286 = vpack.c.b16 %v1242, %v1240
        %v1287 = vpack.c.b16 %v1243, %v1241
        %v1288 = vpack.c.b16 %v1246, %v1244
        %v1289 = vpack.c.b16 %v1247, %v1245
        %v1290 = vpack.c.b16 %v1250, %v1248
        %v1291 = vpack.c.b16 %v1251, %v1249
        %v1292 = vpack.c.b16 %v1254, %v1252
        %v1293 = vpack.c.b16 %v1255, %v1253
        %v1294 = vpack.c.b16 %v1258, %v1256
        %v1295 = vpack.c.b16 %v1259, %v1257
        %v1296 = vpack.c.b16 %v1262, %v1260
        %v1297 = vpack.c.b16 %v1263, %v1261
        %v1298 = vpack.c.b16 %v1266, %v1264
        %v1299 = vpack.c.b16 %v1267, %v1265
        %1332 = vmatprep.subr.bf16.mxu0 %v1269
        %1333 = vmatpush1.bf16.msra.mxu0 %v1268
        %1334 = vmatprep.subr.bf16.mxu0 %v1271
        %1335 = vmatpush1.bf16.msra.mxu0 %v1270
        %1336 = vmatprep.subr.bf16.mxu0 %v1273
        %1337 = vmatpush1.bf16.msra.mxu0 %v1272
        %1338 = vmatprep.subr.bf16.mxu0 %v1275
        %1339 = vmatpush1.bf16.msra.mxu0 %v1274
        %1340 = vmatprep.subr.bf16.mxu0 %v1277
        %1341 = vmatpush1.bf16.msra.mxu0 %v1276
        %1342 = vmatprep.subr.bf16.mxu0 %v1279
        %1343 = vmatpush1.bf16.msra.mxu0 %v1278
        %1344 = vmatprep.subr.bf16.mxu0 %v1281
        %1345 = vmatpush1.bf16.msra.mxu0 %v1280
        %1346 = vmatprep.subr.bf16.mxu0 %v1283
        %1347 = vmatpush1.bf16.msra.mxu0 %v1282
        %1348 = vmatprep.subr.bf16.mxu0 %v1285
        %1349 = vmatpush1.bf16.msra.mxu0 %v1284
        %1350 = vmatprep.subr.bf16.mxu0 %v1287
        %1351 = vmatpush1.bf16.msra.mxu0 %v1286
        %1352 = vmatprep.subr.bf16.mxu0 %v1289
        %1353 = vmatpush1.bf16.msra.mxu0 %v1288
        %1354 = vmatprep.subr.bf16.mxu0 %v1291
        %1355 = vmatpush1.bf16.msra.mxu0 %v1290
        %1356 = vmatprep.subr.bf16.mxu0 %v1293
        %1357 = vmatpush1.bf16.msra.mxu0 %v1292
        %1358 = vmatprep.subr.bf16.mxu0 %v1295
        %1359 = vmatpush1.bf16.msra.mxu0 %v1294
        %1360 = vmatprep.subr.bf16.mxu0 %v1297
        %1361 = vmatpush1.bf16.msra.mxu0 %v1296
        %1362 = vmatprep.subr.bf16.mxu0 %v1299
        %1363 = vmatpush1.bf16.msra.mxu0 %v1298
        %1364 = vmatprep.mubr.bf16.mxu0 %v1127
        %1365 = vmatmul.mubr.bf16.gmra.mrb[0].mxu0 %v1126
        %v1366 = vpop.f32.mrb[0].mxu0
        %v1367 = vadd.f32 %v1165, %v1366
        %v1368 = vpop.f32.mrb[0].mxu0
        %v1369 = vadd.f32 %v1169, %v1368
        %v1370 = vpop.f32.mrb[0].mxu0
        %v1371 = vpop.f32.mrb[0].mxu0
        %1372 = vdwg.mxu0
        %v1373 = vmax.f32 %v1367, 0.0
        %v1374 = vmax.f32 %v1369, 0.0
        %v1375 = vpack.c.bf16 %v1373, %v1373
        %v1376 = vpack.c.bf16 %v1374, %v1374
        %v1377 = vld [vmem:[#allocation13] sm:$0xff]
        %v1378 = vld [vmem:[#allocation13 + $0x8] sm:$0xff]
        %v1379 = vld [vmem:[#allocation13 + $0x10] sm:$0xff]
        %v1380 = vld [vmem:[#allocation13 + $0x18] sm:$0xff]
        %v1381 = vld [vmem:[#allocation13 + $0x20] sm:$0xff]
        %v1382 = vld [vmem:[#allocation13 + $0x28] sm:$0xff]
        %v1383 = vld [vmem:[#allocation13 + $0x30] sm:$0xff]
        %v1384 = vld [vmem:[#allocation13 + $0x38] sm:$0xff]
        %v1385 = vld [vmem:[#allocation13 + $0x40] sm:$0xff]
        %v1386 = vld [vmem:[#allocation13 + $0x48] sm:$0xff]
        %v1387 = vld [vmem:[#allocation13 + $0x50] sm:$0xff]
        %v1388 = vld [vmem:[#allocation13 + $0x58] sm:$0xff]
        %v1389 = vld [vmem:[#allocation13 + $0x60] sm:$0xff]
        %v1390 = vld [vmem:[#allocation13 + $0x68] sm:$0xff]
        %v1391 = vld [vmem:[#allocation13 + $0x70] sm:$0xff]
        %v1392 = vld [vmem:[#allocation13 + $0x78] sm:$0xff]
        %v1393 = vld [vmem:[#allocation13 + $0x80] sm:$0xff]
        %v1394 = vld [vmem:[#allocation13 + $0x88] sm:$0xff]
        %v1395 = vld [vmem:[#allocation13 + $0x90] sm:$0xff]
        %v1396 = vld [vmem:[#allocation13 + $0x98] sm:$0xff]
        %v1397 = vld [vmem:[#allocation13 + $0xa0] sm:$0xff]
        %v1398 = vld [vmem:[#allocation13 + $0xa8] sm:$0xff]
        %v1399 = vld [vmem:[#allocation13 + $0xb0] sm:$0xff]
        %v1400 = vld [vmem:[#allocation13 + $0xb8] sm:$0xff]
        %v1401 = vld [vmem:[#allocation13 + $0xc0] sm:$0xff]
        %v1402 = vld [vmem:[#allocation13 + $0xc8] sm:$0xff]
        %v1403 = vld [vmem:[#allocation13 + $0xd0] sm:$0xff]
        %v1404 = vld [vmem:[#allocation13 + $0xd8] sm:$0xff]
        %v1405 = vld [vmem:[#allocation13 + $0xe0] sm:$0xff]
        %v1406 = vld [vmem:[#allocation13 + $0xe8] sm:$0xff]
        %v1407 = vld [vmem:[#allocation13 + $0xf0] sm:$0xff]
        %v1408 = vld [vmem:[#allocation13 + $0xf8] sm:$0xff]
        %v1409 = vld [vmem:[#allocation14] sm:$0x3]
        %v1411 = vlaneseq
        %v1412 = vshrl.u32 %v1411, 7
        %v1413 = vsub.s32 0, %v1412
        %v1414 = vrot.slane %v1409, %v1413
        %v1415 = vlaneseq
        %v1416 = vshrl.u32 %v1415, 7
        %v1417 = vsub.s32 1, %v1416
        %v1418 = vrot.slane %v1409, %v1417
        %v1453 = vunpack.c.l.b16 %v1377
        %v1454 = vunpack.c.h.b16 %v1377
        %v1455 = vunpack.c.l.b16 %v1378
        %v1456 = vunpack.c.h.b16 %v1378
        %v1457 = vunpack.c.l.b16 %v1379
        %v1458 = vunpack.c.h.b16 %v1379
        %v1459 = vunpack.c.l.b16 %v1380
        %v1460 = vunpack.c.h.b16 %v1380
        %v1461 = vunpack.c.l.b16 %v1381
        %v1462 = vunpack.c.h.b16 %v1381
        %v1463 = vunpack.c.l.b16 %v1382
        %v1464 = vunpack.c.h.b16 %v1382
        %v1465 = vunpack.c.l.b16 %v1383
        %v1466 = vunpack.c.h.b16 %v1383
        %v1467 = vunpack.c.l.b16 %v1384
        %v1468 = vunpack.c.h.b16 %v1384
        %v1469 = vunpack.c.l.b16 %v1385
        %v1470 = vunpack.c.h.b16 %v1385
        %v1471 = vunpack.c.l.b16 %v1386
        %v1472 = vunpack.c.h.b16 %v1386
        %v1473 = vunpack.c.l.b16 %v1387
        %v1474 = vunpack.c.h.b16 %v1387
        %v1475 = vunpack.c.l.b16 %v1388
        %v1476 = vunpack.c.h.b16 %v1388
        %v1477 = vunpack.c.l.b16 %v1389
        %v1478 = vunpack.c.h.b16 %v1389
        %v1479 = vunpack.c.l.b16 %v1390
        %v1480 = vunpack.c.h.b16 %v1390
        %v1481 = vunpack.c.l.b16 %v1391
        %v1482 = vunpack.c.h.b16 %v1391
        %v1483 = vunpack.c.l.b16 %v1392
        %v1484 = vunpack.c.h.b16 %v1392
        %v1485 = vunpack.c.l.b16 %v1393
        %v1486 = vunpack.c.h.b16 %v1393
        %v1487 = vunpack.c.l.b16 %v1394
        %v1488 = vunpack.c.h.b16 %v1394
        %v1489 = vunpack.c.l.b16 %v1395
        %v1490 = vunpack.c.h.b16 %v1395
        %v1491 = vunpack.c.l.b16 %v1396
        %v1492 = vunpack.c.h.b16 %v1396
        %v1493 = vunpack.c.l.b16 %v1397
        %v1494 = vunpack.c.h.b16 %v1397
        %v1495 = vunpack.c.l.b16 %v1398
        %v1496 = vunpack.c.h.b16 %v1398
        %v1497 = vunpack.c.l.b16 %v1399
        %v1498 = vunpack.c.h.b16 %v1399
        %v1499 = vunpack.c.l.b16 %v1400
        %v1500 = vunpack.c.h.b16 %v1400
        %v1501 = vunpack.c.l.b16 %v1401
        %v1502 = vunpack.c.h.b16 %v1401
        %v1503 = vunpack.c.l.b16 %v1402
        %v1504 = vunpack.c.h.b16 %v1402
        %v1505 = vunpack.c.l.b16 %v1403
        %v1506 = vunpack.c.h.b16 %v1403
        %v1507 = vunpack.c.l.b16 %v1404
        %v1508 = vunpack.c.h.b16 %v1404
        %v1509 = vunpack.c.l.b16 %v1405
        %v1510 = vunpack.c.h.b16 %v1405
        %v1511 = vunpack.c.l.b16 %v1406
        %v1512 = vunpack.c.h.b16 %v1406
        %v1513 = vunpack.c.l.b16 %v1407
        %v1514 = vunpack.c.h.b16 %v1407
        %v1515 = vunpack.c.l.b16 %v1408
        %v1516 = vunpack.c.h.b16 %v1408
        %v1517 = vpack.c.b16 %v1455, %v1453
        %v1518 = vpack.c.b16 %v1456, %v1454
        %v1519 = vpack.c.b16 %v1459, %v1457
        %v1520 = vpack.c.b16 %v1460, %v1458
        %v1521 = vpack.c.b16 %v1463, %v1461
        %v1522 = vpack.c.b16 %v1464, %v1462
        %v1523 = vpack.c.b16 %v1467, %v1465
        %v1524 = vpack.c.b16 %v1468, %v1466
        %v1525 = vpack.c.b16 %v1471, %v1469
        %v1526 = vpack.c.b16 %v1472, %v1470
        %v1527 = vpack.c.b16 %v1475, %v1473
        %v1528 = vpack.c.b16 %v1476, %v1474
        %v1529 = vpack.c.b16 %v1479, %v1477
        %v1530 = vpack.c.b16 %v1480, %v1478
        %v1531 = vpack.c.b16 %v1483, %v1481
        %v1532 = vpack.c.b16 %v1484, %v1482
        %v1533 = vpack.c.b16 %v1487, %v1485
        %v1534 = vpack.c.b16 %v1488, %v1486
        %v1535 = vpack.c.b16 %v1491, %v1489
        %v1536 = vpack.c.b16 %v1492, %v1490
        %v1537 = vpack.c.b16 %v1495, %v1493
        %v1538 = vpack.c.b16 %v1496, %v1494
        %v1539 = vpack.c.b16 %v1499, %v1497
        %v1540 = vpack.c.b16 %v1500, %v1498
        %v1541 = vpack.c.b16 %v1503, %v1501
        %v1542 = vpack.c.b16 %v1504, %v1502
        %v1543 = vpack.c.b16 %v1507, %v1505
        %v1544 = vpack.c.b16 %v1508, %v1506
        %v1545 = vpack.c.b16 %v1511, %v1509
        %v1546 = vpack.c.b16 %v1512, %v1510
        %v1547 = vpack.c.b16 %v1515, %v1513
        %v1548 = vpack.c.b16 %v1516, %v1514
        %1581 = vmatprep.subr.bf16.mxu0 %v1518
        %1582 = vmatpush1.bf16.msra.mxu0 %v1517
        %1583 = vmatprep.subr.bf16.mxu0 %v1520
        %1584 = vmatpush1.bf16.msra.mxu0 %v1519
        %1585 = vmatprep.subr.bf16.mxu0 %v1522
        %1586 = vmatpush1.bf16.msra.mxu0 %v1521
        %1587 = vmatprep.subr.bf16.mxu0 %v1524
        %1588 = vmatpush1.bf16.msra.mxu0 %v1523
        %1589 = vmatprep.subr.bf16.mxu0 %v1526
        %1590 = vmatpush1.bf16.msra.mxu0 %v1525
        %1591 = vmatprep.subr.bf16.mxu0 %v1528
        %1592 = vmatpush1.bf16.msra.mxu0 %v1527
        %1593 = vmatprep.subr.bf16.mxu0 %v1530
        %1594 = vmatpush1.bf16.msra.mxu0 %v1529
        %1595 = vmatprep.subr.bf16.mxu0 %v1532
        %1596 = vmatpush1.bf16.msra.mxu0 %v1531
        %1597 = vmatprep.subr.bf16.mxu0 %v1534
        %1598 = vmatpush1.bf16.msra.mxu0 %v1533
        %1599 = vmatprep.subr.bf16.mxu0 %v1536
        %1600 = vmatpush1.bf16.msra.mxu0 %v1535
        %1601 = vmatprep.subr.bf16.mxu0 %v1538
        %1602 = vmatpush1.bf16.msra.mxu0 %v1537
        %1603 = vmatprep.subr.bf16.mxu0 %v1540
        %1604 = vmatpush1.bf16.msra.mxu0 %v1539
        %1605 = vmatprep.subr.bf16.mxu0 %v1542
        %1606 = vmatpush1.bf16.msra.mxu0 %v1541
        %1607 = vmatprep.subr.bf16.mxu0 %v1544
        %1608 = vmatpush1.bf16.msra.mxu0 %v1543
        %1609 = vmatprep.subr.bf16.mxu0 %v1546
        %1610 = vmatpush1.bf16.msra.mxu0 %v1545
        %1611 = vmatprep.subr.bf16.mxu0 %v1548
        %1612 = vmatpush1.bf16.msra.mxu0 %v1547
        %1613 = vmatprep.mubr.bf16.mxu0 %v1376
        %1614 = vmatmul.mubr.bf16.gmra.mrb[0].mxu0 %v1375
        %v1615 = vpop.f32.mrb[0].mxu0
        %v1616 = vadd.f32 %v1414, %v1615
        %v1617 = vpop.f32.mrb[0].mxu0
        %v1618 = vadd.f32 %v1418, %v1617
        %v1619 = vpop.f32.mrb[0].mxu0
        %v1620 = vpop.f32.mrb[0].mxu0
        %1621 = vdwg.mxu0
        %v1622 = vmax.f32 %v1616, 0.0
        %v1623 = vmax.f32 %v1618, 0.0
        %v1624 = vld [vmem:[#allocation16] sm:$0xff]
        %v1625 = vld [vmem:[#allocation16 + $0x8] sm:$0xff]
        %v1626 = vld [vmem:[#allocation16 + $0x10] sm:$0xff]
        %v1627 = vld [vmem:[#allocation16 + $0x18] sm:$0xff]
        %v1628 = vld [vmem:[#allocation16 + $0x20] sm:$0xff]
        %v1629 = vld [vmem:[#allocation16 + $0x28] sm:$0xff]
        %v1630 = vld [vmem:[#allocation16 + $0x30] sm:$0xff]
        %v1631 = vld [vmem:[#allocation16 + $0x38] sm:$0xff]
        %v1632 = vld [vmem:[#allocation16 + $0x40] sm:$0xff]
        %v1633 = vld [vmem:[#allocation16 + $0x48] sm:$0xff]
        %v1634 = vld [vmem:[#allocation16 + $0x50] sm:$0xff]
        %v1635 = vld [vmem:[#allocation16 + $0x58] sm:$0xff]
        %v1636 = vld [vmem:[#allocation16 + $0x60] sm:$0xff]
        %v1637 = vld [vmem:[#allocation16 + $0x68] sm:$0xff]
        %v1638 = vld [vmem:[#allocation16 + $0x70] sm:$0xff]
        %v1639 = vld [vmem:[#allocation16 + $0x78] sm:$0xff]
        %v1640 = vpack.c.bf16 %v1622, %v1622
        %v1641 = vpack.c.bf16 %v1623, %v1623
        %v1642 = vld [vmem:[#allocation17] sm:$0xff]
        %v1643 = vld [vmem:[#allocation17 + $0x8] sm:$0xff]
        %v1644 = vld [vmem:[#allocation17 + $0x10] sm:$0xff]
        %v1645 = vld [vmem:[#allocation17 + $0x18] sm:$0xff]
        %v1646 = vld [vmem:[#allocation17 + $0x20] sm:$0xff]
        %v1647 = vld [vmem:[#allocation17 + $0x28] sm:$0xff]
        %v1648 = vld [vmem:[#allocation17 + $0x30] sm:$0xff]
        %v1649 = vld [vmem:[#allocation17 + $0x38] sm:$0xff]
        %v1650 = vld [vmem:[#allocation17 + $0x40] sm:$0xff]
        %v1651 = vld [vmem:[#allocation17 + $0x48] sm:$0xff]
        %v1652 = vld [vmem:[#allocation17 + $0x50] sm:$0xff]
        %v1653 = vld [vmem:[#allocation17 + $0x58] sm:$0xff]
        %v1654 = vld [vmem:[#allocation17 + $0x60] sm:$0xff]
        %v1655 = vld [vmem:[#allocation17 + $0x68] sm:$0xff]
        %v1656 = vld [vmem:[#allocation17 + $0x70] sm:$0xff]
        %v1657 = vld [vmem:[#allocation17 + $0x78] sm:$0xff]
        %v1658 = vld [vmem:[#allocation17 + $0x80] sm:$0xff]
        %v1659 = vld [vmem:[#allocation17 + $0x88] sm:$0xff]
        %v1660 = vld [vmem:[#allocation17 + $0x90] sm:$0xff]
        %v1661 = vld [vmem:[#allocation17 + $0x98] sm:$0xff]
        %v1662 = vld [vmem:[#allocation17 + $0xa0] sm:$0xff]
        %v1663 = vld [vmem:[#allocation17 + $0xa8] sm:$0xff]
        %v1664 = vld [vmem:[#allocation17 + $0xb0] sm:$0xff]
        %v1665 = vld [vmem:[#allocation17 + $0xb8] sm:$0xff]
        %v1666 = vld [vmem:[#allocation17 + $0xc0] sm:$0xff]
        %v1667 = vld [vmem:[#allocation17 + $0xc8] sm:$0xff]
        %v1668 = vld [vmem:[#allocation17 + $0xd0] sm:$0xff]
        %v1669 = vld [vmem:[#allocation17 + $0xd8] sm:$0xff]
        %v1670 = vld [vmem:[#allocation17 + $0xe0] sm:$0xff]
        %v1671 = vld [vmem:[#allocation17 + $0xe8] sm:$0xff]
        %v1672 = vld [vmem:[#allocation17 + $0xf0] sm:$0xff]
        %v1673 = vld [vmem:[#allocation17 + $0xf8] sm:$0xff]
        %v1706 = vunpack.c.l.b16 %v1642
        %v1707 = vunpack.c.h.b16 %v1642
        %v1708 = vunpack.c.l.b16 %v1643
        %v1709 = vunpack.c.h.b16 %v1643
        %v1710 = vunpack.c.l.b16 %v1644
        %v1711 = vunpack.c.h.b16 %v1644
        %v1712 = vunpack.c.l.b16 %v1645
        %v1713 = vunpack.c.h.b16 %v1645
        %v1714 = vunpack.c.l.b16 %v1646
        %v1715 = vunpack.c.h.b16 %v1646
        %v1716 = vunpack.c.l.b16 %v1647
        %v1717 = vunpack.c.h.b16 %v1647
        %v1718 = vunpack.c.l.b16 %v1648
        %v1719 = vunpack.c.h.b16 %v1648
        %v1720 = vunpack.c.l.b16 %v1649
        %v1721 = vunpack.c.h.b16 %v1649
        %v1722 = vunpack.c.l.b16 %v1650
        %v1723 = vunpack.c.h.b16 %v1650
        %v1724 = vunpack.c.l.b16 %v1651
        %v1725 = vunpack.c.h.b16 %v1651
        %v1726 = vunpack.c.l.b16 %v1652
        %v1727 = vunpack.c.h.b16 %v1652
        %v1728 = vunpack.c.l.b16 %v1653
        %v1729 = vunpack.c.h.b16 %v1653
        %v1730 = vunpack.c.l.b16 %v1654
        %v1731 = vunpack.c.h.b16 %v1654
        %v1732 = vunpack.c.l.b16 %v1655
        %v1733 = vunpack.c.h.b16 %v1655
        %v1734 = vunpack.c.l.b16 %v1656
        %v1735 = vunpack.c.h.b16 %v1656
        %v1736 = vunpack.c.l.b16 %v1657
        %v1737 = vunpack.c.h.b16 %v1657
        %v1738 = vunpack.c.l.b16 %v1658
        %v1739 = vunpack.c.h.b16 %v1658
        %v1740 = vunpack.c.l.b16 %v1659
        %v1741 = vunpack.c.h.b16 %v1659
        %v1742 = vunpack.c.l.b16 %v1660
        %v1743 = vunpack.c.h.b16 %v1660
        %v1744 = vunpack.c.l.b16 %v1661
        %v1745 = vunpack.c.h.b16 %v1661
        %v1746 = vunpack.c.l.b16 %v1662
        %v1747 = vunpack.c.h.b16 %v1662
        %v1748 = vunpack.c.l.b16 %v1663
        %v1749 = vunpack.c.h.b16 %v1663
        %v1750 = vunpack.c.l.b16 %v1664
        %v1751 = vunpack.c.h.b16 %v1664
        %v1752 = vunpack.c.l.b16 %v1665
        %v1753 = vunpack.c.h.b16 %v1665
        %v1754 = vunpack.c.l.b16 %v1666
        %v1755 = vunpack.c.h.b16 %v1666
        %v1756 = vunpack.c.l.b16 %v1667
        %v1757 = vunpack.c.h.b16 %v1667
        %v1758 = vunpack.c.l.b16 %v1668
        %v1759 = vunpack.c.h.b16 %v1668
        %v1760 = vunpack.c.l.b16 %v1669
        %v1761 = vunpack.c.h.b16 %v1669
        %v1762 = vunpack.c.l.b16 %v1670
        %v1763 = vunpack.c.h.b16 %v1670
        %v1764 = vunpack.c.l.b16 %v1671
        %v1765 = vunpack.c.h.b16 %v1671
        %v1766 = vunpack.c.l.b16 %v1672
        %v1767 = vunpack.c.h.b16 %v1672
        %v1768 = vunpack.c.l.b16 %v1673
        %v1769 = vunpack.c.h.b16 %v1673
        %v1770 = vpack.c.b16 %v1708, %v1706
        %v1771 = vpack.c.b16 %v1709, %v1707
        %v1772 = vpack.c.b16 %v1712, %v1710
        %v1773 = vpack.c.b16 %v1713, %v1711
        %v1774 = vpack.c.b16 %v1716, %v1714
        %v1775 = vpack.c.b16 %v1717, %v1715
        %v1776 = vpack.c.b16 %v1720, %v1718
        %v1777 = vpack.c.b16 %v1721, %v1719
        %v1778 = vpack.c.b16 %v1724, %v1722
        %v1779 = vpack.c.b16 %v1725, %v1723
        %v1780 = vpack.c.b16 %v1728, %v1726
        %v1781 = vpack.c.b16 %v1729, %v1727
        %v1782 = vpack.c.b16 %v1732, %v1730
        %v1783 = vpack.c.b16 %v1733, %v1731
        %v1784 = vpack.c.b16 %v1736, %v1734
        %v1785 = vpack.c.b16 %v1737, %v1735
        %v1786 = vpack.c.b16 %v1740, %v1738
        %v1787 = vpack.c.b16 %v1741, %v1739
        %v1788 = vpack.c.b16 %v1744, %v1742
        %v1789 = vpack.c.b16 %v1745, %v1743
        %v1790 = vpack.c.b16 %v1748, %v1746
        %v1791 = vpack.c.b16 %v1749, %v1747
        %v1792 = vpack.c.b16 %v1752, %v1750
        %v1793 = vpack.c.b16 %v1753, %v1751
        %v1794 = vpack.c.b16 %v1756, %v1754
        %v1795 = vpack.c.b16 %v1757, %v1755
        %v1796 = vpack.c.b16 %v1760, %v1758
        %v1797 = vpack.c.b16 %v1761, %v1759
        %v1798 = vpack.c.b16 %v1764, %v1762
        %v1799 = vpack.c.b16 %v1765, %v1763
        %v1800 = vpack.c.b16 %v1768, %v1766
        %v1801 = vpack.c.b16 %v1769, %v1767
        %1834 = vmatprep.subr.bf16.mxu0 %v1771
        %1835 = vmatpush1.bf16.msra.mxu0 %v1770
        %1836 = vmatprep.subr.bf16.mxu0 %v1773
        %1837 = vmatpush1.bf16.msra.mxu0 %v1772
        %1838 = vmatprep.subr.bf16.mxu0 %v1775
        %1839 = vmatpush1.bf16.msra.mxu0 %v1774
        %1840 = vmatprep.subr.bf16.mxu0 %v1777
        %1841 = vmatpush1.bf16.msra.mxu0 %v1776
        %1842 = vmatprep.subr.bf16.mxu0 %v1779
        %1843 = vmatpush1.bf16.msra.mxu0 %v1778
        %1844 = vmatprep.subr.bf16.mxu0 %v1781
        %1845 = vmatpush1.bf16.msra.mxu0 %v1780
        %1846 = vmatprep.subr.bf16.mxu0 %v1783
        %1847 = vmatpush1.bf16.msra.mxu0 %v1782
        %1848 = vmatprep.subr.bf16.mxu0 %v1785
        %1849 = vmatpush1.bf16.msra.mxu0 %v1784
        %1850 = vmatprep.subr.bf16.mxu0 %v1787
        %1851 = vmatpush1.bf16.msra.mxu0 %v1786
        %1852 = vmatprep.subr.bf16.mxu0 %v1789
        %1853 = vmatpush1.bf16.msra.mxu0 %v1788
        %1854 = vmatprep.subr.bf16.mxu0 %v1791
        %1855 = vmatpush1.bf16.msra.mxu0 %v1790
        %1856 = vmatprep.subr.bf16.mxu0 %v1793
        %1857 = vmatpush1.bf16.msra.mxu0 %v1792
        %1858 = vmatprep.subr.bf16.mxu0 %v1795
        %1859 = vmatpush1.bf16.msra.mxu0 %v1794
        %1860 = vmatprep.subr.bf16.mxu0 %v1797
        %1861 = vmatpush1.bf16.msra.mxu0 %v1796
        %1862 = vmatprep.subr.bf16.mxu0 %v1799
        %1863 = vmatpush1.bf16.msra.mxu0 %v1798
        %1864 = vmatprep.subr.bf16.mxu0 %v1801
        %1865 = vmatpush1.bf16.msra.mxu0 %v1800
        %1866 = vmatprep.mubr.bf16.mxu0 %v1641
        %1867 = vmatmul.mubr.bf16.gmra.mrb[0].mxu0 %v1640
        %v1868 = vpop.f32.mrb[0].mxu0
        %v1869 = vadd.f32 0.0, %v1868
        %v1870 = vpop.f32.mrb[0].mxu0
        %v1871 = vadd.f32 0.0, %v1870
        %v1872 = vpop.f32.mrb[0].mxu0
        %v1873 = vpop.f32.mrb[0].mxu0
        %1874 = vdwg.mxu0
        %v1891 = vunpack.c.l.b16 %v1624
        %v1892 = vunpack.c.h.b16 %v1624
        %v1893 = vunpack.c.l.b16 %v1625
        %v1894 = vunpack.c.h.b16 %v1625
        %v1895 = vunpack.c.l.b16 %v1626
        %v1896 = vunpack.c.h.b16 %v1626
        %v1897 = vunpack.c.l.b16 %v1627
        %v1898 = vunpack.c.h.b16 %v1627
        %v1899 = vunpack.c.l.b16 %v1628
        %v1900 = vunpack.c.h.b16 %v1628
        %v1901 = vunpack.c.l.b16 %v1629
        %v1902 = vunpack.c.h.b16 %v1629
        %v1903 = vunpack.c.l.b16 %v1630
        %v1904 = vunpack.c.h.b16 %v1630
        %v1905 = vunpack.c.l.b16 %v1631
        %v1906 = vunpack.c.h.b16 %v1631
        %v1907 = vunpack.c.l.b16 %v1632
        %v1908 = vunpack.c.h.b16 %v1632
        %v1909 = vunpack.c.l.b16 %v1633
        %v1910 = vunpack.c.h.b16 %v1633
        %v1911 = vunpack.c.l.b16 %v1634
        %v1912 = vunpack.c.h.b16 %v1634
        %v1913 = vunpack.c.l.b16 %v1635
        %v1914 = vunpack.c.h.b16 %v1635
        %v1915 = vunpack.c.l.b16 %v1636
        %v1916 = vunpack.c.h.b16 %v1636
        %v1917 = vunpack.c.l.b16 %v1637
        %v1918 = vunpack.c.h.b16 %v1637
        %v1919 = vunpack.c.l.b16 %v1638
        %v1920 = vunpack.c.h.b16 %v1638
        %v1921 = vunpack.c.l.b16 %v1639
        %v1922 = vunpack.c.h.b16 %v1639
        %v1923 = vpack.c.b16 %v1893, %v1891
        %v1924 = vpack.c.b16 %v1894, %v1892
        %v1925 = vpack.c.b16 %v1897, %v1895
        %v1926 = vpack.c.b16 %v1898, %v1896
        %v1927 = vpack.c.b16 %v1901, %v1899
        %v1928 = vpack.c.b16 %v1902, %v1900
        %v1929 = vpack.c.b16 %v1905, %v1903
        %v1930 = vpack.c.b16 %v1906, %v1904
        %v1931 = vpack.c.b16 %v1909, %v1907
        %v1932 = vpack.c.b16 %v1910, %v1908
        %v1933 = vpack.c.b16 %v1913, %v1911
        %v1934 = vpack.c.b16 %v1914, %v1912
        %v1935 = vpack.c.b16 %v1917, %v1915
        %v1936 = vpack.c.b16 %v1918, %v1916
        %v1937 = vpack.c.b16 %v1921, %v1919
        %v1938 = vpack.c.b16 %v1922, %v1920
        %1955 = vmatprep.subr.bf16.mxu0 %v1924
        %1956 = vmatpush1.bf16.msra.mxu0 %v1923
        %1957 = vmatprep.subr.bf16.mxu0 %v1926
        %1958 = vmatpush1.bf16.msra.mxu0 %v1925
        %1959 = vmatprep.subr.bf16.mxu0 %v1928
        %1960 = vmatpush1.bf16.msra.mxu0 %v1927
        %1961 = vmatprep.subr.bf16.mxu0 %v1930
        %1962 = vmatpush1.bf16.msra.mxu0 %v1929
        %1963 = vmatprep.subr.bf16.mxu0 %v1932
        %1964 = vmatpush1.bf16.msra.mxu0 %v1931
        %1965 = vmatprep.subr.bf16.mxu0 %v1934
        %1966 = vmatpush1.bf16.msra.mxu0 %v1933
        %1967 = vmatprep.subr.bf16.mxu0 %v1936
        %1968 = vmatpush1.bf16.msra.mxu0 %v1935
        %1969 = vmatprep.subr.bf16.mxu0 %v1938
        %1970 = vmatpush1.bf16.msra.mxu0 %v1937
        %1971 = vmatprep.subr.bf16.mxu0 0
        %1972 = vmatpush1.bf16.msra.mxu0 0
        %1973 = vmatprep.subr.bf16.mxu0 0
        %1974 = vmatpush1.bf16.msra.mxu0 0
        %1975 = vmatprep.subr.bf16.mxu0 0
        %1976 = vmatpush1.bf16.msra.mxu0 0
        %1977 = vmatprep.subr.bf16.mxu0 0
        %1978 = vmatpush1.bf16.msra.mxu0 0
        %1979 = vmatprep.subr.bf16.mxu0 0
        %1980 = vmatpush1.bf16.msra.mxu0 0
        %1981 = vmatprep.subr.bf16.mxu0 0
        %1982 = vmatpush1.bf16.msra.mxu0 0
        %1983 = vmatprep.subr.bf16.mxu0 0
        %1984 = vmatpush1.bf16.msra.mxu0 0
        %1985 = vmatprep.subr.bf16.mxu0 0
        %1986 = vmatpush1.bf16.msra.mxu0 0
        %1987 = vmatprep.mubr.bf16.mxu0 0
        %1988 = vmatmul.mubr.bf16.gmra.mrb[0].mxu0 %v974
        %v1989 = vpop.f32.mrb[0].mxu0
        %v1990 = vadd.f32 %v1869, %v1989
        %v1991 = vpop.f32.mrb[0].mxu0
        %v1992 = vadd.f32 %v1871, %v1991
        %v1993 = vpop.f32.mrb[0].mxu0
        %v1994 = vpop.f32.mrb[0].mxu0
        %1995 = vdwg.mxu0
        %v1996 = vld [vmem:[#allocation19] sm:$0x3]
        %v1998 = vlaneseq
        %v1999 = vshrl.u32 %v1998, 7
        %v2000 = vsub.s32 0, %v1999
        %v2001 = vrot.slane %v1996, %v2000
        %v2002 = vlaneseq
        %v2003 = vshrl.u32 %v2002, 7
        %v2004 = vsub.s32 1, %v2003
        %v2005 = vrot.slane %v1996, %v2004
        %v2008 = vadd.f32 %v1990, %v2001
        %v2009 = vadd.f32 %v1992, %v2005
        %v2010 = vld [vmem:[%s832] sm:$0xff]
        %v2011 = vmul.f32 %v2009, 0.5
        %v2012 = vmul.f32 %v2011, 1.442695
        %v2013 = vpow.pop %v2012
        %v2014 = vmul.f32 %v2010, %v2013
        %v2015 = vadd.f32 %v2008, %v2014
        %v2016 = vpack.c.bf16 %v2015, %v2015
        %v2017 = vld [vmem:[#allocation20] sm:$0xff]
        %v2018 = vld [vmem:[#allocation20 + $0x8] sm:$0xff]
        %v2019 = vld [vmem:[#allocation20 + $0x10] sm:$0xff]
        %v2020 = vld [vmem:[#allocation20 + $0x18] sm:$0xff]
        %v2021 = vld [vmem:[#allocation20 + $0x20] sm:$0xff]
        %v2022 = vld [vmem:[#allocation20 + $0x28] sm:$0xff]
        %v2023 = vld [vmem:[#allocation20 + $0x30] sm:$0xff]
        %v2024 = vld [vmem:[#allocation20 + $0x38] sm:$0xff]
        %v2025 = vld [vmem:[#allocation20 + $0x40] sm:$0xff]
        %v2026 = vld [vmem:[#allocation20 + $0x48] sm:$0xff]
        %v2027 = vld [vmem:[#allocation20 + $0x50] sm:$0xff]
        %v2028 = vld [vmem:[#allocation20 + $0x58] sm:$0xff]
        %v2029 = vld [vmem:[#allocation20 + $0x60] sm:$0xff]
        %v2030 = vld [vmem:[#allocation20 + $0x68] sm:$0xff]
        %v2031 = vld [vmem:[#allocation20 + $0x70] sm:$0xff]
        %v2032 = vld [vmem:[#allocation20 + $0x78] sm:$0xff]
        %v2033 = vld [vmem:[#allocation22] sm:$0x3]
        %v2035 = vlaneseq
        %v2036 = vshrl.u32 %v2035, 7
        %v2037 = vsub.s32 0, %v2036
        %v2038 = vrot.slane %v2033, %v2037
        %v2039 = vlaneseq
        %v2040 = vshrl.u32 %v2039, 7
        %v2041 = vsub.s32 1, %v2040
        %v2042 = vrot.slane %v2033, %v2041
        %v2061 = vunpack.c.l.b16 %v2017
        %v2062 = vunpack.c.h.b16 %v2017
        %v2063 = vunpack.c.l.b16 %v2018
        %v2064 = vunpack.c.h.b16 %v2018
        %v2065 = vunpack.c.l.b16 %v2019
        %v2066 = vunpack.c.h.b16 %v2019
        %v2067 = vunpack.c.l.b16 %v2020
        %v2068 = vunpack.c.h.b16 %v2020
        %v2069 = vunpack.c.l.b16 %v2021
        %v2070 = vunpack.c.h.b16 %v2021
        %v2071 = vunpack.c.l.b16 %v2022
        %v2072 = vunpack.c.h.b16 %v2022
        %v2073 = vunpack.c.l.b16 %v2023
        %v2074 = vunpack.c.h.b16 %v2023
        %v2075 = vunpack.c.l.b16 %v2024
        %v2076 = vunpack.c.h.b16 %v2024
        %v2077 = vunpack.c.l.b16 %v2025
        %v2078 = vunpack.c.h.b16 %v2025
        %v2079 = vunpack.c.l.b16 %v2026
        %v2080 = vunpack.c.h.b16 %v2026
        %v2081 = vunpack.c.l.b16 %v2027
        %v2082 = vunpack.c.h.b16 %v2027
        %v2083 = vunpack.c.l.b16 %v2028
        %v2084 = vunpack.c.h.b16 %v2028
        %v2085 = vunpack.c.l.b16 %v2029
        %v2086 = vunpack.c.h.b16 %v2029
        %v2087 = vunpack.c.l.b16 %v2030
        %v2088 = vunpack.c.h.b16 %v2030
        %v2089 = vunpack.c.l.b16 %v2031
        %v2090 = vunpack.c.h.b16 %v2031
        %v2091 = vunpack.c.l.b16 %v2032
        %v2092 = vunpack.c.h.b16 %v2032
        %v2093 = vpack.c.b16 %v2063, %v2061
        %v2094 = vpack.c.b16 %v2064, %v2062
        %v2095 = vpack.c.b16 %v2067, %v2065
        %v2096 = vpack.c.b16 %v2068, %v2066
        %v2097 = vpack.c.b16 %v2071, %v2069
        %v2098 = vpack.c.b16 %v2072, %v2070
        %v2099 = vpack.c.b16 %v2075, %v2073
        %v2100 = vpack.c.b16 %v2076, %v2074
        %v2101 = vpack.c.b16 %v2079, %v2077
        %v2102 = vpack.c.b16 %v2080, %v2078
        %v2103 = vpack.c.b16 %v2083, %v2081
        %v2104 = vpack.c.b16 %v2084, %v2082
        %v2105 = vpack.c.b16 %v2087, %v2085
        %v2106 = vpack.c.b16 %v2088, %v2086
        %v2107 = vpack.c.b16 %v2091, %v2089
        %v2108 = vpack.c.b16 %v2092, %v2090
        %2125 = vmatprep.subr.bf16.mxu0 %v2094
        %2126 = vmatpush1.bf16.msra.mxu0 %v2093
        %2127 = vmatprep.subr.bf16.mxu0 %v2096
        %2128 = vmatpush1.bf16.msra.mxu0 %v2095
        %2129 = vmatprep.subr.bf16.mxu0 %v2098
        %2130 = vmatpush1.bf16.msra.mxu0 %v2097
        %2131 = vmatprep.subr.bf16.mxu0 %v2100
        %2132 = vmatpush1.bf16.msra.mxu0 %v2099
        %2133 = vmatprep.subr.bf16.mxu0 %v2102
        %2134 = vmatpush1.bf16.msra.mxu0 %v2101
        %2135 = vmatprep.subr.bf16.mxu0 %v2104
        %2136 = vmatpush1.bf16.msra.mxu0 %v2103
        %2137 = vmatprep.subr.bf16.mxu0 %v2106
        %2138 = vmatpush1.bf16.msra.mxu0 %v2105
        %2139 = vmatprep.subr.bf16.mxu0 %v2108
        %2140 = vmatpush1.bf16.msra.mxu0 %v2107
        %2141 = vmatprep.subr.bf16.mxu0 0
        %2142 = vmatpush1.bf16.msra.mxu0 0
        %2143 = vmatprep.subr.bf16.mxu0 0
        %2144 = vmatpush1.bf16.msra.mxu0 0
        %2145 = vmatprep.subr.bf16.mxu0 0
        %2146 = vmatpush1.bf16.msra.mxu0 0
        %2147 = vmatprep.subr.bf16.mxu0 0
        %2148 = vmatpush1.bf16.msra.mxu0 0
        %2149 = vmatprep.subr.bf16.mxu0 0
        %2150 = vmatpush1.bf16.msra.mxu0 0
        %2151 = vmatprep.subr.bf16.mxu0 0
        %2152 = vmatpush1.bf16.msra.mxu0 0
        %2153 = vmatprep.subr.bf16.mxu0 0
        %2154 = vmatpush1.bf16.msra.mxu0 0
        %2155 = vmatprep.subr.bf16.mxu0 0
        %2156 = vmatpush1.bf16.msra.mxu0 0
        %2157 = vmatprep.mubr.bf16.mxu0 0
        %2158 = vmatmul.mubr.bf16.gmra.mrb[0].mxu0 %v2016
        %v2159 = vpop.f32.mrb[0].mxu0
        %v2160 = vadd.f32 %v2038, %v2159
        %v2161 = vpop.f32.mrb[0].mxu0
        %v2162 = vadd.f32 %v2042, %v2161
        %v2163 = vpop.f32.mrb[0].mxu0
        %v2164 = vpop.f32.mrb[0].mxu0
        %2165 = vdwg.mxu0
        %v2166 = vmax.f32 %v2160, 0.0
        %v2167 = vmax.f32 %v2162, 0.0
        %v2168 = vpack.c.bf16 %v2166, %v2166
        %v2169 = vpack.c.bf16 %v2167, %v2167
        %v2170 = vld [vmem:[#allocation23] sm:$0xff]
        %v2171 = vld [vmem:[#allocation23 + $0x8] sm:$0xff]
        %v2172 = vld [vmem:[#allocation23 + $0x10] sm:$0xff]
        %v2173 = vld [vmem:[#allocation23 + $0x18] sm:$0xff]
        %v2174 = vld [vmem:[#allocation23 + $0x20] sm:$0xff]
        %v2175 = vld [vmem:[#allocation23 + $0x28] sm:$0xff]
        %v2176 = vld [vmem:[#allocation23 + $0x30] sm:$0xff]
        %v2177 = vld [vmem:[#allocation23 + $0x38] sm:$0xff]
        %v2178 = vld [vmem:[#allocation23 + $0x40] sm:$0xff]
        %v2179 = vld [vmem:[#allocation23 + $0x48] sm:$0xff]
        %v2180 = vld [vmem:[#allocation23 + $0x50] sm:$0xff]
        %v2181 = vld [vmem:[#allocation23 + $0x58] sm:$0xff]
        %v2182 = vld [vmem:[#allocation23 + $0x60] sm:$0xff]
        %v2183 = vld [vmem:[#allocation23 + $0x68] sm:$0xff]
        %v2184 = vld [vmem:[#allocation23 + $0x70] sm:$0xff]
        %v2185 = vld [vmem:[#allocation23 + $0x78] sm:$0xff]
        %v2186 = vld [vmem:[#allocation23 + $0x80] sm:$0xff]
        %v2187 = vld [vmem:[#allocation23 + $0x88] sm:$0xff]
        %v2188 = vld [vmem:[#allocation23 + $0x90] sm:$0xff]
        %v2189 = vld [vmem:[#allocation23 + $0x98] sm:$0xff]
        %v2190 = vld [vmem:[#allocation23 + $0xa0] sm:$0xff]
        %v2191 = vld [vmem:[#allocation23 + $0xa8] sm:$0xff]
        %v2192 = vld [vmem:[#allocation23 + $0xb0] sm:$0xff]
        %v2193 = vld [vmem:[#allocation23 + $0xb8] sm:$0xff]
        %v2194 = vld [vmem:[#allocation23 + $0xc0] sm:$0xff]
        %v2195 = vld [vmem:[#allocation23 + $0xc8] sm:$0xff]
        %v2196 = vld [vmem:[#allocation23 + $0xd0] sm:$0xff]
        %v2197 = vld [vmem:[#allocation23 + $0xd8] sm:$0xff]
        %v2198 = vld [vmem:[#allocation23 + $0xe0] sm:$0xff]
        %v2199 = vld [vmem:[#allocation23 + $0xe8] sm:$0xff]
        %v2200 = vld [vmem:[#allocation23 + $0xf0] sm:$0xff]
        %v2201 = vld [vmem:[#allocation23 + $0xf8] sm:$0xff]
        %v2202 = vld [vmem:[#allocation25] sm:$0x3]
        %v2204 = vlaneseq
        %v2205 = vshrl.u32 %v2204, 7
        %v2206 = vsub.s32 0, %v2205
        %v2207 = vrot.slane %v2202, %v2206
        %v2208 = vlaneseq
        %v2209 = vshrl.u32 %v2208, 7
        %v2210 = vsub.s32 1, %v2209
        %v2211 = vrot.slane %v2202, %v2210
        %v2246 = vunpack.c.l.b16 %v2170
        %v2247 = vunpack.c.h.b16 %v2170
        %v2248 = vunpack.c.l.b16 %v2171
        %v2249 = vunpack.c.h.b16 %v2171
        %v2250 = vunpack.c.l.b16 %v2172
        %v2251 = vunpack.c.h.b16 %v2172
        %v2252 = vunpack.c.l.b16 %v2173
        %v2253 = vunpack.c.h.b16 %v2173
        %v2254 = vunpack.c.l.b16 %v2174
        %v2255 = vunpack.c.h.b16 %v2174
        %v2256 = vunpack.c.l.b16 %v2175
        %v2257 = vunpack.c.h.b16 %v2175
        %v2258 = vunpack.c.l.b16 %v2176
        %v2259 = vunpack.c.h.b16 %v2176
        %v2260 = vunpack.c.l.b16 %v2177
        %v2261 = vunpack.c.h.b16 %v2177
        %v2262 = vunpack.c.l.b16 %v2178
        %v2263 = vunpack.c.h.b16 %v2178
        %v2264 = vunpack.c.l.b16 %v2179
        %v2265 = vunpack.c.h.b16 %v2179
        %v2266 = vunpack.c.l.b16 %v2180
        %v2267 = vunpack.c.h.b16 %v2180
        %v2268 = vunpack.c.l.b16 %v2181
        %v2269 = vunpack.c.h.b16 %v2181
        %v2270 = vunpack.c.l.b16 %v2182
        %v2271 = vunpack.c.h.b16 %v2182
        %v2272 = vunpack.c.l.b16 %v2183
        %v2273 = vunpack.c.h.b16 %v2183
        %v2274 = vunpack.c.l.b16 %v2184
        %v2275 = vunpack.c.h.b16 %v2184
        %v2276 = vunpack.c.l.b16 %v2185
        %v2277 = vunpack.c.h.b16 %v2185
        %v2278 = vunpack.c.l.b16 %v2186
        %v2279 = vunpack.c.h.b16 %v2186
        %v2280 = vunpack.c.l.b16 %v2187
        %v2281 = vunpack.c.h.b16 %v2187
        %v2282 = vunpack.c.l.b16 %v2188
        %v2283 = vunpack.c.h.b16 %v2188
        %v2284 = vunpack.c.l.b16 %v2189
        %v2285 = vunpack.c.h.b16 %v2189
        %v2286 = vunpack.c.l.b16 %v2190
        %v2287 = vunpack.c.h.b16 %v2190
        %v2288 = vunpack.c.l.b16 %v2191
        %v2289 = vunpack.c.h.b16 %v2191
        %v2290 = vunpack.c.l.b16 %v2192
        %v2291 = vunpack.c.h.b16 %v2192
        %v2292 = vunpack.c.l.b16 %v2193
        %v2293 = vunpack.c.h.b16 %v2193
        %v2294 = vunpack.c.l.b16 %v2194
        %v2295 = vunpack.c.h.b16 %v2194
        %v2296 = vunpack.c.l.b16 %v2195
        %v2297 = vunpack.c.h.b16 %v2195
        %v2298 = vunpack.c.l.b16 %v2196
        %v2299 = vunpack.c.h.b16 %v2196
        %v2300 = vunpack.c.l.b16 %v2197
        %v2301 = vunpack.c.h.b16 %v2197
        %v2302 = vunpack.c.l.b16 %v2198
        %v2303 = vunpack.c.h.b16 %v2198
        %v2304 = vunpack.c.l.b16 %v2199
        %v2305 = vunpack.c.h.b16 %v2199
        %v2306 = vunpack.c.l.b16 %v2200
        %v2307 = vunpack.c.h.b16 %v2200
        %v2308 = vunpack.c.l.b16 %v2201
        %v2309 = vunpack.c.h.b16 %v2201
        %v2310 = vpack.c.b16 %v2248, %v2246
        %v2311 = vpack.c.b16 %v2249, %v2247
        %v2312 = vpack.c.b16 %v2252, %v2250
        %v2313 = vpack.c.b16 %v2253, %v2251
        %v2314 = vpack.c.b16 %v2256, %v2254
        %v2315 = vpack.c.b16 %v2257, %v2255
        %v2316 = vpack.c.b16 %v2260, %v2258
        %v2317 = vpack.c.b16 %v2261, %v2259
        %v2318 = vpack.c.b16 %v2264, %v2262
        %v2319 = vpack.c.b16 %v2265, %v2263
        %v2320 = vpack.c.b16 %v2268, %v2266
        %v2321 = vpack.c.b16 %v2269, %v2267
        %v2322 = vpack.c.b16 %v2272, %v2270
        %v2323 = vpack.c.b16 %v2273, %v2271
        %v2324 = vpack.c.b16 %v2276, %v2274
        %v2325 = vpack.c.b16 %v2277, %v2275
        %v2326 = vpack.c.b16 %v2280, %v2278
        %v2327 = vpack.c.b16 %v2281, %v2279
        %v2328 = vpack.c.b16 %v2284, %v2282
        %v2329 = vpack.c.b16 %v2285, %v2283
        %v2330 = vpack.c.b16 %v2288, %v2286
        %v2331 = vpack.c.b16 %v2289, %v2287
        %v2332 = vpack.c.b16 %v2292, %v2290
        %v2333 = vpack.c.b16 %v2293, %v2291
        %v2334 = vpack.c.b16 %v2296, %v2294
        %v2335 = vpack.c.b16 %v2297, %v2295
        %v2336 = vpack.c.b16 %v2300, %v2298
        %v2337 = vpack.c.b16 %v2301, %v2299
        %v2338 = vpack.c.b16 %v2304, %v2302
        %v2339 = vpack.c.b16 %v2305, %v2303
        %v2340 = vpack.c.b16 %v2308, %v2306
        %v2341 = vpack.c.b16 %v2309, %v2307
        %2374 = vmatprep.subr.bf16.mxu0 %v2311
        %2375 = vmatpush1.bf16.msra.mxu0 %v2310
        %2376 = vmatprep.subr.bf16.mxu0 %v2313
        %2377 = vmatpush1.bf16.msra.mxu0 %v2312
        %2378 = vmatprep.subr.bf16.mxu0 %v2315
        %2379 = vmatpush1.bf16.msra.mxu0 %v2314
        %2380 = vmatprep.subr.bf16.mxu0 %v2317
        %2381 = vmatpush1.bf16.msra.mxu0 %v2316
        %2382 = vmatprep.subr.bf16.mxu0 %v2319
        %2383 = vmatpush1.bf16.msra.mxu0 %v2318
        %2384 = vmatprep.subr.bf16.mxu0 %v2321
        %2385 = vmatpush1.bf16.msra.mxu0 %v2320
        %2386 = vmatprep.subr.bf16.mxu0 %v2323
        %2387 = vmatpush1.bf16.msra.mxu0 %v2322
        %2388 = vmatprep.subr.bf16.mxu0 %v2325
        %2389 = vmatpush1.bf16.msra.mxu0 %v2324
        %2390 = vmatprep.subr.bf16.mxu0 %v2327
        %2391 = vmatpush1.bf16.msra.mxu0 %v2326
        %2392 = vmatprep.subr.bf16.mxu0 %v2329
        %2393 = vmatpush1.bf16.msra.mxu0 %v2328
        %2394 = vmatprep.subr.bf16.mxu0 %v2331
        %2395 = vmatpush1.bf16.msra.mxu0 %v2330
        %2396 = vmatprep.subr.bf16.mxu0 %v2333
        %2397 = vmatpush1.bf16.msra.mxu0 %v2332
        %2398 = vmatprep.subr.bf16.mxu0 %v2335
        %2399 = vmatpush1.bf16.msra.mxu0 %v2334
        %2400 = vmatprep.subr.bf16.mxu0 %v2337
        %2401 = vmatpush1.bf16.msra.mxu0 %v2336
        %2402 = vmatprep.subr.bf16.mxu0 %v2339
        %2403 = vmatpush1.bf16.msra.mxu0 %v2338
        %2404 = vmatprep.subr.bf16.mxu0 %v2341
        %2405 = vmatpush1.bf16.msra.mxu0 %v2340
        %2406 = vmatprep.mubr.bf16.mxu0 %v2169
        %2407 = vmatmul.mubr.bf16.gmra.mrb[0].mxu0 %v2168
        %v2408 = vpop.f32.mrb[0].mxu0
        %v2409 = vadd.f32 %v2207, %v2408
        %v2410 = vpop.f32.mrb[0].mxu0
        %v2411 = vadd.f32 %v2211, %v2410
        %v2412 = vpop.f32.mrb[0].mxu0
        %v2413 = vpop.f32.mrb[0].mxu0
        %2414 = vdwg.mxu0
        %v2415 = vmax.f32 %v2409, 0.0
        %v2416 = vmax.f32 %v2411, 0.0
        %v2417 = vpack.c.bf16 %v2415, %v2415
        %v2418 = vpack.c.bf16 %v2416, %v2416
        %v2419 = vld [vmem:[#allocation26] sm:$0xff]
        %v2420 = vld [vmem:[#allocation26 + $0x8] sm:$0xff]
        %v2421 = vld [vmem:[#allocation26 + $0x10] sm:$0xff]
        %v2422 = vld [vmem:[#allocation26 + $0x18] sm:$0xff]
        %v2423 = vld [vmem:[#allocation26 + $0x20] sm:$0xff]
        %v2424 = vld [vmem:[#allocation26 + $0x28] sm:$0xff]
        %v2425 = vld [vmem:[#allocation26 + $0x30] sm:$0xff]
        %v2426 = vld [vmem:[#allocation26 + $0x38] sm:$0xff]
        %v2427 = vld [vmem:[#allocation26 + $0x40] sm:$0xff]
        %v2428 = vld [vmem:[#allocation26 + $0x48] sm:$0xff]
        %v2429 = vld [vmem:[#allocation26 + $0x50] sm:$0xff]
        %v2430 = vld [vmem:[#allocation26 + $0x58] sm:$0xff]
        %v2431 = vld [vmem:[#allocation26 + $0x60] sm:$0xff]
        %v2432 = vld [vmem:[#allocation26 + $0x68] sm:$0xff]
        %v2433 = vld [vmem:[#allocation26 + $0x70] sm:$0xff]
        %v2434 = vld [vmem:[#allocation26 + $0x78] sm:$0xff]
        %v2435 = vld [vmem:[#allocation26 + $0x80] sm:$0xff]
        %v2436 = vld [vmem:[#allocation26 + $0x88] sm:$0xff]
        %v2437 = vld [vmem:[#allocation26 + $0x90] sm:$0xff]
        %v2438 = vld [vmem:[#allocation26 + $0x98] sm:$0xff]
        %v2439 = vld [vmem:[#allocation26 + $0xa0] sm:$0xff]
        %v2440 = vld [vmem:[#allocation26 + $0xa8] sm:$0xff]
        %v2441 = vld [vmem:[#allocation26 + $0xb0] sm:$0xff]
        %v2442 = vld [vmem:[#allocation26 + $0xb8] sm:$0xff]
        %v2443 = vld [vmem:[#allocation26 + $0xc0] sm:$0xff]
        %v2444 = vld [vmem:[#allocation26 + $0xc8] sm:$0xff]
        %v2445 = vld [vmem:[#allocation26 + $0xd0] sm:$0xff]
        %v2446 = vld [vmem:[#allocation26 + $0xd8] sm:$0xff]
        %v2447 = vld [vmem:[#allocation26 + $0xe0] sm:$0xff]
        %v2448 = vld [vmem:[#allocation26 + $0xe8] sm:$0xff]
        %v2449 = vld [vmem:[#allocation26 + $0xf0] sm:$0xff]
        %v2450 = vld [vmem:[#allocation26 + $0xf8] sm:$0xff]
        %v2451 = vld [vmem:[#allocation28] sm:$0x3]
        %v2453 = vlaneseq
        %v2454 = vshrl.u32 %v2453, 7
        %v2455 = vsub.s32 0, %v2454
        %v2456 = vrot.slane %v2451, %v2455
        %v2457 = vlaneseq
        %v2458 = vshrl.u32 %v2457, 7
        %v2459 = vsub.s32 1, %v2458
        %v2460 = vrot.slane %v2451, %v2459
        %v2495 = vunpack.c.l.b16 %v2419
        %v2496 = vunpack.c.h.b16 %v2419
        %v2497 = vunpack.c.l.b16 %v2420
        %v2498 = vunpack.c.h.b16 %v2420
        %v2499 = vunpack.c.l.b16 %v2421
        %v2500 = vunpack.c.h.b16 %v2421
        %v2501 = vunpack.c.l.b16 %v2422
        %v2502 = vunpack.c.h.b16 %v2422
        %v2503 = vunpack.c.l.b16 %v2423
        %v2504 = vunpack.c.h.b16 %v2423
        %v2505 = vunpack.c.l.b16 %v2424
        %v2506 = vunpack.c.h.b16 %v2424
        %v2507 = vunpack.c.l.b16 %v2425
        %v2508 = vunpack.c.h.b16 %v2425
        %v2509 = vunpack.c.l.b16 %v2426
        %v2510 = vunpack.c.h.b16 %v2426
        %v2511 = vunpack.c.l.b16 %v2427
        %v2512 = vunpack.c.h.b16 %v2427
        %v2513 = vunpack.c.l.b16 %v2428
        %v2514 = vunpack.c.h.b16 %v2428
        %v2515 = vunpack.c.l.b16 %v2429
        %v2516 = vunpack.c.h.b16 %v2429
        %v2517 = vunpack.c.l.b16 %v2430
        %v2518 = vunpack.c.h.b16 %v2430
        %v2519 = vunpack.c.l.b16 %v2431
        %v2520 = vunpack.c.h.b16 %v2431
        %v2521 = vunpack.c.l.b16 %v2432
        %v2522 = vunpack.c.h.b16 %v2432
        %v2523 = vunpack.c.l.b16 %v2433
        %v2524 = vunpack.c.h.b16 %v2433
        %v2525 = vunpack.c.l.b16 %v2434
        %v2526 = vunpack.c.h.b16 %v2434
        %v2527 = vunpack.c.l.b16 %v2435
        %v2528 = vunpack.c.h.b16 %v2435
        %v2529 = vunpack.c.l.b16 %v2436
        %v2530 = vunpack.c.h.b16 %v2436
        %v2531 = vunpack.c.l.b16 %v2437
        %v2532 = vunpack.c.h.b16 %v2437
        %v2533 = vunpack.c.l.b16 %v2438
        %v2534 = vunpack.c.h.b16 %v2438
        %v2535 = vunpack.c.l.b16 %v2439
        %v2536 = vunpack.c.h.b16 %v2439
        %v2537 = vunpack.c.l.b16 %v2440
        %v2538 = vunpack.c.h.b16 %v2440
        %v2539 = vunpack.c.l.b16 %v2441
        %v2540 = vunpack.c.h.b16 %v2441
        %v2541 = vunpack.c.l.b16 %v2442
        %v2542 = vunpack.c.h.b16 %v2442
        %v2543 = vunpack.c.l.b16 %v2443
        %v2544 = vunpack.c.h.b16 %v2443
        %v2545 = vunpack.c.l.b16 %v2444
        %v2546 = vunpack.c.h.b16 %v2444
        %v2547 = vunpack.c.l.b16 %v2445
        %v2548 = vunpack.c.h.b16 %v2445
        %v2549 = vunpack.c.l.b16 %v2446
        %v2550 = vunpack.c.h.b16 %v2446
        %v2551 = vunpack.c.l.b16 %v2447
        %v2552 = vunpack.c.h.b16 %v2447
        %v2553 = vunpack.c.l.b16 %v2448
        %v2554 = vunpack.c.h.b16 %v2448
        %v2555 = vunpack.c.l.b16 %v2449
        %v2556 = vunpack.c.h.b16 %v2449
        %v2557 = vunpack.c.l.b16 %v2450
        %v2558 = vunpack.c.h.b16 %v2450
        %v2559 = vpack.c.b16 %v2497, %v2495
        %v2560 = vpack.c.b16 %v2498, %v2496
        %v2561 = vpack.c.b16 %v2501, %v2499
        %v2562 = vpack.c.b16 %v2502, %v2500
        %v2563 = vpack.c.b16 %v2505, %v2503
        %v2564 = vpack.c.b16 %v2506, %v2504
        %v2565 = vpack.c.b16 %v2509, %v2507
        %v2566 = vpack.c.b16 %v2510, %v2508
        %v2567 = vpack.c.b16 %v2513, %v2511
        %v2568 = vpack.c.b16 %v2514, %v2512
        %v2569 = vpack.c.b16 %v2517, %v2515
        %v2570 = vpack.c.b16 %v2518, %v2516
        %v2571 = vpack.c.b16 %v2521, %v2519
        %v2572 = vpack.c.b16 %v2522, %v2520
        %v2573 = vpack.c.b16 %v2525, %v2523
        %v2574 = vpack.c.b16 %v2526, %v2524
        %v2575 = vpack.c.b16 %v2529, %v2527
        %v2576 = vpack.c.b16 %v2530, %v2528
        %v2577 = vpack.c.b16 %v2533, %v2531
        %v2578 = vpack.c.b16 %v2534, %v2532
        %v2579 = vpack.c.b16 %v2537, %v2535
        %v2580 = vpack.c.b16 %v2538, %v2536
        %v2581 = vpack.c.b16 %v2541, %v2539
        %v2582 = vpack.c.b16 %v2542, %v2540
        %v2583 = vpack.c.b16 %v2545, %v2543
        %v2584 = vpack.c.b16 %v2546, %v2544
        %v2585 = vpack.c.b16 %v2549, %v2547
        %v2586 = vpack.c.b16 %v2550, %v2548
        %v2587 = vpack.c.b16 %v2553, %v2551
        %v2588 = vpack.c.b16 %v2554, %v2552
        %v2589 = vpack.c.b16 %v2557, %v2555
        %v2590 = vpack.c.b16 %v2558, %v2556
        %2623 = vmatprep.subr.bf16.mxu0 %v2560
        %2624 = vmatpush1.bf16.msra.mxu0 %v2559
        %2625 = vmatprep.subr.bf16.mxu0 %v2562
        %2626 = vmatpush1.bf16.msra.mxu0 %v2561
        %2627 = vmatprep.subr.bf16.mxu0 %v2564
        %2628 = vmatpush1.bf16.msra.mxu0 %v2563
        %2629 = vmatprep.subr.bf16.mxu0 %v2566
        %2630 = vmatpush1.bf16.msra.mxu0 %v2565
        %2631 = vmatprep.subr.bf16.mxu0 %v2568
        %2632 = vmatpush1.bf16.msra.mxu0 %v2567
        %2633 = vmatprep.subr.bf16.mxu0 %v2570
        %2634 = vmatpush1.bf16.msra.mxu0 %v2569
        %2635 = vmatprep.subr.bf16.mxu0 %v2572
        %2636 = vmatpush1.bf16.msra.mxu0 %v2571
        %2637 = vmatprep.subr.bf16.mxu0 %v2574
        %2638 = vmatpush1.bf16.msra.mxu0 %v2573
        %2639 = vmatprep.subr.bf16.mxu0 %v2576
        %2640 = vmatpush1.bf16.msra.mxu0 %v2575
        %2641 = vmatprep.subr.bf16.mxu0 %v2578
        %2642 = vmatpush1.bf16.msra.mxu0 %v2577
        %2643 = vmatprep.subr.bf16.mxu0 %v2580
        %2644 = vmatpush1.bf16.msra.mxu0 %v2579
        %2645 = vmatprep.subr.bf16.mxu0 %v2582
        %2646 = vmatpush1.bf16.msra.mxu0 %v2581
        %2647 = vmatprep.subr.bf16.mxu0 %v2584
        %2648 = vmatpush1.bf16.msra.mxu0 %v2583
        %2649 = vmatprep.subr.bf16.mxu0 %v2586
        %2650 = vmatpush1.bf16.msra.mxu0 %v2585
        %2651 = vmatprep.subr.bf16.mxu0 %v2588
        %2652 = vmatpush1.bf16.msra.mxu0 %v2587
        %2653 = vmatprep.subr.bf16.mxu0 %v2590
        %2654 = vmatpush1.bf16.msra.mxu0 %v2589
        %2655 = vmatprep.mubr.bf16.mxu0 %v2418
        %2656 = vmatmul.mubr.bf16.gmra.mrb[0].mxu0 %v2417
        %v2657 = vpop.f32.mrb[0].mxu0
        %v2658 = vadd.f32 %v2456, %v2657
        %v2659 = vpop.f32.mrb[0].mxu0
        %v2660 = vadd.f32 %v2460, %v2659
        %v2661 = vpop.f32.mrb[0].mxu0
        %v2662 = vpop.f32.mrb[0].mxu0
        %2663 = vdwg.mxu0
        %v2664 = vmax.f32 %v2658, 0.0
        %v2665 = vmax.f32 %v2660, 0.0
        %v2666 = vld [vmem:[%s17] sm:$0xf]
        %v2667 = vld [vmem:[%s17 + $0x4] sm:$0xf]
        %v2668 = vld [vmem:[%s17 + $0x8] sm:$0xf]
        %v2669 = vld [vmem:[%s17 + $0xc] sm:$0xf]
        %v2670 = vld [vmem:[%s17 + $0x10] sm:$0xf]
        %v2671 = vld [vmem:[%s17 + $0x14] sm:$0xf]
        %v2672 = vld [vmem:[%s17 + $0x18] sm:$0xf]
        %v2673 = vld [vmem:[%s17 + $0x1c] sm:$0xf]
        %v2674 = vld [vmem:[%s17 + $0x20] sm:$0xf]
        %v2675 = vld [vmem:[%s17 + $0x24] sm:$0xf]
        %v2676 = vld [vmem:[%s17 + $0x28] sm:$0xf]
        %v2677 = vld [vmem:[%s17 + $0x2c] sm:$0xf]
        %v2678 = vld [vmem:[%s17 + $0x30] sm:$0xf]
        %v2679 = vld [vmem:[%s17 + $0x34] sm:$0xf]
        %v2680 = vld [vmem:[%s17 + $0x38] sm:$0xf]
        %v2681 = vld [vmem:[%s17 + $0x3c] sm:$0xf]
        %v2682 = vpack.c.bf16 %v2664, %v2664
        %v2683 = vpack.c.bf16 %v2665, %v2665
        %v2684 = vld [vmem:[#allocation29] sm:$0xf]
        %v2685 = vld [vmem:[#allocation29 + $0x4] sm:$0xf]
        %v2686 = vld [vmem:[#allocation29 + $0x8] sm:$0xf]
        %v2687 = vld [vmem:[#allocation29 + $0xc] sm:$0xf]
        %v2688 = vld [vmem:[#allocation29 + $0x10] sm:$0xf]
        %v2689 = vld [vmem:[#allocation29 + $0x14] sm:$0xf]
        %v2690 = vld [vmem:[#allocation29 + $0x18] sm:$0xf]
        %v2691 = vld [vmem:[#allocation29 + $0x1c] sm:$0xf]
        %v2692 = vld [vmem:[#allocation29 + $0x20] sm:$0xf]
        %v2693 = vld [vmem:[#allocation29 + $0x24] sm:$0xf]
        %v2694 = vld [vmem:[#allocation29 + $0x28] sm:$0xf]
        %v2695 = vld [vmem:[#allocation29 + $0x2c] sm:$0xf]
        %v2696 = vld [vmem:[#allocation29 + $0x30] sm:$0xf]
        %v2697 = vld [vmem:[#allocation29 + $0x34] sm:$0xf]
        %v2698 = vld [vmem:[#allocation29 + $0x38] sm:$0xf]
        %v2699 = vld [vmem:[#allocation29 + $0x3c] sm:$0xf]
        %v2700 = vld [vmem:[#allocation29 + $0x40] sm:$0xf]
        %v2701 = vld [vmem:[#allocation29 + $0x44] sm:$0xf]
        %v2702 = vld [vmem:[#allocation29 + $0x48] sm:$0xf]
        %v2703 = vld [vmem:[#allocation29 + $0x4c] sm:$0xf]
        %v2704 = vld [vmem:[#allocation29 + $0x50] sm:$0xf]
        %v2705 = vld [vmem:[#allocation29 + $0x54] sm:$0xf]
        %v2706 = vld [vmem:[#allocation29 + $0x58] sm:$0xf]
        %v2707 = vld [vmem:[#allocation29 + $0x5c] sm:$0xf]
        %v2708 = vld [vmem:[#allocation29 + $0x60] sm:$0xf]
        %v2709 = vld [vmem:[#allocation29 + $0x64] sm:$0xf]
        %v2710 = vld [vmem:[#allocation29 + $0x68] sm:$0xf]
        %v2711 = vld [vmem:[#allocation29 + $0x6c] sm:$0xf]
        %v2712 = vld [vmem:[#allocation29 + $0x70] sm:$0xf]
        %v2713 = vld [vmem:[#allocation29 + $0x74] sm:$0xf]
        %v2714 = vld [vmem:[#allocation29 + $0x78] sm:$0xf]
        %v2715 = vld [vmem:[#allocation29 + $0x7c] sm:$0xf]
        %v2748 = vunpack.c.l.b16 %v2684
        %v2749 = vunpack.c.l.b16 %v2685
        %v2750 = vunpack.c.l.b16 %v2686
        %v2751 = vunpack.c.l.b16 %v2687
        %v2752 = vunpack.c.l.b16 %v2688
        %v2753 = vunpack.c.l.b16 %v2689
        %v2754 = vunpack.c.l.b16 %v2690
        %v2755 = vunpack.c.l.b16 %v2691
        %v2756 = vunpack.c.l.b16 %v2692
        %v2757 = vunpack.c.l.b16 %v2693
        %v2758 = vunpack.c.l.b16 %v2694
        %v2759 = vunpack.c.l.b16 %v2695
        %v2760 = vunpack.c.l.b16 %v2696
        %v2761 = vunpack.c.l.b16 %v2697
        %v2762 = vunpack.c.l.b16 %v2698
        %v2763 = vunpack.c.l.b16 %v2699
        %v2764 = vunpack.c.l.b16 %v2700
        %v2765 = vunpack.c.l.b16 %v2701
        %v2766 = vunpack.c.l.b16 %v2702
        %v2767 = vunpack.c.l.b16 %v2703
        %v2768 = vunpack.c.l.b16 %v2704
        %v2769 = vunpack.c.l.b16 %v2705
        %v2770 = vunpack.c.l.b16 %v2706
        %v2771 = vunpack.c.l.b16 %v2707
        %v2772 = vunpack.c.l.b16 %v2708
        %v2773 = vunpack.c.l.b16 %v2709
        %v2774 = vunpack.c.l.b16 %v2710
        %v2775 = vunpack.c.l.b16 %v2711
        %v2776 = vunpack.c.l.b16 %v2712
        %v2777 = vunpack.c.l.b16 %v2713
        %v2778 = vunpack.c.l.b16 %v2714
        %v2779 = vunpack.c.l.b16 %v2715
        %v2780 = vpack.c.b16 %v2749, %v2748
        %v2781 = vpack.c.b16 %v2751, %v2750
        %v2782 = vpack.c.b16 %v2753, %v2752
        %v2783 = vpack.c.b16 %v2755, %v2754
        %v2784 = vpack.c.b16 %v2757, %v2756
        %v2785 = vpack.c.b16 %v2759, %v2758
        %v2786 = vpack.c.b16 %v2761, %v2760
        %v2787 = vpack.c.b16 %v2763, %v2762
        %v2788 = vpack.c.b16 %v2765, %v2764
        %v2789 = vpack.c.b16 %v2767, %v2766
        %v2790 = vpack.c.b16 %v2769, %v2768
        %v2791 = vpack.c.b16 %v2771, %v2770
        %v2792 = vpack.c.b16 %v2773, %v2772
        %v2793 = vpack.c.b16 %v2775, %v2774
        %v2794 = vpack.c.b16 %v2777, %v2776
        %v2795 = vpack.c.b16 %v2779, %v2778
        %2812 = vmatprep.subr.bf16.mxu0 0
        %2813 = vmatpush1.bf16.msra.mxu0 %v2780
        %2814 = vmatprep.subr.bf16.mxu0 0
        %2815 = vmatpush1.bf16.msra.mxu0 %v2781
        %2816 = vmatprep.subr.bf16.mxu0 0
        %2817 = vmatpush1.bf16.msra.mxu0 %v2782
        %2818 = vmatprep.subr.bf16.mxu0 0
        %2819 = vmatpush1.bf16.msra.mxu0 %v2783
        %2820 = vmatprep.subr.bf16.mxu0 0
        %2821 = vmatpush1.bf16.msra.mxu0 %v2784
        %2822 = vmatprep.subr.bf16.mxu0 0
        %2823 = vmatpush1.bf16.msra.mxu0 %v2785
        %2824 = vmatprep.subr.bf16.mxu0 0
        %2825 = vmatpush1.bf16.msra.mxu0 %v2786
        %2826 = vmatprep.subr.bf16.mxu0 0
        %2827 = vmatpush1.bf16.msra.mxu0 %v2787
        %2828 = vmatprep.subr.bf16.mxu0 0
        %2829 = vmatpush1.bf16.msra.mxu0 %v2788
        %2830 = vmatprep.subr.bf16.mxu0 0
        %2831 = vmatpush1.bf16.msra.mxu0 %v2789
        %2832 = vmatprep.subr.bf16.mxu0 0
        %2833 = vmatpush1.bf16.msra.mxu0 %v2790
        %2834 = vmatprep.subr.bf16.mxu0 0
        %2835 = vmatpush1.bf16.msra.mxu0 %v2791
        %2836 = vmatprep.subr.bf16.mxu0 0
        %2837 = vmatpush1.bf16.msra.mxu0 %v2792
        %2838 = vmatprep.subr.bf16.mxu0 0
        %2839 = vmatpush1.bf16.msra.mxu0 %v2793
        %2840 = vmatprep.subr.bf16.mxu0 0
        %2841 = vmatpush1.bf16.msra.mxu0 %v2794
        %2842 = vmatprep.subr.bf16.mxu0 0
        %2843 = vmatpush1.bf16.msra.mxu0 %v2795
        %2844 = vmatprep.mubr.bf16.mxu0 %v2683
        %2845 = vmatmul.mubr.bf16.gmra.mrb[0].mxu0 %v2682
        %v2846 = vpop.f32.mrb[0].mxu0
        %v2847 = vadd.f32 0.0, %v2846
        %v2848 = vpop.f32.mrb[0].mxu0
        %v2849 = vpop.f32.mrb[0].mxu0
        %v2850 = vpop.f32.mrb[0].mxu0
        %2851 = vdwg.mxu0
        %v2868 = vunpack.c.l.b16 %v2666
        %v2869 = vunpack.c.l.b16 %v2667
        %v2870 = vunpack.c.l.b16 %v2668
        %v2871 = vunpack.c.l.b16 %v2669
        %v2872 = vunpack.c.l.b16 %v2670
        %v2873 = vunpack.c.l.b16 %v2671
        %v2874 = vunpack.c.l.b16 %v2672
        %v2875 = vunpack.c.l.b16 %v2673
        %v2876 = vunpack.c.l.b16 %v2674
        %v2877 = vunpack.c.l.b16 %v2675
        %v2878 = vunpack.c.l.b16 %v2676
        %v2879 = vunpack.c.l.b16 %v2677
        %v2880 = vunpack.c.l.b16 %v2678
        %v2881 = vunpack.c.l.b16 %v2679
        %v2882 = vunpack.c.l.b16 %v2680
        %v2883 = vunpack.c.l.b16 %v2681
        %v2884 = vpack.c.b16 %v2869, %v2868
        %v2885 = vpack.c.b16 %v2871, %v2870
        %v2886 = vpack.c.b16 %v2873, %v2872
        %v2887 = vpack.c.b16 %v2875, %v2874
        %v2888 = vpack.c.b16 %v2877, %v2876
        %v2889 = vpack.c.b16 %v2879, %v2878
        %v2890 = vpack.c.b16 %v2881, %v2880
        %v2891 = vpack.c.b16 %v2883, %v2882
        %2900 = vmatprep.subr.bf16.mxu0 0
        %2901 = vmatpush1.bf16.msra.mxu0 %v2884
        %2902 = vmatprep.subr.bf16.mxu0 0
        %2903 = vmatpush1.bf16.msra.mxu0 %v2885
        %2904 = vmatprep.subr.bf16.mxu0 0
        %2905 = vmatpush1.bf16.msra.mxu0 %v2886
        %2906 = vmatprep.subr.bf16.mxu0 0
        %2907 = vmatpush1.bf16.msra.mxu0 %v2887
        %2908 = vmatprep.subr.bf16.mxu0 0
        %2909 = vmatpush1.bf16.msra.mxu0 %v2888
        %2910 = vmatprep.subr.bf16.mxu0 0
        %2911 = vmatpush1.bf16.msra.mxu0 %v2889
        %2912 = vmatprep.subr.bf16.mxu0 0
        %2913 = vmatpush1.bf16.msra.mxu0 %v2890
        %2914 = vmatprep.subr.bf16.mxu0 0
        %2915 = vmatpush1.bf16.msra.mxu0 %v2891
        %2916 = vmatprep.subr.bf16.mxu0 0
        %2917 = vmatpush1.bf16.msra.mxu0 0
        %2918 = vmatprep.subr.bf16.mxu0 0
        %2919 = vmatpush1.bf16.msra.mxu0 0
        %2920 = vmatprep.subr.bf16.mxu0 0
        %2921 = vmatpush1.bf16.msra.mxu0 0
        %2922 = vmatprep.subr.bf16.mxu0 0
        %2923 = vmatpush1.bf16.msra.mxu0 0
        %2924 = vmatprep.subr.bf16.mxu0 0
        %2925 = vmatpush1.bf16.msra.mxu0 0
        %2926 = vmatprep.subr.bf16.mxu0 0
        %2927 = vmatpush1.bf16.msra.mxu0 0
        %2928 = vmatprep.subr.bf16.mxu0 0
        %2929 = vmatpush1.bf16.msra.mxu0 0
        %2930 = vmatprep.subr.bf16.mxu0 0
        %2931 = vmatpush1.bf16.msra.mxu0 0
        %2932 = vmatprep.mubr.bf16.mxu0 0
        %2933 = vmatmul.mubr.bf16.gmra.mrb[0].mxu0 %v2016
        %v2934 = vpop.f32.mrb[0].mxu0
        %v2935 = vadd.f32 %v2847, %v2934
        %v2936 = vpop.f32.mrb[0].mxu0
        %v2937 = vpop.f32.mrb[0].mxu0
        %v2938 = vpop.f32.mrb[0].mxu0
        %2939 = vdwg.mxu0
        %v2940 = vld [vmem:[%s19] sm:$0x1]
        %v2942 = vlaneseq
        %v2943 = vshrl.u32 %v2942, 7
        %v2944 = vsub.s32 0, %v2943
        %v2945 = vrot.slane %v2940, %v2944
        %v2947 = vadd.f32 %v2935, %v2945
        %2948 = vst [vmem:[%s957] sm:$0xff] %v2008
        %2949 = vst [vmem:[%s964] sm:$0xff] %v2009
        %2950 = vst [vmem:[%s971] sm:$0xff] %v2947
        %s2951 = sand.u32 %s492, 1
        %s2952 = scalar_lea.sflag [#allocation4], %s2951
        %s2953 = sand.u32 %s492, 1
        %s2954 = smul.addr %s2953, 8
        %s2955 = scalar_lea.vmem [#allocation31], %s2954
        %s2956 = sand.u32 %s54, 1
        %s2957 = scalar_lea.sflag [#allocation33], %s2956
        %s2958 = sand.u32 %s518, 1
        %s2959 = smul.addr %s2958, 8
        %s2960 = scalar_lea.vmem [#allocation32], %s2959
        %s2961 = sand.u32 %s54, 1
        %s2962 = scalar_lea.sflag [#allocation33], %s2961
        %s2963 = sand.u32 %s544, 1
        %s2964 = smul.addr %s2963, 8
        %s2965 = scalar_lea.vmem [#allocation34], %s2964
        // Predicated region
        $region173: #{tpu_custom_call.1} parent=99 // pred_check
          %p2966 = pneg %p502
        $region174: #{tpu_custom_call.1} parent=99 // pred_check_branch
          %2968 = sbr.rel (%p2966) target = $region176
        $region175: #{tpu_custom_call.1} parent=99 // pred_region
          %s2970 = ssub.s32 128, 128
          %2971 = vsyncadd %s2952, %s2970
          %s2972 = smul.addr %s54, 128
          %s2973 = scalar_lea.hbm %s20, %s2972
          %s2975 = sshll.u32 %s2955, 4
          %s2976 = int_to_ptr.vmem [resolvable:$true] %s2975
          %2978 = dma.vmem_to_hbm [thread:$0]  %s2976, 128, %s2973, %s2952
        $region176: #{tpu_custom_call.1} parent=99 // pred_fallthru
          _
        // Predicated region
        $region177: #{tpu_custom_call.1} parent=99 // pred_check
          %p2979 = pneg %p528
        $region178: #{tpu_custom_call.1} parent=99 // pred_check_branch
          %2981 = sbr.rel (%p2979) target = $region180
        $region179: #{tpu_custom_call.1} parent=99 // pred_region
          %s2983 = ssub.s32 128, 128
          %2984 = vsyncadd %s2957, %s2983
          %s2985 = smul.addr %s54, 128
          %s2986 = scalar_lea.hbm %s21, %s2985
          %s2988 = sshll.u32 %s2960, 4
          %s2989 = int_to_ptr.vmem [resolvable:$true] %s2988
          %2991 = dma.vmem_to_hbm [thread:$0]  %s2989, 128, %s2986, %s2957
        $region180: #{tpu_custom_call.1} parent=99 // pred_fallthru
          _
        // Predicated region
        $region181: #{tpu_custom_call.1} parent=99 // pred_check
          %p2992 = pneg %p554
        $region182: #{tpu_custom_call.1} parent=99 // pred_check_branch
          %2994 = sbr.rel (%p2992) target = $region184
        $region183: #{tpu_custom_call.1} parent=99 // pred_region
          %s2996 = ssub.s32 128, 128
          %2997 = vsyncadd %s2962, %s2996
          %s2998 = smul.addr %s54, 128
          %s2999 = scalar_lea.hbm %s22, %s2998
          %s3001 = sshll.u32 %s2965, 4
          %s3002 = int_to_ptr.vmem [resolvable:$true] %s3001
          %3004 = dma.vmem_to_hbm [thread:$0]  %s3002, 128, %s2999, %s2962
        $region184: #{tpu_custom_call.1} parent=99 // pred_fallthru
          _
      $region100: #{tpu_custom_call.1} parent=5 // pred_fallthru
        _
      %p3005 = scmp.le.s32.totalorder 2, %s49
      // Predicated region
      $region185: #{tpu_custom_call.1} parent=5 // pred_check
        %p3006 = pneg %p3005
      $region186: #{tpu_custom_call.1} parent=5 // pred_check_branch
        %3008 = sbr.rel (%p3006) target = $region188
      $region187: #{tpu_custom_call.1} parent=5 // pred_region
        %s3009 = ssub.s32 %s49, 2
        // Predicated region
        $region189: #{tpu_custom_call.1} parent=187 // pred_check
          %p3010 = pneg %p508
        $region190: #{tpu_custom_call.1} parent=187 // pred_check_branch
          %3012 = sbr.rel (%p3010) target = $region192
        $region191: #{tpu_custom_call.1} parent=187 // pred_region
          %s3013 = sand.u32 %s493, 1
          %s3014 = scalar_lea.sflag [#allocation4], %s3013
          %s3015 = sand.u32 %s493, 1
          %s3016 = smul.addr %s3015, 8
          %s3017 = scalar_lea.vmem [#allocation31], %s3016
          %3018 = dma.done %s3014, 128
        $region192: #{tpu_custom_call.1} parent=187 // pred_fallthru
          _
        // Predicated region
        $region193: #{tpu_custom_call.1} parent=187 // pred_check
          %p3019 = pneg %p534
        $region194: #{tpu_custom_call.1} parent=187 // pred_check_branch
          %3021 = sbr.rel (%p3019) target = $region196
        $region195: #{tpu_custom_call.1} parent=187 // pred_region
          %s3022 = sand.u32 %s55, 1
          %s3023 = scalar_lea.sflag [#allocation33], %s3022
          %s3024 = sand.u32 %s519, 1
          %s3025 = smul.addr %s3024, 8
          %s3026 = scalar_lea.vmem [#allocation32], %s3025
          %3027 = dma.done %s3023, 128
        $region196: #{tpu_custom_call.1} parent=187 // pred_fallthru
          _
        // Predicated region
        $region197: #{tpu_custom_call.1} parent=187 // pred_check
          %p3028 = pneg %p560
        $region198: #{tpu_custom_call.1} parent=187 // pred_check_branch
          %3030 = sbr.rel (%p3028) target = $region200
        $region199: #{tpu_custom_call.1} parent=187 // pred_region
          %s3031 = sand.u32 %s55, 1
          %s3032 = scalar_lea.sflag [#allocation33], %s3031
          %s3033 = sand.u32 %s545, 1
          %s3034 = smul.addr %s3033, 8
          %s3035 = scalar_lea.vmem [#allocation34], %s3034
          %3036 = dma.done %s3032, 128
        $region200: #{tpu_custom_call.1} parent=187 // pred_fallthru
          _
      $region188: #{tpu_custom_call.1} parent=5 // pred_fallthru
        _
    $region6: #{tpu_custom_call.1} parent=1 // loop_footer
      %s53 = sadd.s32 1, %s49
    $region7: #{tpu_custom_call.1} parent=1 // loop_footer_branch
      %48 = sbr.rel target = $region3
    $region8: #{tpu_custom_call.1} parent=1 // loop_exit
      _
    %3037 = vsyncpa [#allocation3], 1
    %s3038 = scalar_lea.sflag [#allocation3], 1
    %3039 = vsyncpa %s3038, 1
    %3040 = vsyncpa [#allocation6], 1
    %s3041 = scalar_lea.sflag [#allocation6], 1
    %3042 = vsyncpa %s3041, 1
    %3043 = vsyncpa [#allocation9], 1
    %3044 = vsyncpa [#allocation12], 1
    %3045 = vsyncpa [#allocation15], 1
    %3046 = vsyncpa [#allocation18], 1
    %3047 = vsyncpa [#allocation21], 1
    %3048 = vsyncpa [#allocation24], 1
    %3049 = vsyncpa [#allocation27], 1
    %3050 = vsyncpa [#allocation30], 1
    %3051 = vsyncpa [#allocation4], 1
    %s3052 = scalar_lea.sflag [#allocation4], 1
    %3053 = vsyncpa %s3052, 1
    %3054 = vsyncpa [#allocation33], 1
    %s3055 = scalar_lea.sflag [#allocation33], 1
    %3056 = vsyncpa %s3055, 1

</llo_original>
